<compile_context>
chip_gen: v7x
topology: tpu7x:2x2x1
jax: 0.10.0
libtpu: 0.0.40
codegen_flags: <defaults>
</compile_context>

<pallas_src>
import functools

import jax
import jax.numpy as jnp
import numpy as np
from jax import lax
from jax.experimental import pallas as pl
from jax.experimental.pallas import tpu as pltpu

EPS = 1e-5
_VMEM_LIMIT = 32 * 1024 * 1024


# --------------------------------------------------------------------------
# helpers
# --------------------------------------------------------------------------
def _round_up(v, m):
    return ((v + m - 1) // m) * m


def _pad_to(a, shape):
    return jnp.pad(a, [(0, t - s) for s, t in zip(a.shape, shape)])


def _largest_divisor_leq(n, cap):
    cap = max(1, min(cap, n))
    for d in range(cap, 0, -1):
        if n % d == 0:
            return d
    return 1


def _pick_row_tile(n_rows, bytes_per_row, target=1024, budget=10 * 1024 * 1024):
    """Row tile for the 1x1-matmul kernels: <= target, multiple of 16 (bf16
    native (16,128) tile), double-buffered blocks within a conservative VMEM
    budget (safe on v7x's 64 MiB part and under v5e's raised scoped limit)."""
    t = min(target, max(16, budget // max(bytes_per_row, 1)))
    t = max(16, (t // 16) * 16)
    return min(t, n_rows)


def _act(y, kind):
    if kind == "RE":
        return jnp.maximum(y, 0.0)
    # h_swish: relu6(y + 3) / 6 * y
    return jnp.clip(y + 3.0, 0.0, 6.0) * (1.0 / 6.0) * y


# --------------------------------------------------------------------------
# fused expand (1x1 conv + BN + act)  ->  depthwise kxk conv + BN kernel
# --------------------------------------------------------------------------
def fused_expand_dw_kernel(x_ref, w1_ref, sh1_ref, wdw_ref, sh2_ref,
                           o_ref, pool_ref, y1_scr,
                           *, k, stride, pad, rs_exp, rs_dw, act_kind):
    # x_ref:   (H, W, Cin_p)    bf16   one image
    # w1_ref:  (Cin_p, ctile)   bf16   expand weights (BN scale folded)
    # wdw_ref: (k*k, ctile)     f32    depthwise taps (BN scale folded)
    # o_ref:   (Ho, Wo, ctile)  bf16   depthwise output
    # pool_ref:(1, ctile)       f32    spatial mean of the f32 depthwise output
    # y1_scr:  (H+2*pad, W, ctile) bf16  expanded activation, padded in H only
    H, W, Cin_p = x_ref.shape
    Ho, Wo, ctile = o_ref.shape

    # ---- phase 1: expand matmul into the VMEM scratch (never touches HBM) --
    if pad > 0:
        zrow = jnp.zeros((pad, W, ctile), jnp.bfloat16)
        y1_scr[pl.ds(0, pad), :, :] = zrow            # top halo rows
        y1_scr[pl.ds(pad + H, pad), :, :] = zrow      # bottom halo rows

    w1 = w1_ref[...]
    sh1 = sh1_ref[...]

    def ex_body(r, carry):
        rs = r * rs_exp
        xr = x_ref[pl.ds(rs, rs_exp), :, :]                       # (rs_exp,W,Cin_p)
        y = jnp.dot(xr.reshape(rs_exp * W, Cin_p), w1,
                    preferred_element_type=jnp.float32)
        y = _act(y + sh1, act_kind)
        y1_scr[pl.ds(pad + rs, rs_exp), :, :] = (
            y.astype(jnp.bfloat16).reshape(rs_exp, W, ctile))
        return carry

    lax.fori_loop(0, H // rs_exp, ex_body, 0)

    # ---- phase 2: depthwise kxk, strip-mined over output rows --------------
    w_taps = wdw_ref[...]                                          # (k*k, ctile)
    sh2 = sh2_ref[...].reshape(1, 1, ctile)
    # Static border masks for the column halo (hoisted out of all loops).
    col_ids = lax.broadcasted_iota(jnp.int32, (W, ctile), 0)
    col_masks = {}
    for kw in range(k):
        dw = kw - pad
        if dw != 0:
            col_masks[kw] = (col_ids >= -dw) & (col_ids < W - dw)

    def dw_body(r, psum):
        row0 = r * rs_dw
        acc = jnp.zeros((rs_dw, Wo, ctile), jnp.float32)
        for kh in range(k):
            if stride == 1:
                rows = y1_scr[pl.ds(row0 + kh, rs_dw), :, :].astype(jnp.float32)
            else:
                # TODO(synk): for stride>1, deinterleave columns/rows once (or
                # fold the stride into the DMA) instead of strided VMEM slices.
                span = (rs_dw - 1) * stride + 1
                rf = y1_scr[pl.ds(row0 * stride + kh, span), :, :]
                rows = lax.slice(rf, (0, 0, 0), (span, W, ctile),
                                 (stride, 1, 1)).astype(jnp.float32)
            for kw in range(k):
                dw = kw - pad
                if dw == 0:
                    cols = rows
                else:
                    shifted = pltpu.roll(rows, shift=(-dw) % W, axis=1)
                    cols = jnp.where(col_masks[kw][None, :, :], shifted, 0.0)
                if stride > 1:
                    cols = lax.slice(cols, (0, 0, 0),
                                     (rs_dw, (Wo - 1) * stride + 1, ctile),
                                     (1, stride, 1))
                tap = w_taps[kh * k + kw:kh * k + kw + 1, :].reshape(1, 1, ctile)
                acc = acc + cols * tap
        y = acc + sh2                                             # f32, pre-cast
        o_ref[pl.ds(row0, rs_dw), :, :] = y.astype(o_ref.dtype)
        return psum + jnp.sum(jnp.sum(y, axis=0), axis=0, keepdims=True)

    psum = lax.fori_loop(0, Ho // rs_dw, dw_body,
                         jnp.zeros((1, ctile), jnp.float32))
    pool_ref[...] = psum * (1.0 / (Ho * Wo))


# --------------------------------------------------------------------------
# pointwise 1x1 conv + BN + act (+ SE gate, + residual) kernel
# --------------------------------------------------------------------------
def pointwise_kernel(*refs, act_kind, use_se, add_residual):
    it = iter(refs)
    x_ref = next(it)                           # (tm, Cexp_p) bf16
    g_ref = next(it) if use_se else None       # (1, Cexp_p)  f32
    w_ref = next(it)                           # (Cexp_p, Cout_p) bf16
    sh_ref = next(it)                          # (1, Cout_p) f32
    res_ref = next(it) if add_residual else None
    o_ref = next(it)                           # (tm, Cout_p) bf16

    if use_se:
        xg = (x_ref[...].astype(jnp.float32) * g_ref[...]).astype(jnp.bfloat16)
    else:
        xg = x_ref[...]
    y = jnp.dot(xg, w_ref[...], preferred_element_type=jnp.float32)
    y = _act(y + sh_ref[...], act_kind)
    if add_residual:
        y = y + res_ref[...].astype(jnp.float32)
    o_ref[...] = y.astype(o_ref.dtype)


# --------------------------------------------------------------------------
# parameter preparation (fold scales into weights, pad lane-dense, cast)
# --------------------------------------------------------------------------
def _prepare_params(params, cfg, Cin):
    Cexp, Cout, k = cfg["exp_size"], cfg["out_channels"], cfg["kernel_size"]
    Cin_p, Cexp_p, Cout_p = (_round_up(c, 128) for c in (Cin, Cexp, Cout))
    w1 = _pad_to(params["w_expand"] * params["scale1"][None, :], (Cin_p, Cexp_p))
    wdw = _pad_to(params["w_dw"] * params["scale2"][None, :], (k * k, Cexp_p))
    wpt = _pad_to(params["w_point"] * params["scale3"][None, :], (Cexp_p, Cout_p))
    return {
        "w1": w1.astype(jnp.bfloat16),
        "sh1": _pad_to(params["shift1"][None, :], (1, Cexp_p)),
        "wdw": wdw.astype(jnp.float32),
        "sh2": _pad_to(params["shift2"][None, :], (1, Cexp_p)),
        "wpt": wpt.astype(jnp.bfloat16),
        "sh3": _pad_to(params["shift3"][None, :], (1, Cout_p)),
    }


# --------------------------------------------------------------------------
# wrapper
# --------------------------------------------------------------------------
def mobile_block_forward(x_nchw, params, cfg):
    N, Cin, H, W = x_nchw.shape
    k, s = cfg["kernel_size"], cfg["stride"]
    pad = (k - 1) // 2
    Cexp, Cout = cfg["exp_size"], cfg["out_channels"]
    act_kind = cfg["nonLinear"]
    use_se = bool(cfg["SE"])
    use_connect = (s == 1 and Cin == Cout)

    Cin_p = _round_up(Cin, 128)
    Cexp_p = _round_up(Cexp, 128)
    Cout_p = _round_up(Cout, 128)
    prep = _prepare_params(params, cfg, Cin)

    Ho = (H + 2 * pad - k) // s + 1
    Wo = (W + 2 * pad - k) // s + 1

    # Channel tile: 256 lights up the full 256-wide MXU on v6e/v7x when possible.
    ctile = 256 if Cexp_p % 256 == 0 else 128
    ncb = Cexp_p // ctile

    # NHWC, lane-dense channels, single bf16 activation stream (also used as
    # the residual).  TODO(synk): drop the transposes / channel pad entirely
    # if the surrounding network runs NHWC with padded channels; for tiny
    # channel counts (Cin=16) the pad-to-128 inflates traffic and plain XLA
    # may be preferable.
    x = jnp.transpose(x_nchw, (0, 2, 3, 1))
    x = jnp.pad(x, ((0, 0), (0, 0), (0, 0), (0, Cin_p - Cin))).astype(jnp.bfloat16)

    # Strip heights: keep the live f32 values to a few tens of vregs.
    rs_exp = _largest_divisor_leq(H, max(1, (2 * 16384 // ctile) // max(W, 1)))
    rs_dw = _largest_divisor_leq(Ho, max(1, (16384 // ctile) // max(Wo, 1)))

    # ---- 1) fused expand (1x1 + BN + act) -> depthwise (kxk + BN) ----------
    # TODO(synk): for very large feature maps add a spatial H-tile grid axis
    # with an overlapping (halo) index_map to shrink the per-step VMEM block.
    y2, pooled = pl.pallas_call(
        functools.partial(fused_expand_dw_kernel, k=k, stride=s, pad=pad,
                          rs_exp=rs_exp, rs_dw=rs_dw, act_kind=act_kind),
        out_shape=(
            jax.ShapeDtypeStruct((N, Ho, Wo, Cexp_p), jnp.bfloat16),
            jax.ShapeDtypeStruct((N, 1, Cexp_p), jnp.float32),
        ),
        grid=(N, ncb),
        in_specs=[
            pl.BlockSpec((None, H, W, Cin_p), lambda n, c: (n, 0, 0, 0)),
            pl.BlockSpec((Cin_p, ctile), lambda n, c: (0, c)),
            pl.BlockSpec((1, ctile), lambda n, c: (0, c)),
            pl.BlockSpec((k * k, ctile), lambda n, c: (0, c)),
            pl.BlockSpec((1, ctile), lambda n, c: (0, c)),
        ],
        out_specs=[
            pl.BlockSpec((None, Ho, Wo, ctile), lambda n, c: (n, 0, 0, c)),
            pl.BlockSpec((None, 1, ctile), lambda n, c: (n, 0, c)),
        ],
        scratch_shapes=[pltpu.VMEM((H + 2 * pad, W, ctile), jnp.bfloat16)],
        compiler_params=pltpu.CompilerParams(
            dimension_semantics=("parallel", "parallel"),
            vmem_limit_bytes=_VMEM_LIMIT),
    )(x, prep["w1"], prep["sh1"], prep["wdw"], prep["sh2"])

    # ---- 2) SE gate: a few KFLOP -> plain jnp in the wrapper ---------------
    if use_se:
        pooled_v = pooled[:, 0, :Cexp]                            # (N, Cexp)
        h = jnp.maximum(jnp.dot(pooled_v, params["w_se1"]) + params["b_se1"], 0.0)
        g = jnp.clip(jnp.dot(h, params["w_se2"]) + params["b_se2"] + 3.0,
                     0.0, 6.0) * (1.0 / 6.0)
        g3 = _pad_to(g, (N, Cexp_p)).reshape(N, 1, Cexp_p)

    # ---- 3) pointwise 1x1 + BN + act (+gate, +residual), row-tiled ---------
    Mi = Ho * Wo
    y2r = y2.reshape(N, Mi, Cexp_p)
    bytes_per_row = 2 * 2 * (Cexp_p + Cout_p) + (2 * 2 * Cin_p if use_connect else 0)
    tm = _pick_row_tile(Mi, bytes_per_row)

    in_specs = [pl.BlockSpec((None, tm, Cexp_p), lambda n, i: (n, i, 0))]
    args = [y2r]
    if use_se:
        in_specs.append(pl.BlockSpec((None, 1, Cexp_p), lambda n, i: (n, 0, 0)))
        args.append(g3)
    in_specs += [
        pl.BlockSpec((Cexp_p, Cout_p), lambda n, i: (0, 0)),
        pl.BlockSpec((1, Cout_p), lambda n, i: (0, 0)),
    ]
    args += [prep["wpt"], prep["sh3"]]
    if use_connect:
        in_specs.append(pl.BlockSpec((None, tm, Cin_p), lambda n, i: (n, i, 0)))
        args.append(x.reshape(N, Mi, Cin_p))

    out = pl.pallas_call(
        functools.partial(pointwise_kernel, act_kind=act_kind,
                          use_se=use_se, add_residual=use_connect),
        out_shape=jax.ShapeDtypeStruct((N, Mi, Cout_p), jnp.bfloat16),
        grid=(N, pl.cdiv(Mi, tm)),
        in_specs=in_specs,
        out_specs=pl.BlockSpec((None, tm, Cout_p), lambda n, i: (n, i, 0)),
        compiler_params=pltpu.CompilerParams(
            dimension_semantics=("parallel", "parallel"),
            vmem_limit_bytes=_VMEM_LIMIT),
    )(*args)

    out = out[:, :, :Cout].reshape(N, Ho, Wo, Cout)
    return jnp.transpose(out, (0, 3, 1, 2)).astype(jnp.float32)   # back to NCHW


# --------------------------------------------------------------------------
# pure-JAX reference (mirrors the kernels' bf16 storage / f32 accumulation)
# --------------------------------------------------------------------------
def reference_forward(x_nchw, params, cfg):
    N, Cin, H, W = x_nchw.shape
    k, s = cfg["kernel_size"], cfg["stride"]
    pad = (k - 1) // 2
    Cexp, Cout = cfg["exp_size"], cfg["out_channels"]
    act = lambda y: _act(y, cfg["nonLinear"])
    use_connect = (s == 1 and Cin == Cout)

    x = jnp.transpose(x_nchw, (0, 2, 3, 1)).astype(jnp.bfloat16)

    # expand 1x1 + BN + act
    w1 = (params["w_expand"] * params["scale1"][None, :]).astype(jnp.bfloat16)
    y1 = jnp.dot(x.reshape(-1, Cin), w1,
                 preferred_element_type=jnp.float32) + params["shift1"]
    y1 = act(y1).astype(jnp.bfloat16).astype(jnp.float32).reshape(N, H, W, Cexp)

    # depthwise + BN
    Ho = (H + 2 * pad - k) // s + 1
    Wo = (W + 2 * pad - k) // s + 1
    y1p = jnp.pad(y1, ((0, 0), (pad, pad), (pad, pad), (0, 0)))
    wdw = params["w_dw"] * params["scale2"][None, :]
    acc = jnp.zeros((N, Ho, Wo, Cexp), jnp.float32)
    for kh in range(k):
        for kw in range(k):
            patch = y1p[:, kh:kh + s * (Ho - 1) + 1:s, kw:kw + s * (Wo - 1) + 1:s, :]
            acc = acc + patch * wdw[kh * k + kw]
    y2 = acc + params["shift2"]

    # SE gate
    if cfg["SE"]:
        pooled = jnp.mean(y2, axis=(1, 2))
        h = jnp.maximum(jnp.dot(pooled, params["w_se1"]) + params["b_se1"], 0.0)
        g = jnp.clip(jnp.dot(h, params["w_se2"]) + params["b_se2"] + 3.0,
                     0.0, 6.0) / 6.0
    else:
        g = jnp.ones((N, Cexp), jnp.float32)

    # pointwise + BN + act + residual
    y2b = y2.astype(jnp.bfloat16).astype(jnp.float32)
    xg = (y2b * g[:, None, None, :]).astype(jnp.bfloat16).reshape(-1, Cexp)
    w3 = (params["w_point"] * params["scale3"][None, :]).astype(jnp.bfloat16)
    y3 = jnp.dot(xg, w3, preferred_element_type=jnp.float32) + params["shift3"]
    y3 = act(y3).reshape(N, Ho, Wo, Cout)
    if use_connect:
        y3 = y3 + x.astype(jnp.float32)
    y3 = y3.astype(jnp.bfloat16).astype(jnp.float32)
    return jnp.transpose(y3, (0, 3, 1, 2))


# --------------------------------------------------------------------------
# deterministic parameter construction (BN folded to scale/shift; biases folded)
# --------------------------------------------------------------------------
def make_params(key, cfg, in_channels):
    Cexp, Cout, k = cfg["exp_size"], cfg["out_channels"], cfg["kernel_size"]
    Chid = Cexp // 4
    ks = jax.random.split(key, 12)
    f32 = jnp.float32

    def bn(k4, c):
        kg, kb, km, kv = jax.random.split(k4, 4)
        gamma = 1.0 + 0.1 * jax.random.normal(kg, (c,), f32)
        beta = 0.1 * jax.random.normal(kb, (c,), f32)
        mean = 0.1 * jax.random.normal(km, (c,), f32)
        var = 1.0 + 0.1 * jax.random.uniform(kv, (c,), f32)
        a = gamma / jnp.sqrt(var + EPS)
        return a, beta - mean * a

    w_expand = 0.1 * jax.random.normal(ks[0], (in_channels, Cexp), f32)
    a1, b1 = bn(ks[1], Cexp)
    w_dw = 0.2 * jax.random.normal(ks[2], (k * k, Cexp), f32)
    b_dw = 0.05 * jax.random.normal(ks[3], (Cexp,), f32)
    a2, b2 = bn(ks[4], Cexp)
    w_se1 = 0.2 * jax.random.normal(ks[5], (Cexp, Chid), f32)
    b_se1 = 0.05 * jax.random.normal(ks[6], (Chid,), f32)
    w_se2 = 0.2 * jax.random.normal(ks[7], (Chid, Cexp), f32)
    b_se2 = 0.05 * jax.random.normal(ks[8], (Cexp,), f32)
    w_point = 0.1 * jax.random.normal(ks[9], (Cexp, Cout), f32)
    b_point = 0.05 * jax.random.normal(ks[10], (Cout,), f32)
    a3, b3 = bn(ks[11], Cout)

    return {
        "w_expand": w_expand, "scale1": a1, "shift1": b1,
        "w_dw": w_dw, "scale2": a2, "shift2": b_dw * a2 + b2,   # conv bias folded
        "w_se1": w_se1, "b_se1": b_se1, "w_se2": w_se2, "b_se2": b_se2,
        "w_point": w_point, "scale3": a3, "shift3": b_point * a3 + b3,
    }


# --------------------------------------------------------------------------
if __name__ == "__main__":
    cfg = dict(
        in_channels=16,
        out_channels=16,
        kernel_size=3,
        stride=1,
        nonLinear="HS",   # h_swish path
        SE=True,
        exp_size=32,
    )
    N, H, W = 2, 16, 16

    key = jax.random.PRNGKey(0)
    kx, kp = jax.random.split(key)
    x = jax.random.normal(kx, (N, cfg["in_channels"], H, W), jnp.float32)  # NCHW
    params = make_params(kp, cfg, cfg["in_channels"])

    fwd = jax.jit(lambda xx, pp: mobile_block_forward(xx, pp, cfg))
    out = jax.block_until_ready(fwd(x, params))

    ref = jax.block_until_ready(reference_forward(x, params, cfg))
    np.testing.assert_allclose(np.asarray(out), np.asarray(ref), rtol=2e-2, atol=2e-2)

    assert out.shape == (N, cfg["out_channels"], H, W)
    print("KERNEL_OK")
</pallas_src>

<mosaic_0001>
module attributes {stable_mosaic.version = 11 : i64} {
  func.func @fused_expand_dw_kernel(%arg0: i32, %arg1: i32, %arg2: memref<1x16x16x128xbf16, #tpu.memory_space<vmem>>, %arg3: memref<128x128xbf16, #tpu.memory_space<vmem>>, %arg4: memref<1x128xf32, #tpu.memory_space<vmem>>, %arg5: memref<9x128xf32, #tpu.memory_space<vmem>>, %arg6: memref<1x128xf32, #tpu.memory_space<vmem>>, %arg7: memref<1x16x16x128xbf16, #tpu.memory_space<vmem>>, %arg8: memref<1x1x128xf32, #tpu.memory_space<vmem>>, %arg9: memref<18x16x128xbf16, #tpu.memory_space<vmem>>) attributes {dimension_semantics = [#tpu.dimension_semantics<parallel>, #tpu.dimension_semantics<parallel>], iteration_bounds = array<i64: 2, 1>, scalar_prefetch = 0 : i64, scratch_operands = 1 : i64, tpu.core_type = #tpu.core_type<tc>, window_params = [{transform_indices = @transform_0, window_bounds = array<i64: 1, 16, 16, 128>}, {transform_indices = @transform_1, window_bounds = array<i64: 128, 128>}, {transform_indices = @transform_2, window_bounds = array<i64: 1, 128>}, {transform_indices = @transform_3, window_bounds = array<i64: 9, 128>}, {transform_indices = @transform_4, window_bounds = array<i64: 1, 128>}, {transform_indices = @transform_5, window_bounds = array<i64: 1, 16, 16, 128>}, {transform_indices = @transform_6, window_bounds = array<i64: 1, 1, 128>}]} {
    %cst = arith.constant 0.000000e+00 : bf16
    %0 = vector.broadcast %cst : bf16 to vector<1x16x128xbf16>
    %c0 = arith.constant 0 : index
    %c0_0 = arith.constant 0 : index
    %c0_1 = arith.constant 0 : index
    %1 = vector.load %arg9[%c0, %c0_0, %c0_1] : memref<18x16x128xbf16, #tpu.memory_space<vmem>>, vector<1x16x128xbf16>
    tpu.vector_store %arg9[%c0, %c0_0, %c0_1], %0 {strides = array<i32>} : memref<18x16x128xbf16, #tpu.memory_space<vmem>>, vector<1x16x128xbf16>,
    %c17 = arith.constant 17 : index
    %c0_2 = arith.constant 0 : index
    %c0_3 = arith.constant 0 : index
    %2 = vector.load %arg9[%c17, %c0_2, %c0_3] : memref<18x16x128xbf16, #tpu.memory_space<vmem>>, vector<1x16x128xbf16>
    tpu.vector_store %arg9[%c17, %c0_2, %c0_3], %0 {strides = array<i32>} : memref<18x16x128xbf16, #tpu.memory_space<vmem>>, vector<1x16x128xbf16>,
    %c0_4 = arith.constant 0 : index
    %c0_5 = arith.constant 0 : index
    %3 = vector.load %arg3[%c0_4, %c0_5] : memref<128x128xbf16, #tpu.memory_space<vmem>>, vector<128x128xbf16>
    %c0_6 = arith.constant 0 : index
    %c0_7 = arith.constant 0 : index
    %4 = vector.load %arg4[%c0_6, %c0_7] : memref<1x128xf32, #tpu.memory_space<vmem>>, vector<1x128xf32>
    %c0_i32 = arith.constant 0 : i32
    %c16_i32 = arith.constant 16 : i32
    %5 = arith.muli %c0_i32, %c16_i32 : i32
    %c0_8 = arith.constant 0 : index
    %6 = arith.index_cast %5 : i32 to index
    %c0_9 = arith.constant 0 : index
    %c0_10 = arith.constant 0 : index
    %7 = vector.load %arg2[%c0_8, %6, %c0_9, %c0_10] : memref<1x16x16x128xbf16, #tpu.memory_space<vmem>>, vector<1x16x16x128xbf16>
    %8 = vector.shape_cast %7 : vector<1x16x16x128xbf16> to vector<16x16x128xbf16>
    %9 = vector.shape_cast %8 : vector<16x16x128xbf16> to vector<256x128xbf16>
    %cst_11 = arith.constant dense<0.000000e+00> : vector<256x128xf32>
    %10 = tpu.matmul %9, %3, %cst_11 {dimension_numbers = #tpu.dot_dimension_numbers<[1], [0], [0], [1], [0, 0, 1, 1], [], []>} : vector<256x128xbf16>, vector<128x128xbf16>, vector<256x128xf32> -> vector<256x128xf32>
    %11 = vector.broadcast %4 : vector<1x128xf32> to vector<256x128xf32>
    %12 = arith.addf %10, %11 : vector<256x128xf32>
    %cst_12 = arith.constant 3.000000e+00 : f32
    %13 = vector.broadcast %cst_12 : f32 to vector<256x128xf32>
    %14 = arith.addf %12, %13 : vector<256x128xf32>
    %cst_13 = arith.constant 0.000000e+00 : f32
    %cst_14 = arith.constant 6.000000e+00 : f32
    %15 = vector.broadcast %cst_13 : f32 to vector<256x128xf32>
    %16 = arith.maximumf %15, %14 : vector<256x128xf32>
    %17 = vector.broadcast %cst_14 : f32 to vector<256x128xf32>
    %18 = arith.minimumf %17, %16 : vector<256x128xf32>
    %cst_15 = arith.constant 0.166666672 : f32
    %19 = vector.broadcast %cst_15 : f32 to vector<256x128xf32>
    %20 = arith.mulf %18, %19 : vector<256x128xf32>
    %21 = arith.mulf %20, %12 : vector<256x128xf32>
    %22 = arith.truncf %21 : vector<256x128xf32> to vector<256x128xbf16>
    %23 = vector.shape_cast %22 : vector<256x128xbf16> to vector<16x16x128xbf16>
    %c1_i32 = arith.constant 1 : i32
    %24 = arith.addi %c1_i32, %5 : i32
    %25 = arith.index_cast %24 : i32 to index
    %c0_16 = arith.constant 0 : index
    %c0_17 = arith.constant 0 : index
    %26 = vector.load %arg9[%25, %c0_16, %c0_17] : memref<18x16x128xbf16, #tpu.memory_space<vmem>>, vector<16x16x128xbf16>
    tpu.vector_store %arg9[%25, %c0_16, %c0_17], %23 {strides = array<i32>} : memref<18x16x128xbf16, #tpu.memory_space<vmem>>, vector<16x16x128xbf16>,
    %c1_i32_18 = arith.constant 1 : i32
    %c0_19 = arith.constant 0 : index
    %c0_20 = arith.constant 0 : index
    %27 = vector.load %arg5[%c0_19, %c0_20] : memref<9x128xf32, #tpu.memory_space<vmem>>, vector<9x128xf32>
    %c0_21 = arith.constant 0 : index
    %c0_22 = arith.constant 0 : index
    %28 = vector.load %arg6[%c0_21, %c0_22] : memref<1x128xf32, #tpu.memory_space<vmem>>, vector<1x128xf32>
    %29 = vector.shape_cast %28 : vector<1x128xf32> to vector<1x1x128xf32>
    %30 = tpu.iota {dimensions = array<i32: 0>} : vector<16x128xi32>
    %c1_i32_23 = arith.constant 1 : i32
    %31 = vector.broadcast %c1_i32_23 : i32 to vector<16x128xi32>
    %32 = arith.cmpi sge, %30, %31 : vector<16x128xi32>
    %c17_i32 = arith.constant 17 : i32
    %33 = vector.broadcast %c17_i32 : i32 to vector<16x128xi32>
    %34 = arith.cmpi slt, %30, %33 : vector<16x128xi32>
    %35 = arith.andi %32, %34 : vector<16x128xi1>
    %c-1_i32 = arith.constant -1 : i32
    %36 = vector.broadcast %c-1_i32 : i32 to vector<16x128xi32>
    %37 = arith.cmpi sge, %30, %36 : vector<16x128xi32>
    %c15_i32 = arith.constant 15 : i32
    %38 = vector.broadcast %c15_i32 : i32 to vector<16x128xi32>
    %39 = arith.cmpi slt, %30, %38 : vector<16x128xi32>
    %40 = arith.andi %37, %39 : vector<16x128xi1>
    %cst_24 = arith.constant 0.000000e+00 : f32
    %41 = vector.broadcast %cst_24 : f32 to vector<1x128xf32>
    %c0_i32_25 = arith.constant 0 : i32
    %c2_i32 = arith.constant 2 : i32
    %42 = arith.addi %c0_i32_25, %c2_i32 : i32
    %c1_i32_26 = arith.constant 1 : i32
    %43 = scf.for %arg10 = %c0_i32_25 to %42 step %c1_i32_26 iter_args(%arg11 = %41) -> (vector<1x128xf32>)  : i32 {
      %c8_i32 = arith.constant 8 : i32
      %49 = arith.muli %arg10, %c8_i32 : i32
      %cst_32 = arith.constant 0.000000e+00 : f32
      %50 = vector.broadcast %cst_32 : f32 to vector<8x16x128xf32>
      %c0_i32_33 = arith.constant 0 : i32
      %51 = arith.addi %49, %c0_i32_33 : i32
      %52 = arith.index_cast %51 : i32 to index
      %c0_34 = arith.constant 0 : index
      %c0_35 = arith.constant 0 : index
      %53 = vector.load %arg9[%52, %c0_34, %c0_35] : memref<18x16x128xbf16, #tpu.memory_space<vmem>>, vector<8x16x128xbf16>
      %54 = arith.extf %53 : vector<8x16x128xbf16> to vector<8x16x128xf32>
      %c1_i32_36 = arith.constant 1 : i32
      %55 = tpu.dynamic_rotate %54 by %c1_i32_36 dim 1 : vector<8x16x128xf32>, i32 -> vector<8x16x128xf32>
      %56 = vector.shape_cast %35 : vector<16x128xi1> to vector<1x16x128xi1>
      %cst_37 = arith.constant 0.000000e+00 : f32
      %57 = vector.shape_cast %56 : vector<1x16x128xi1> to vector<1x16x128xi1>
      %58 = vector.broadcast %57 : vector<1x16x128xi1> to vector<8x16x128xi1>
      %59 = vector.broadcast %cst_37 : f32 to vector<8x16x128xf32>
      %60 = arith.select %58, %55, %59 : vector<8x16x128xi1>, vector<8x16x128xf32>
      %61 = vector.extract_strided_slice %27 {offsets = [0, 0], sizes = [1, 128], strides = [1, 1]} : vector<9x128xf32> to vector<1x128xf32>
      %62 = vector.shape_cast %61 : vector<1x128xf32> to vector<1x1x128xf32>
      %63 = vector.broadcast %62 : vector<1x1x128xf32> to vector<8x16x128xf32>
      %64 = arith.mulf %60, %63 : vector<8x16x128xf32>
      %65 = arith.addf %50, %64 : vector<8x16x128xf32>
      %66 = vector.extract_strided_slice %27 {offsets = [1, 0], sizes = [1, 128], strides = [1, 1]} : vector<9x128xf32> to vector<1x128xf32>
      %67 = vector.shape_cast %66 : vector<1x128xf32> to vector<1x1x128xf32>
      %68 = vector.broadcast %67 : vector<1x1x128xf32> to vector<8x16x128xf32>
      %69 = arith.mulf %54, %68 : vector<8x16x128xf32>
      %70 = arith.addf %65, %69 : vector<8x16x128xf32>
      %c15_i32_38 = arith.constant 15 : i32
      %71 = tpu.dynamic_rotate %54 by %c15_i32_38 dim 1 : vector<8x16x128xf32>, i32 -> vector<8x16x128xf32>
      %72 = vector.shape_cast %40 : vector<16x128xi1> to vector<1x16x128xi1>
      %cst_39 = arith.constant 0.000000e+00 : f32
      %73 = vector.shape_cast %72 : vector<1x16x128xi1> to vector<1x16x128xi1>
      %74 = vector.broadcast %73 : vector<1x16x128xi1> to vector<8x16x128xi1>
      %75 = vector.broadcast %cst_39 : f32 to vector<8x16x128xf32>
      %76 = arith.select %74, %71, %75 : vector<8x16x128xi1>, vector<8x16x128xf32>
      %77 = vector.extract_strided_slice %27 {offsets = [2, 0], sizes = [1, 128], strides = [1, 1]} : vector<9x128xf32> to vector<1x128xf32>
      %78 = vector.shape_cast %77 : vector<1x128xf32> to vector<1x1x128xf32>
      %79 = vector.broadcast %78 : vector<1x1x128xf32> to vector<8x16x128xf32>
      %80 = arith.mulf %76, %79 : vector<8x16x128xf32>
      %81 = arith.addf %70, %80 : vector<8x16x128xf32>
      %c1_i32_40 = arith.constant 1 : i32
      %82 = arith.addi %49, %c1_i32_40 : i32
      %83 = arith.index_cast %82 : i32 to index
      %c0_41 = arith.constant 0 : index
      %c0_42 = arith.constant 0 : index
      %84 = vector.load %arg9[%83, %c0_41, %c0_42] : memref<18x16x128xbf16, #tpu.memory_space<vmem>>, vector<8x16x128xbf16>
      %85 = arith.extf %84 : vector<8x16x128xbf16> to vector<8x16x128xf32>
      %c1_i32_43 = arith.constant 1 : i32
      %86 = tpu.dynamic_rotate %85 by %c1_i32_43 dim 1 : vector<8x16x128xf32>, i32 -> vector<8x16x128xf32>
      %87 = vector.shape_cast %35 : vector<16x128xi1> to vector<1x16x128xi1>
      %cst_44 = arith.constant 0.000000e+00 : f32
      %88 = vector.shape_cast %87 : vector<1x16x128xi1> to vector<1x16x128xi1>
      %89 = vector.broadcast %88 : vector<1x16x128xi1> to vector<8x16x128xi1>
      %90 = vector.broadcast %cst_44 : f32 to vector<8x16x128xf32>
      %91 = arith.select %89, %86, %90 : vector<8x16x128xi1>, vector<8x16x128xf32>
      %92 = vector.extract_strided_slice %27 {offsets = [3, 0], sizes = [1, 128], strides = [1, 1]} : vector<9x128xf32> to vector<1x128xf32>
      %93 = vector.shape_cast %92 : vector<1x128xf32> to vector<1x1x128xf32>
      %94 = vector.broadcast %93 : vector<1x1x128xf32> to vector<8x16x128xf32>
      %95 = arith.mulf %91, %94 : vector<8x16x128xf32>
      %96 = arith.addf %81, %95 : vector<8x16x128xf32>
      %97 = vector.extract_strided_slice %27 {offsets = [4, 0], sizes = [1, 128], strides = [1, 1]} : vector<9x128xf32> to vector<1x128xf32>
      %98 = vector.shape_cast %97 : vector<1x128xf32> to vector<1x1x128xf32>
      %99 = vector.broadcast %98 : vector<1x1x128xf32> to vector<8x16x128xf32>
      %100 = arith.mulf %85, %99 : vector<8x16x128xf32>
      %101 = arith.addf %96, %100 : vector<8x16x128xf32>
      %c15_i32_45 = arith.constant 15 : i32
      %102 = tpu.dynamic_rotate %85 by %c15_i32_45 dim 1 : vector<8x16x128xf32>, i32 -> vector<8x16x128xf32>
      %103 = vector.shape_cast %40 : vector<16x128xi1> to vector<1x16x128xi1>
      %cst_46 = arith.constant 0.000000e+00 : f32
      %104 = vector.shape_cast %103 : vector<1x16x128xi1> to vector<1x16x128xi1>
      %105 = vector.broadcast %104 : vector<1x16x128xi1> to vector<8x16x128xi1>
      %106 = vector.broadcast %cst_46 : f32 to vector<8x16x128xf32>
      %107 = arith.select %105, %102, %106 : vector<8x16x128xi1>, vector<8x16x128xf32>
      %108 = vector.extract_strided_slice %27 {offsets = [5, 0], sizes = [1, 128], strides = [1, 1]} : vector<9x128xf32> to vector<1x128xf32>
      %109 = vector.shape_cast %108 : vector<1x128xf32> to vector<1x1x128xf32>
      %110 = vector.broadcast %109 : vector<1x1x128xf32> to vector<8x16x128xf32>
      %111 = arith.mulf %107, %110 : vector<8x16x128xf32>
      %112 = arith.addf %101, %111 : vector<8x16x128xf32>
      %c2_i32_47 = arith.constant 2 : i32
      %113 = arith.addi %49, %c2_i32_47 : i32
      %114 = arith.index_cast %113 : i32 to index
      %c0_48 = arith.constant 0 : index
      %c0_49 = arith.constant 0 : index
      %115 = vector.load %arg9[%114, %c0_48, %c0_49] : memref<18x16x128xbf16, #tpu.memory_space<vmem>>, vector<8x16x128xbf16>
      %116 = arith.extf %115 : vector<8x16x128xbf16> to vector<8x16x128xf32>
      %c1_i32_50 = arith.constant 1 : i32
      %117 = tpu.dynamic_rotate %116 by %c1_i32_50 dim 1 : vector<8x16x128xf32>, i32 -> vector<8x16x128xf32>
      %118 = vector.shape_cast %35 : vector<16x128xi1> to vector<1x16x128xi1>
      %cst_51 = arith.constant 0.000000e+00 : f32
      %119 = vector.shape_cast %118 : vector<1x16x128xi1> to vector<1x16x128xi1>
      %120 = vector.broadcast %119 : vector<1x16x128xi1> to vector<8x16x128xi1>
      %121 = vector.broadcast %cst_51 : f32 to vector<8x16x128xf32>
      %122 = arith.select %120, %117, %121 : vector<8x16x128xi1>, vector<8x16x128xf32>
      %123 = vector.extract_strided_slice %27 {offsets = [6, 0], sizes = [1, 128], strides = [1, 1]} : vector<9x128xf32> to vector<1x128xf32>
      %124 = vector.shape_cast %123 : vector<1x128xf32> to vector<1x1x128xf32>
      %125 = vector.broadcast %124 : vector<1x1x128xf32> to vector<8x16x128xf32>
      %126 = arith.mulf %122, %125 : vector<8x16x128xf32>
      %127 = arith.addf %112, %126 : vector<8x16x128xf32>
      %128 = vector.extract_strided_slice %27 {offsets = [7, 0], sizes = [1, 128], strides = [1, 1]} : vector<9x128xf32> to vector<1x128xf32>
      %129 = vector.shape_cast %128 : vector<1x128xf32> to vector<1x1x128xf32>
      %130 = vector.broadcast %129 : vector<1x1x128xf32> to vector<8x16x128xf32>
      %131 = arith.mulf %116, %130 : vector<8x16x128xf32>
      %132 = arith.addf %127, %131 : vector<8x16x128xf32>
      %c15_i32_52 = arith.constant 15 : i32
      %133 = tpu.dynamic_rotate %116 by %c15_i32_52 dim 1 : vector<8x16x128xf32>, i32 -> vector<8x16x128xf32>
      %134 = vector.shape_cast %40 : vector<16x128xi1> to vector<1x16x128xi1>
      %cst_53 = arith.constant 0.000000e+00 : f32
      %135 = vector.shape_cast %134 : vector<1x16x128xi1> to vector<1x16x128xi1>
      %136 = vector.broadcast %135 : vector<1x16x128xi1> to vector<8x16x128xi1>
      %137 = vector.broadcast %cst_53 : f32 to vector<8x16x128xf32>
      %138 = arith.select %136, %133, %137 : vector<8x16x128xi1>, vector<8x16x128xf32>
      %139 = vector.extract_strided_slice %27 {offsets = [8, 0], sizes = [1, 128], strides = [1, 1]} : vector<9x128xf32> to vector<1x128xf32>
      %140 = vector.shape_cast %139 : vector<1x128xf32> to vector<1x1x128xf32>
      %141 = vector.broadcast %140 : vector<1x1x128xf32> to vector<8x16x128xf32>
      %142 = arith.mulf %138, %141 : vector<8x16x128xf32>
      %143 = arith.addf %132, %142 : vector<8x16x128xf32>
      %144 = vector.broadcast %29 : vector<1x1x128xf32> to vector<8x16x128xf32>
      %145 = arith.addf %143, %144 : vector<8x16x128xf32>
      %146 = arith.truncf %145 : vector<8x16x128xf32> to vector<8x16x128xbf16>
      %c0_54 = arith.constant 0 : index
      %147 = arith.index_cast %49 : i32 to index
      %c0_55 = arith.constant 0 : index
      %c0_56 = arith.constant 0 : index
      %148 = vector.load %arg7[%c0_54, %147, %c0_55, %c0_56] : memref<1x16x16x128xbf16, #tpu.memory_space<vmem>>, vector<1x8x16x128xbf16>
      %149 = vector.shape_cast %148 : vector<1x8x16x128xbf16> to vector<8x16x128xbf16>
      %150 = vector.shape_cast %146 : vector<8x16x128xbf16> to vector<1x8x16x128xbf16>
      tpu.vector_store %arg7[%c0_54, %147, %c0_55, %c0_56], %150 {strides = array<i32>} : memref<1x16x16x128xbf16, #tpu.memory_space<vmem>>, vector<1x8x16x128xbf16>,
      %cst_57 = arith.constant dense<0.000000e+00> : vector<16x128xf32>
      %151 = vector.multi_reduction <add>, %145, %cst_57 [0] : vector<8x16x128xf32> to vector<16x128xf32>
      %cst_58 = arith.constant dense<0.000000e+00> : vector<128xf32>
      %152 = vector.multi_reduction <add>, %151, %cst_58 [0] : vector<16x128xf32> to vector<128xf32>
      %153 = vector.shape_cast %152 : vector<128xf32> to vector<1x128xf32>
      %154 = arith.addf %arg11, %153 : vector<1x128xf32>
      scf.yield %154 : vector<1x128xf32>
    }
    %c2_i32_27 = arith.constant 2 : i32
    %cst_28 = arith.constant 3.906250e-03 : f32
    %44 = vector.broadcast %cst_28 : f32 to vector<1x128xf32>
    %45 = arith.mulf %43, %44 : vector<1x128xf32>
    %c0_29 = arith.constant 0 : index
    %c0_30 = arith.constant 0 : index
    %c0_31 = arith.constant 0 : index
    %46 = vector.load %arg8[%c0_29, %c0_30, %c0_31] : memref<1x1x128xf32, #tpu.memory_space<vmem>>, vector<1x1x128xf32>
    %47 = vector.shape_cast %46 : vector<1x1x128xf32> to vector<1x128xf32>
    %48 = vector.shape_cast %45 : vector<1x128xf32> to vector<1x1x128xf32>
    tpu.vector_store %arg8[%c0_29, %c0_30, %c0_31], %48 {strides = array<i32>} : memref<1x1x128xf32, #tpu.memory_space<vmem>>, vector<1x1x128xf32>,
    return
  }
  func.func @transform_0(%arg0: i32, %arg1: i32) -> (i32, i32, i32, i32) {
    %c0_i32 = arith.constant 0 : i32
    %c0_i32_0 = arith.constant 0 : i32
    %c0_i32_1 = arith.constant 0 : i32
    %c0_i32_2 = arith.constant 0 : i32
    return %arg0, %c0_i32, %c0_i32_0, %c0_i32_1 : i32, i32, i32, i32
  }
  func.func @transform_1(%arg0: i32, %arg1: i32) -> (i32, i32) {
    %c0_i32 = arith.constant 0 : i32
    %c0_i32_0 = arith.constant 0 : i32
    return %c0_i32, %arg1 : i32, i32
  }
  func.func @transform_2(%arg0: i32, %arg1: i32) -> (i32, i32) {
    %c0_i32 = arith.constant 0 : i32
    %c0_i32_0 = arith.constant 0 : i32
    return %c0_i32, %arg1 : i32, i32
  }
  func.func @transform_3(%arg0: i32, %arg1: i32) -> (i32, i32) {
    %c0_i32 = arith.constant 0 : i32
    %c0_i32_0 = arith.constant 0 : i32
    return %c0_i32, %arg1 : i32, i32
  }
  func.func @transform_4(%arg0: i32, %arg1: i32) -> (i32, i32) {
    %c0_i32 = arith.constant 0 : i32
    %c0_i32_0 = arith.constant 0 : i32
    return %c0_i32, %arg1 : i32, i32
  }
  func.func @transform_5(%arg0: i32, %arg1: i32) -> (i32, i32, i32, i32) {
    %c0_i32 = arith.constant 0 : i32
    %c0_i32_0 = arith.constant 0 : i32
    %c0_i32_1 = arith.constant 0 : i32
    return %arg0, %c0_i32, %c0_i32_0, %arg1 : i32, i32, i32, i32
  }
  func.func @transform_6(%arg0: i32, %arg1: i32) -> (i32, i32, i32) {
    %c0_i32 = arith.constant 0 : i32
    %c0_i32_0 = arith.constant 0 : i32
    return %arg0, %c0_i32, %arg1 : i32, i32, i32
  }
}

module attributes {stable_mosaic.version = 11 : i64} {
  func.func @pointwise_kernel(%arg0: i32, %arg1: i32, %arg2: memref<1x256x128xbf16, #tpu.memory_space<vmem>>, %arg3: memref<1x1x128xf32, #tpu.memory_space<vmem>>, %arg4: memref<128x128xbf16, #tpu.memory_space<vmem>>, %arg5: memref<1x128xf32, #tpu.memory_space<vmem>>, %arg6: memref<1x256x128xbf16, #tpu.memory_space<vmem>>, %arg7: memref<1x256x128xbf16, #tpu.memory_space<vmem>>) attributes {dimension_semantics = [#tpu.dimension_semantics<parallel>, #tpu.dimension_semantics<parallel>], iteration_bounds = array<i64: 2, 1>, scalar_prefetch = 0 : i64, scratch_operands = 0 : i64, tpu.core_type = #tpu.core_type<tc>, window_params = [{transform_indices = @transform_0, window_bounds = array<i64: 1, 256, 128>}, {transform_indices = @transform_1, window_bounds = array<i64: 1, 1, 128>}, {pipeline_mode = #tpu.pipeline_mode<synchronous>, transform_indices = @transform_2, window_bounds = array<i64: 128, 128>}, {pipeline_mode = #tpu.pipeline_mode<synchronous>, transform_indices = @transform_3, window_bounds = array<i64: 1, 128>}, {transform_indices = @transform_4, window_bounds = array<i64: 1, 256, 128>}, {transform_indices = @transform_5, window_bounds = array<i64: 1, 256, 128>}]} {
    %c0 = arith.constant 0 : index
    %c0_0 = arith.constant 0 : index
    %c0_1 = arith.constant 0 : index
    %0 = vector.load %arg2[%c0, %c0_0, %c0_1] : memref<1x256x128xbf16, #tpu.memory_space<vmem>>, vector<1x256x128xbf16>
    %1 = vector.shape_cast %0 : vector<1x256x128xbf16> to vector<256x128xbf16>
    %2 = arith.extf %1 : vector<256x128xbf16> to vector<256x128xf32>
    %c0_2 = arith.constant 0 : index
    %c0_3 = arith.constant 0 : index
    %c0_4 = arith.constant 0 : index
    %3 = vector.load %arg3[%c0_2, %c0_3, %c0_4] : memref<1x1x128xf32, #tpu.memory_space<vmem>>, vector<1x1x128xf32>
    %4 = vector.shape_cast %3 : vector<1x1x128xf32> to vector<1x128xf32>
    %5 = vector.broadcast %4 : vector<1x128xf32> to vector<256x128xf32>
    %6 = arith.mulf %2, %5 : vector<256x128xf32>
    %7 = arith.truncf %6 : vector<256x128xf32> to vector<256x128xbf16>
    %c0_5 = arith.constant 0 : index
    %c0_6 = arith.constant 0 : index
    %8 = vector.load %arg4[%c0_5, %c0_6] : memref<128x128xbf16, #tpu.memory_space<vmem>>, vector<128x128xbf16>
    %cst = arith.constant dense<0.000000e+00> : vector<256x128xf32>
    %9 = tpu.matmul %7, %8, %cst {dimension_numbers = #tpu.dot_dimension_numbers<[1], [0], [0], [1], [0, 0, 1, 1], [], []>} : vector<256x128xbf16>, vector<128x128xbf16>, vector<256x128xf32> -> vector<256x128xf32>
    %c0_7 = arith.constant 0 : index
    %c0_8 = arith.constant 0 : index
    %10 = vector.load %arg5[%c0_7, %c0_8] : memref<1x128xf32, #tpu.memory_space<vmem>>, vector<1x128xf32>
    %11 = vector.broadcast %10 : vector<1x128xf32> to vector<256x128xf32>
    %12 = arith.addf %9, %11 : vector<256x128xf32>
    %cst_9 = arith.constant 3.000000e+00 : f32
    %13 = vector.broadcast %cst_9 : f32 to vector<256x128xf32>
    %14 = arith.addf %12, %13 : vector<256x128xf32>
    %cst_10 = arith.constant 0.000000e+00 : f32
    %cst_11 = arith.constant 6.000000e+00 : f32
    %15 = vector.broadcast %cst_10 : f32 to vector<256x128xf32>
    %16 = arith.maximumf %15, %14 : vector<256x128xf32>
    %17 = vector.broadcast %cst_11 : f32 to vector<256x128xf32>
    %18 = arith.minimumf %17, %16 : vector<256x128xf32>
    %cst_12 = arith.constant 0.166666672 : f32
    %19 = vector.broadcast %cst_12 : f32 to vector<256x128xf32>
    %20 = arith.mulf %18, %19 : vector<256x128xf32>
    %21 = arith.mulf %20, %12 : vector<256x128xf32>
    %c0_13 = arith.constant 0 : index
    %c0_14 = arith.constant 0 : index
    %c0_15 = arith.constant 0 : index
    %22 = vector.load %arg6[%c0_13, %c0_14, %c0_15] : memref<1x256x128xbf16, #tpu.memory_space<vmem>>, vector<1x256x128xbf16>
    %23 = vector.shape_cast %22 : vector<1x256x128xbf16> to vector<256x128xbf16>
    %24 = arith.extf %23 : vector<256x128xbf16> to vector<256x128xf32>
    %25 = arith.addf %21, %24 : vector<256x128xf32>
    %26 = arith.truncf %25 : vector<256x128xf32> to vector<256x128xbf16>
    %c0_16 = arith.constant 0 : index
    %c0_17 = arith.constant 0 : index
    %c0_18 = arith.constant 0 : index
    %27 = vector.load %arg7[%c0_16, %c0_17, %c0_18] : memref<1x256x128xbf16, #tpu.memory_space<vmem>>, vector<1x256x128xbf16>
    %28 = vector.shape_cast %27 : vector<1x256x128xbf16> to vector<256x128xbf16>
    %29 = vector.shape_cast %26 : vector<256x128xbf16> to vector<1x256x128xbf16>
    tpu.vector_store %arg7[%c0_16, %c0_17, %c0_18], %29 {strides = array<i32>} : memref<1x256x128xbf16, #tpu.memory_space<vmem>>, vector<1x256x128xbf16>,
    return
  }
  func.func @transform_0(%arg0: i32, %arg1: i32) -> (i32, i32, i32) {
    %c0_i32 = arith.constant 0 : i32
    %c0_i32_0 = arith.constant 0 : i32
    return %arg0, %arg1, %c0_i32 : i32, i32, i32
  }
  func.func @transform_1(%arg0: i32, %arg1: i32) -> (i32, i32, i32) {
    %c0_i32 = arith.constant 0 : i32
    %c0_i32_0 = arith.constant 0 : i32
    %c0_i32_1 = arith.constant 0 : i32
    return %arg0, %c0_i32, %c0_i32_0 : i32, i32, i32
  }
  func.func @transform_2(%arg0: i32, %arg1: i32) -> (i32, i32) {
    %c0_i32 = arith.constant 0 : i32
    %c0_i32_0 = arith.constant 0 : i32
    %c0_i32_1 = arith.constant 0 : i32
    return %c0_i32, %c0_i32_0 : i32, i32
  }
  func.func @transform_3(%arg0: i32, %arg1: i32) -> (i32, i32) {
    %c0_i32 = arith.constant 0 : i32
    %c0_i32_0 = arith.constant 0 : i32
    %c0_i32_1 = arith.constant 0 : i32
    return %c0_i32, %c0_i32_0 : i32, i32
  }
  func.func @transform_4(%arg0: i32, %arg1: i32) -> (i32, i32, i32) {
    %c0_i32 = arith.constant 0 : i32
    %c0_i32_0 = arith.constant 0 : i32
    return %arg0, %arg1, %c0_i32 : i32, i32, i32
  }
  func.func @transform_5(%arg0: i32, %arg1: i32) -> (i32, i32, i32) {
    %c0_i32 = arith.constant 0 : i32
    %c0_i32_0 = arith.constant 0 : i32
    return %arg0, %arg1, %c0_i32 : i32, i32, i32
  }
}

</mosaic_0001>

<llo_original>
// kernel: _lambda_.3
$region0: #{_lambda_.3}
  #allocation0 [shape = 'u32[]', space=smem, size = 0x4, offset = 0x4, fixed_abs, tag = 'smem constant byte address 0x4 - core index']
  #allocation1 [shape = 'u32[144,128]{1,0:T(1,128)}', space=vmem, size = 0x12000, scoped, tag = 'internal scratch']
  %s0 = inlined_call_operand.vmem [shape: bf16[2,256,128], index: 0, kind: input, shape index: {}]
  %s1 = inlined_call_operand.vmem [shape: f32[2,1,128], index: 1, kind: input, shape index: {}]
  %s2 = inlined_call_operand.vmem [shape: bf16[128,128], index: 2, kind: input, shape index: {}]
  %s3 = inlined_call_operand.vmem [shape: f32[1,128], index: 3, kind: input, shape index: {}]
  %s4 = inlined_call_operand.vmem [shape: bf16[2,256,128], index: 4, kind: input, shape index: {}]
  %s5 = inlined_call_operand.vmem [shape: bf16[2,256,128], index: 5, kind: output, shape index: {}]
  %s6 = sld [smem:[#allocation0]]
  $region53: #{_lambda_.3} parent=0
    _
  %s8 = ssub.s32 1, %s6
  %s9 = scalar_select 0, %s8, %s6
  loop: start=0, step=1, limit=4
  $region2: #{_lambda_.3} parent=0 // loop_pre_header
    _
  $region3: #{_lambda_.3} parent=0 // loop_header
    %s11 = sphi 0, %s15
    %p12 = scmp.ge.s32.totalorder %s11, 4
    %s18 = sphi 0, %s30
    %s19 = sphi 0, %s26
    %s20 = sphi 0, %s18
    %s21 = sphi 0, %s19
    %s22 = sphi 0, %s20
    %s23 = sphi 0, %s21
    %s35 = sphi 0, %s37
    %s38 = sphi 0, %s35
    %s39 = sphi 0, %s38
    %s55 = sphi 0, %s39
    %s61 = sphi 0, %s63
    %s64 = sphi 0, %s61
    %s65 = sphi 0, %s64
    %s81 = sphi 0, %s65
    %s85 = sphi 0, %s85
    %s87 = sphi 0, %s85
    %s88 = sphi 0, %s87
    %s102 = sphi 0, %s88
    %s106 = sphi 0, %s106
    %s108 = sphi 0, %s106
    %s109 = sphi 0, %s108
    %s123 = sphi 0, %s109
    %s131 = sphi 0, %s133
    %s134 = sphi 0, %s131
    %s135 = sphi 0, %s134
    %s151 = sphi 0, %s135
    %s159 = sphi 0, %s161
    %s162 = sphi 0, %s159
    %s163 = sphi 0, %s162
    %s179 = sphi 0, %s163
  $region4: #{_lambda_.3} parent=0 // loop_header_branch
    %14 = sbr.rel (%p12) target = $region8
  $region5: #{_lambda_.3} parent=0 // loop_body
    %s16 = ssub.s32 %s11, 1
    %s17 = ssub.s32 %s11, 2
    %s24 = sadd.s32 1, %s19
    %p25 = scmp.ge.s32.totalorder %s24, 1
    %s26 = scalar_select %p25, 0, %s24
    %s27 = sadd.s32 1, %s18
    %s28 = scalar_select %p25, %s27, %s18
    %p29 = scmp.ge.s32.totalorder %s28, 2
    %s30 = scalar_select %p29, 0, %s28
    %s31 = ssub.s32 %s18, %s30
    %s32 = ssub.s32 %s19, %s26
    %s33 = sor.u32 %s31, %s32
    %p34 = scmp.eq.s32.totalorder %s33, 0
    %s36 = sadd.s32 %s35, 1
    %s37 = scalar_select %p34, %s35, %s36
    %p40 = pneg %p34
    %p41 = scmp.eq.s32.totalorder %s11, 1
    %p42 = por %p40, %p41
    %p43 = scmp.ne.s32.totalorder %s35, %s38
    %p44 = scmp.eq.s32.totalorder %s11, 0
    %p45 = por %p43, %p44
    %p46 = scmp.ne.s32.totalorder %s35, %s38
    %p47 = scmp.eq.s32.totalorder %s16, 1
    %p48 = por %p46, %p47
    %p49 = scmp.ne.s32.totalorder %s38, %s39
    %p50 = scmp.eq.s32.totalorder %s16, 0
    %p51 = por %p49, %p50
    %p52 = scmp.ne.s32.totalorder %s38, %s39
    %p53 = scmp.eq.s32.totalorder %s17, 1
    %p54 = por %p52, %p53
    %p56 = scmp.ne.s32.totalorder %s39, %s55
    %p57 = scmp.eq.s32.totalorder %s17, 0
    %p58 = por %p56, %p57
    %s59 = ssub.s32 %s18, %s30
    %p60 = scmp.eq.s32.totalorder %s59, 0
    %s62 = sadd.s32 %s61, 1
    %s63 = scalar_select %p60, %s61, %s62
    %p66 = pneg %p60
    %p67 = scmp.eq.s32.totalorder %s11, 1
    %p68 = por %p66, %p67
    %p69 = scmp.ne.s32.totalorder %s61, %s64
    %p70 = scmp.eq.s32.totalorder %s11, 0
    %p71 = por %p69, %p70
    %p72 = scmp.ne.s32.totalorder %s61, %s64
    %p73 = scmp.eq.s32.totalorder %s16, 1
    %p74 = por %p72, %p73
    %p75 = scmp.ne.s32.totalorder %s64, %s65
    %p76 = scmp.eq.s32.totalorder %s16, 0
    %p77 = por %p75, %p76
    %p78 = scmp.ne.s32.totalorder %s64, %s65
    %p79 = scmp.eq.s32.totalorder %s17, 1
    %p80 = por %p78, %p79
    %p82 = scmp.ne.s32.totalorder %s65, %s81
    %p83 = scmp.eq.s32.totalorder %s17, 0
    %p84 = por %p82, %p83
    %s86 = sadd.s32 %s85, 1
    %p89 = scmp.eq.s32.totalorder %s11, 1
    %p90 = scmp.ne.s32.totalorder %s85, %s87
    %p91 = scmp.eq.s32.totalorder %s11, 0
    %p92 = por %p90, %p91
    %p93 = scmp.ne.s32.totalorder %s85, %s87
    %p94 = scmp.eq.s32.totalorder %s16, 1
    %p95 = por %p93, %p94
    %p96 = scmp.ne.s32.totalorder %s87, %s88
    %p97 = scmp.eq.s32.totalorder %s16, 0
    %p98 = por %p96, %p97
    %p99 = scmp.ne.s32.totalorder %s87, %s88
    %p100 = scmp.eq.s32.totalorder %s17, 1
    %p101 = por %p99, %p100
    %p103 = scmp.ne.s32.totalorder %s88, %s102
    %p104 = scmp.eq.s32.totalorder %s17, 0
    %p105 = por %p103, %p104
    %s107 = sadd.s32 %s106, 1
    %p110 = scmp.eq.s32.totalorder %s11, 1
    %p111 = scmp.ne.s32.totalorder %s106, %s108
    %p112 = scmp.eq.s32.totalorder %s11, 0
    %p113 = por %p111, %p112
    %p114 = scmp.ne.s32.totalorder %s106, %s108
    %p115 = scmp.eq.s32.totalorder %s16, 1
    %p116 = por %p114, %p115
    %p117 = scmp.ne.s32.totalorder %s108, %s109
    %p118 = scmp.eq.s32.totalorder %s16, 0
    %p119 = por %p117, %p118
    %p120 = scmp.ne.s32.totalorder %s108, %s109
    %p121 = scmp.eq.s32.totalorder %s17, 1
    %p122 = por %p120, %p121
    %p124 = scmp.ne.s32.totalorder %s109, %s123
    %p125 = scmp.eq.s32.totalorder %s17, 0
    %p126 = por %p124, %p125
    %s127 = ssub.s32 %s18, %s30
    %s128 = ssub.s32 %s19, %s26
    %s129 = sor.u32 %s127, %s128
    %p130 = scmp.eq.s32.totalorder %s129, 0
    %s132 = sadd.s32 %s131, 1
    %s133 = scalar_select %p130, %s131, %s132
    %p136 = pneg %p130
    %p137 = scmp.eq.s32.totalorder %s11, 1
    %p138 = por %p136, %p137
    %p139 = scmp.ne.s32.totalorder %s131, %s134
    %p140 = scmp.eq.s32.totalorder %s11, 0
    %p141 = por %p139, %p140
    %p142 = scmp.ne.s32.totalorder %s131, %s134
    %p143 = scmp.eq.s32.totalorder %s16, 1
    %p144 = por %p142, %p143
    %p145 = scmp.ne.s32.totalorder %s134, %s135
    %p146 = scmp.eq.s32.totalorder %s16, 0
    %p147 = por %p145, %p146
    %p148 = scmp.ne.s32.totalorder %s134, %s135
    %p149 = scmp.eq.s32.totalorder %s17, 1
    %p150 = por %p148, %p149
    %p152 = scmp.ne.s32.totalorder %s135, %s151
    %p153 = scmp.eq.s32.totalorder %s17, 0
    %p154 = por %p152, %p153
    %s155 = ssub.s32 %s18, %s30
    %s156 = ssub.s32 %s19, %s26
    %s157 = sor.u32 %s155, %s156
    %p158 = scmp.eq.s32.totalorder %s157, 0
    %s160 = sadd.s32 %s159, 1
    %s161 = scalar_select %p158, %s159, %s160
    %p164 = pneg %p158
    %p165 = scmp.eq.s32.totalorder %s11, 1
    %p166 = por %p164, %p165
    %p167 = scmp.ne.s32.totalorder %s159, %s162
    %p168 = scmp.eq.s32.totalorder %s11, 0
    %p169 = por %p167, %p168
    %p170 = scmp.ne.s32.totalorder %s159, %s162
    %p171 = scmp.eq.s32.totalorder %s16, 1
    %p172 = por %p170, %p171
    %p173 = scmp.ne.s32.totalorder %s162, %s163
    %p174 = scmp.eq.s32.totalorder %s16, 0
    %p175 = por %p173, %p174
    %p176 = scmp.ne.s32.totalorder %s162, %s163
    %p177 = scmp.eq.s32.totalorder %s17, 1
    %p178 = por %p176, %p177
    %p180 = scmp.ne.s32.totalorder %s163, %s179
    %p181 = scmp.eq.s32.totalorder %s17, 0
    %p182 = por %p180, %p181
    %p183 = scmp.le.s32.totalorder 1, %s11
    %p184 = scmp.lt.s32.totalorder %s11, 3
    %p185 = pnand %p183, %p184
    %p186 = pneg %p185
    // Predicated region
    $region9: #{_lambda_.3} parent=5 // pred_check
      _
    $region10: #{_lambda_.3} parent=5 // pred_check_branch
      %188 = sbr.rel (%p185) target = $region12
    $region11: #{_lambda_.3} parent=5 // pred_region
      %s189 = ssub.s32 %s11, 1
      // Predicated region
      $region13: #{_lambda_.3} parent=11 // pred_check
        %p190 = pneg %p98
      $region14: #{_lambda_.3} parent=11 // pred_check_branch
        %192 = sbr.rel (%p190) target = $region16
      $region15: #{_lambda_.3} parent=11 // pred_region
        _
      $region16: #{_lambda_.3} parent=11 // pred_fallthru
        _
      // Predicated region
      $region17: #{_lambda_.3} parent=11 // pred_check
        %p193 = pneg %p119
      $region18: #{_lambda_.3} parent=11 // pred_check_branch
        %195 = sbr.rel (%p193) target = $region20
      $region19: #{_lambda_.3} parent=11 // pred_region
        _
      $region20: #{_lambda_.3} parent=11 // pred_fallthru
        _
    $region12: #{_lambda_.3} parent=5 // pred_fallthru
      _
    %p196 = scmp.lt.s32.totalorder %s11, 2
    // Predicated region
    $region21: #{_lambda_.3} parent=5 // pred_check
      %p197 = pneg %p196
    $region22: #{_lambda_.3} parent=5 // pred_check_branch
      %199 = sbr.rel (%p197) target = $region24
    $region23: #{_lambda_.3} parent=5 // pred_region
      // Predicated region
      $region25: #{_lambda_.3} parent=23 // pred_check
        %p200 = pneg %p45
      $region26: #{_lambda_.3} parent=23 // pred_check_branch
        %202 = sbr.rel (%p200) target = $region28
      $region27: #{_lambda_.3} parent=23 // pred_region
        %s203 = smul.u32 32, %s19
        %p204 = scmp.lt.s32.totalorder %s18, 1
        %s205 = scalar_select %p204, %s18, 1
        %p206 = scmp.lt.s32.totalorder %s203, 31
        %s207 = scalar_select %p206, %s203, 31
        %s208 = smul.addr %s205, 32
        %s209 = sadd.s32 %s207, %s208
        %s210 = smul.addr %s209, 4
        %s211 = scalar_lea.vmem %s0, %s210
        %s212 = smul.u32 32, %s19
      $region28: #{_lambda_.3} parent=23 // pred_fallthru
        _
      // Predicated region
      $region29: #{_lambda_.3} parent=23 // pred_check
        %p213 = pneg %p71
      $region30: #{_lambda_.3} parent=23 // pred_check_branch
        %215 = sbr.rel (%p213) target = $region32
      $region31: #{_lambda_.3} parent=23 // pred_region
        %p216 = scmp.lt.s32.totalorder %s18, 1
        %s217 = scalar_select %p216, %s18, 1
        %s218 = scalar_lea.vmem %s1, %s217
      $region32: #{_lambda_.3} parent=23 // pred_fallthru
        _
      // Predicated region
      $region33: #{_lambda_.3} parent=23 // pred_check
        %p219 = pneg %p141
      $region34: #{_lambda_.3} parent=23 // pred_check_branch
        %221 = sbr.rel (%p219) target = $region36
      $region35: #{_lambda_.3} parent=23 // pred_region
        %s222 = smul.u32 32, %s19
        %p223 = scmp.lt.s32.totalorder %s18, 1
        %s224 = scalar_select %p223, %s18, 1
        %p225 = scmp.lt.s32.totalorder %s222, 31
        %s226 = scalar_select %p225, %s222, 31
        %s227 = smul.addr %s224, 32
        %s228 = sadd.s32 %s226, %s227
        %s229 = smul.addr %s228, 4
        %s230 = scalar_lea.vmem %s4, %s229
        %s231 = smul.u32 32, %s19
      $region36: #{_lambda_.3} parent=23 // pred_fallthru
        _
    $region24: #{_lambda_.3} parent=5 // pred_fallthru
      _
    %p232 = scmp.le.s32.totalorder 1, %s11
    %p233 = scmp.lt.s32.totalorder %s11, 3
    %p234 = pnand %p232, %p233
    %p235 = pneg %p234
    // Predicated region
    $region37: #{_lambda_.3} parent=5 // pred_check
      _
    $region38: #{_lambda_.3} parent=5 // pred_check_branch
      %237 = sbr.rel (%p234) target = $region40
    $region39: #{_lambda_.3} parent=5 // pred_region
      %s238 = ssub.s32 %s11, 1
      %s239 = smul.u32 32, %s21
      %p240 = scmp.lt.s32.totalorder %s20, 1
      %s241 = scalar_select %p240, %s20, 1
      %p242 = scmp.lt.s32.totalorder %s239, 31
      %s243 = scalar_select %p242, %s239, 31
      %s244 = smul.addr %s241, 32
      %s245 = sadd.s32 %s243, %s244
      %s246 = smul.addr %s245, 4
      %s247 = scalar_lea.vmem %s0, %s246
      %p248 = pneg %p51
      %p249 = pneg %p48
      %p250 = scmp.lt.s32.totalorder %s20, 1
      %s251 = scalar_select %p250, %s20, 1
      %s252 = scalar_lea.vmem %s1, %s251
      %p253 = pneg %p77
      %p254 = pneg %p74
      %p255 = pneg %p98
      %p256 = pneg %p95
      %p257 = pneg %p119
      %p258 = pneg %p116
      %s259 = smul.u32 32, %s21
      %p260 = scmp.lt.s32.totalorder %s20, 1
      %s261 = scalar_select %p260, %s20, 1
      %p262 = scmp.lt.s32.totalorder %s259, 31
      %s263 = scalar_select %p262, %s259, 31
      %s264 = smul.addr %s261, 32
      %s265 = sadd.s32 %s263, %s264
      %s266 = smul.addr %s265, 4
      %s267 = scalar_lea.vmem %s4, %s266
      %p268 = pneg %p147
      %p269 = pneg %p144
      %p270 = pneg %p175
      %p271 = pneg %p172
      %s272 = smul.u32 32, %s21
      %p273 = scmp.lt.s32.totalorder %s20, 1
      %s274 = scalar_select %p273, %s20, 1
      %p275 = scmp.lt.s32.totalorder %s272, 31
      %s276 = scalar_select %p275, %s272, 31
      %s277 = smul.addr %s274, 32
      %s278 = sadd.s32 %s276, %s277
      %s279 = smul.addr %s278, 4
      %s280 = scalar_lea.vmem %s5, %s279
      %s281 = smul.u32 32, %s21
      %p282 = scmp.lt.s32.totalorder %s20, 1
      %s283 = scalar_select %p282, %s20, 1
      %p284 = scmp.lt.s32.totalorder %s281, 31
      %s285 = scalar_select %p284, %s281, 31
      %s286 = smul.addr %s283, 32
      %s287 = sadd.s32 %s285, %s286
      %s288 = smul.addr %s287, 4
      %s289 = scalar_lea.vmem %s0, %s288
      %s290 = smul.u32 32, %s21
      %p291 = scmp.lt.s32.totalorder %s20, 1
      %s292 = scalar_select %p291, %s20, 1
      %s293 = scalar_lea.vmem %s1, %s292
      %s294 = smul.u32 32, %s21
      %p295 = scmp.lt.s32.totalorder %s20, 1
      %s296 = scalar_select %p295, %s20, 1
      %p297 = scmp.lt.s32.totalorder %s294, 31
      %s298 = scalar_select %p297, %s294, 31
      %s299 = smul.addr %s296, 32
      %s300 = sadd.s32 %s298, %s299
      %s301 = smul.addr %s300, 4
      %s302 = scalar_lea.vmem %s4, %s301
      %s303 = smul.u32 32, %s21
      %s304 = smul.u32 32, %s21
      %p305 = scmp.lt.s32.totalorder %s20, 1
      %s306 = scalar_select %p305, %s20, 1
      %p307 = scmp.lt.s32.totalorder %s304, 31
      %s308 = scalar_select %p307, %s304, 31
      %s309 = smul.addr %s306, 32
      %s310 = sadd.s32 %s308, %s309
      %s311 = smul.addr %s310, 4
      %s312 = scalar_lea.vmem %s5, %s311
      %s313 = smul.u32 32, %s21
      %v315 = vld [vmem:[%s289] sm:$0xf]
      %v316 = vld [vmem:[%s289 + $0x4] sm:$0xf]
      %v317 = vld [vmem:[%s289 + $0x8] sm:$0xf]
      %v318 = vld [vmem:[%s289 + $0xc] sm:$0xf]
      %v319 = vld [vmem:[%s289 + $0x10] sm:$0xf]
      %v320 = vld [vmem:[%s289 + $0x14] sm:$0xf]
      %v321 = vld [vmem:[%s289 + $0x18] sm:$0xf]
      %v322 = vld [vmem:[%s289 + $0x1c] sm:$0xf]
      %v323 = vld [vmem:[%s289 + $0x20] sm:$0xf]
      %v324 = vld [vmem:[%s289 + $0x24] sm:$0xf]
      %v325 = vld [vmem:[%s289 + $0x28] sm:$0xf]
      %v326 = vld [vmem:[%s289 + $0x2c] sm:$0xf]
      %v327 = vld [vmem:[%s289 + $0x30] sm:$0xf]
      %v328 = vld [vmem:[%s289 + $0x34] sm:$0xf]
      %v329 = vld [vmem:[%s289 + $0x38] sm:$0xf]
      %v330 = vld [vmem:[%s289 + $0x3c] sm:$0xf]
      %v331 = vld [vmem:[%s289 + $0x40] sm:$0xf]
      %v332 = vld [vmem:[%s289 + $0x44] sm:$0xf]
      %v333 = vld [vmem:[%s289 + $0x48] sm:$0xf]
      %v334 = vld [vmem:[%s289 + $0x4c] sm:$0xf]
      %v335 = vld [vmem:[%s289 + $0x50] sm:$0xf]
      %v336 = vld [vmem:[%s289 + $0x54] sm:$0xf]
      %v337 = vld [vmem:[%s289 + $0x58] sm:$0xf]
      %v338 = vld [vmem:[%s289 + $0x5c] sm:$0xf]
      %v339 = vld [vmem:[%s289 + $0x60] sm:$0xf]
      %v340 = vld [vmem:[%s289 + $0x64] sm:$0xf]
      %v341 = vld [vmem:[%s289 + $0x68] sm:$0xf]
      %v342 = vld [vmem:[%s289 + $0x6c] sm:$0xf]
      %v343 = vld [vmem:[%s289 + $0x70] sm:$0xf]
      %v344 = vld [vmem:[%s289 + $0x74] sm:$0xf]
      %v345 = vld [vmem:[%s289 + $0x78] sm:$0xf]
      %v346 = vld [vmem:[%s289 + $0x7c] sm:$0xf]
      %v347 = vunpack.c.l.bf16 %v315
      %v348 = vunpack.c.l.bf16 %v316
      %v349 = vunpack.c.l.bf16 %v317
      %v350 = vunpack.c.l.bf16 %v318
      %v351 = vunpack.c.l.bf16 %v319
      %v352 = vunpack.c.l.bf16 %v320
      %v353 = vunpack.c.l.bf16 %v321
      %v354 = vunpack.c.l.bf16 %v322
      %v355 = vunpack.c.l.bf16 %v323
      %v356 = vunpack.c.l.bf16 %v324
      %v357 = vunpack.c.l.bf16 %v325
      %v358 = vunpack.c.l.bf16 %v326
      %v359 = vunpack.c.l.bf16 %v327
      %v360 = vunpack.c.l.bf16 %v328
      %v361 = vunpack.c.l.bf16 %v329
      %v362 = vunpack.c.l.bf16 %v330
      %v363 = vunpack.c.l.bf16 %v331
      %v364 = vunpack.c.l.bf16 %v332
      %v365 = vunpack.c.l.bf16 %v333
      %v366 = vunpack.c.l.bf16 %v334
      %v367 = vunpack.c.l.bf16 %v335
      %v368 = vunpack.c.l.bf16 %v336
      %v369 = vunpack.c.l.bf16 %v337
      %v370 = vunpack.c.l.bf16 %v338
      %v371 = vunpack.c.l.bf16 %v339
      %v372 = vunpack.c.l.bf16 %v340
      %v373 = vunpack.c.l.bf16 %v341
      %v374 = vunpack.c.l.bf16 %v342
      %v375 = vunpack.c.l.bf16 %v343
      %v376 = vunpack.c.l.bf16 %v344
      %v377 = vunpack.c.l.bf16 %v345
      %v378 = vunpack.c.l.bf16 %v346
      %v379 = vld [vmem:[%s293] sm:$0x1]
      %v381 = vlaneseq
      %v382 = vshrl.u32 %v381, 7
      %v383 = vsub.s32 0, %v382
      %v384 = vrot.slane %v379, %v383
      %v386 = vmul.f32 %v347, %v384
      %v387 = vmul.f32 %v348, %v384
      %v388 = vmul.f32 %v349, %v384
      %v389 = vmul.f32 %v350, %v384
      %v390 = vmul.f32 %v351, %v384
      %v391 = vmul.f32 %v352, %v384
      %v392 = vmul.f32 %v353, %v384
      %v393 = vmul.f32 %v354, %v384
      %v394 = vmul.f32 %v355, %v384
      %v395 = vmul.f32 %v356, %v384
      %v396 = vmul.f32 %v357, %v384
      %v397 = vmul.f32 %v358, %v384
      %v398 = vmul.f32 %v359, %v384
      %v399 = vmul.f32 %v360, %v384
      %v400 = vmul.f32 %v361, %v384
      %v401 = vmul.f32 %v362, %v384
      %v402 = vmul.f32 %v363, %v384
      %v403 = vmul.f32 %v364, %v384
      %v404 = vmul.f32 %v365, %v384
      %v405 = vmul.f32 %v366, %v384
      %v406 = vmul.f32 %v367, %v384
      %v407 = vmul.f32 %v368, %v384
      %v408 = vmul.f32 %v369, %v384
      %v409 = vmul.f32 %v370, %v384
      %v410 = vmul.f32 %v371, %v384
      %v411 = vmul.f32 %v372, %v384
      %v412 = vmul.f32 %v373, %v384
      %v413 = vmul.f32 %v374, %v384
      %v414 = vmul.f32 %v375, %v384
      %v415 = vmul.f32 %v376, %v384
      %v416 = vmul.f32 %v377, %v384
      %v417 = vmul.f32 %v378, %v384
      %v418 = vpack.c.bf16 %v387, %v386
      %v419 = vpack.c.bf16 %v389, %v388
      %v420 = vpack.c.bf16 %v391, %v390
      %v421 = vpack.c.bf16 %v393, %v392
      %v422 = vpack.c.bf16 %v395, %v394
      %v423 = vpack.c.bf16 %v397, %v396
      %v424 = vpack.c.bf16 %v399, %v398
      %v425 = vpack.c.bf16 %v401, %v400
      %v426 = vpack.c.bf16 %v403, %v402
      %v427 = vpack.c.bf16 %v405, %v404
      %v428 = vpack.c.bf16 %v407, %v406
      %v429 = vpack.c.bf16 %v409, %v408
      %v430 = vpack.c.bf16 %v411, %v410
      %v431 = vpack.c.bf16 %v413, %v412
      %v432 = vpack.c.bf16 %v415, %v414
      %v433 = vpack.c.bf16 %v417, %v416
      %v434 = vld [vmem:[%s2] sm:$0xf]
      %v435 = vld [vmem:[%s2 + $0x4] sm:$0xf]
      %v436 = vld [vmem:[%s2 + $0x8] sm:$0xf]
      %v437 = vld [vmem:[%s2 + $0xc] sm:$0xf]
      %v438 = vld [vmem:[%s2 + $0x10] sm:$0xf]
      %v439 = vld [vmem:[%s2 + $0x14] sm:$0xf]
      %v440 = vld [vmem:[%s2 + $0x18] sm:$0xf]
      %v441 = vld [vmem:[%s2 + $0x1c] sm:$0xf]
      %v442 = vld [vmem:[%s2 + $0x20] sm:$0xf]
      %v443 = vld [vmem:[%s2 + $0x24] sm:$0xf]
      %v444 = vld [vmem:[%s2 + $0x28] sm:$0xf]
      %v445 = vld [vmem:[%s2 + $0x2c] sm:$0xf]
      %v446 = vld [vmem:[%s2 + $0x30] sm:$0xf]
      %v447 = vld [vmem:[%s2 + $0x34] sm:$0xf]
      %v448 = vld [vmem:[%s2 + $0x38] sm:$0xf]
      %v449 = vld [vmem:[%s2 + $0x3c] sm:$0xf]
      %v450 = vld [vmem:[%s3] sm:$0x1]
      %v452 = vlaneseq
      %v453 = vshrl.u32 %v452, 7
      %v454 = vsub.s32 0, %v453
      %v455 = vrot.slane %v450, %v454
      %v473 = vunpack.c.l.b16 %v434
      %v474 = vunpack.c.l.b16 %v435
      %v475 = vunpack.c.l.b16 %v436
      %v476 = vunpack.c.l.b16 %v437
      %v477 = vunpack.c.l.b16 %v438
      %v478 = vunpack.c.l.b16 %v439
      %v479 = vunpack.c.l.b16 %v440
      %v480 = vunpack.c.l.b16 %v441
      %v481 = vunpack.c.l.b16 %v442
      %v482 = vunpack.c.l.b16 %v443
      %v483 = vunpack.c.l.b16 %v444
      %v484 = vunpack.c.l.b16 %v445
      %v485 = vunpack.c.l.b16 %v446
      %v486 = vunpack.c.l.b16 %v447
      %v487 = vunpack.c.l.b16 %v448
      %v488 = vunpack.c.l.b16 %v449
      %v489 = vpack.c.b16 %v474, %v473
      %v490 = vpack.c.b16 %v476, %v475
      %v491 = vpack.c.b16 %v478, %v477
      %v492 = vpack.c.b16 %v480, %v479
      %v493 = vpack.c.b16 %v482, %v481
      %v494 = vpack.c.b16 %v484, %v483
      %v495 = vpack.c.b16 %v486, %v485
      %v496 = vpack.c.b16 %v488, %v487
      %505 = vmatprep.subr.bf16.mxu0 0
      %506 = vmatpush1.bf16.msra.mxu0 %v489
      %507 = vmatprep.subr.bf16.mxu0 0
      %508 = vmatpush1.bf16.msra.mxu0 %v490
      %509 = vmatprep.subr.bf16.mxu0 0
      %510 = vmatpush1.bf16.msra.mxu0 %v491
      %511 = vmatprep.subr.bf16.mxu0 0
      %512 = vmatpush1.bf16.msra.mxu0 %v492
      %513 = vmatprep.subr.bf16.mxu0 0
      %514 = vmatpush1.bf16.msra.mxu0 %v493
      %515 = vmatprep.subr.bf16.mxu0 0
      %516 = vmatpush1.bf16.msra.mxu0 %v494
      %517 = vmatprep.subr.bf16.mxu0 0
      %518 = vmatpush1.bf16.msra.mxu0 %v495
      %519 = vmatprep.subr.bf16.mxu0 0
      %520 = vmatpush1.bf16.msra.mxu0 %v496
      %521 = vmatprep.subr.bf16.mxu0 0
      %522 = vmatpush1.bf16.msra.mxu0 0
      %523 = vmatprep.subr.bf16.mxu0 0
      %524 = vmatpush1.bf16.msra.mxu0 0
      %525 = vmatprep.subr.bf16.mxu0 0
      %526 = vmatpush1.bf16.msra.mxu0 0
      %527 = vmatprep.subr.bf16.mxu0 0
      %528 = vmatpush1.bf16.msra.mxu0 0
      %529 = vmatprep.subr.bf16.mxu0 0
      %530 = vmatpush1.bf16.msra.mxu0 0
      %531 = vmatprep.subr.bf16.mxu0 0
      %532 = vmatpush1.bf16.msra.mxu0 0
      %533 = vmatprep.subr.bf16.mxu0 0
      %534 = vmatpush1.bf16.msra.mxu0 0
      %535 = vmatprep.subr.bf16.mxu0 0
      %536 = vmatpush1.bf16.msra.mxu0 0
      %537 = vmatprep.mubr.bf16.mxu0 0
      %538 = vmatmul.mubr.bf16.gmra.mrb[0].mxu0 %v418
      %v539 = vpop.f32.mrb[0].mxu0
      %v540 = vadd.f32 %v455, %v539
      %v541 = vpop.f32.mrb[0].mxu0
      %v542 = vpop.f32.mrb[0].mxu0
      %v543 = vadd.f32 %v455, %v542
      %v544 = vpop.f32.mrb[0].mxu0
      %545 = vmatprep.mubr.bf16.mxu0 0
      %546 = vmatmul.mubr.bf16.gmra.mrb[0].mxu0 %v419
      %v547 = vpop.f32.mrb[0].mxu0
      %v548 = vadd.f32 %v455, %v547
      %v549 = vpop.f32.mrb[0].mxu0
      %v550 = vpop.f32.mrb[0].mxu0
      %v551 = vadd.f32 %v455, %v550
      %v552 = vpop.f32.mrb[0].mxu0
      %553 = vmatprep.mubr.bf16.mxu0 0
      %554 = vmatmul.mubr.bf16.gmra.mrb[0].mxu0 %v420
      %v555 = vpop.f32.mrb[0].mxu0
      %v556 = vadd.f32 %v455, %v555
      %v557 = vpop.f32.mrb[0].mxu0
      %v558 = vpop.f32.mrb[0].mxu0
      %v559 = vadd.f32 %v455, %v558
      %v560 = vpop.f32.mrb[0].mxu0
      %561 = vmatprep.mubr.bf16.mxu0 0
      %562 = vmatmul.mubr.bf16.gmra.mrb[0].mxu0 %v421
      %v563 = vpop.f32.mrb[0].mxu0
      %v564 = vadd.f32 %v455, %v563
      %v565 = vpop.f32.mrb[0].mxu0
      %v566 = vpop.f32.mrb[0].mxu0
      %v567 = vadd.f32 %v455, %v566
      %v568 = vpop.f32.mrb[0].mxu0
      %569 = vmatprep.mubr.bf16.mxu0 0
      %570 = vmatmul.mubr.bf16.gmra.mrb[0].mxu0 %v422
      %v571 = vpop.f32.mrb[0].mxu0
      %v572 = vadd.f32 %v455, %v571
      %v573 = vpop.f32.mrb[0].mxu0
      %v574 = vpop.f32.mrb[0].mxu0
      %v575 = vadd.f32 %v455, %v574
      %v576 = vpop.f32.mrb[0].mxu0
      %577 = vmatprep.mubr.bf16.mxu0 0
      %578 = vmatmul.mubr.bf16.gmra.mrb[0].mxu0 %v423
      %v579 = vpop.f32.mrb[0].mxu0
      %v580 = vadd.f32 %v455, %v579
      %v581 = vpop.f32.mrb[0].mxu0
      %v582 = vpop.f32.mrb[0].mxu0
      %v583 = vadd.f32 %v455, %v582
      %v584 = vpop.f32.mrb[0].mxu0
      %585 = vmatprep.mubr.bf16.mxu0 0
      %586 = vmatmul.mubr.bf16.gmra.mrb[0].mxu0 %v424
      %v587 = vpop.f32.mrb[0].mxu0
      %v588 = vadd.f32 %v455, %v587
      %v589 = vpop.f32.mrb[0].mxu0
      %v590 = vpop.f32.mrb[0].mxu0
      %v591 = vadd.f32 %v455, %v590
      %v592 = vpop.f32.mrb[0].mxu0
      %593 = vmatprep.mubr.bf16.mxu0 0
      %594 = vmatmul.mubr.bf16.gmra.mrb[0].mxu0 %v425
      %v595 = vpop.f32.mrb[0].mxu0
      %v596 = vadd.f32 %v455, %v595
      %v597 = vpop.f32.mrb[0].mxu0
      %v598 = vpop.f32.mrb[0].mxu0
      %v599 = vadd.f32 %v455, %v598
      %v600 = vpop.f32.mrb[0].mxu0
      %601 = vmatprep.mubr.bf16.mxu0 0
      %602 = vmatmul.mubr.bf16.gmra.mrb[0].mxu0 %v426
      %v603 = vpop.f32.mrb[0].mxu0
      %v604 = vadd.f32 %v455, %v603
      %v605 = vpop.f32.mrb[0].mxu0
      %v606 = vpop.f32.mrb[0].mxu0
      %v607 = vadd.f32 %v455, %v606
      %v608 = vpop.f32.mrb[0].mxu0
      %609 = vmatprep.mubr.bf16.mxu0 0
      %610 = vmatmul.mubr.bf16.gmra.mrb[0].mxu0 %v427
      %v611 = vpop.f32.mrb[0].mxu0
      %v612 = vadd.f32 %v455, %v611
      %v613 = vpop.f32.mrb[0].mxu0
      %v614 = vpop.f32.mrb[0].mxu0
      %v615 = vadd.f32 %v455, %v614
      %v616 = vpop.f32.mrb[0].mxu0
      %617 = vmatprep.mubr.bf16.mxu0 0
      %618 = vmatmul.mubr.bf16.gmra.mrb[0].mxu0 %v428
      %v619 = vpop.f32.mrb[0].mxu0
      %v620 = vadd.f32 %v455, %v619
      %v621 = vpop.f32.mrb[0].mxu0
      %v622 = vpop.f32.mrb[0].mxu0
      %v623 = vadd.f32 %v455, %v622
      %v624 = vpop.f32.mrb[0].mxu0
      %625 = vmatprep.mubr.bf16.mxu0 0
      %626 = vmatmul.mubr.bf16.gmra.mrb[0].mxu0 %v429
      %v627 = vpop.f32.mrb[0].mxu0
      %v628 = vadd.f32 %v455, %v627
      %v629 = vpop.f32.mrb[0].mxu0
      %v630 = vpop.f32.mrb[0].mxu0
      %v631 = vadd.f32 %v455, %v630
      %v632 = vpop.f32.mrb[0].mxu0
      %633 = vmatprep.mubr.bf16.mxu0 0
      %634 = vmatmul.mubr.bf16.gmra.mrb[0].mxu0 %v430
      %v635 = vpop.f32.mrb[0].mxu0
      %v636 = vadd.f32 %v455, %v635
      %v637 = vpop.f32.mrb[0].mxu0
      %v638 = vpop.f32.mrb[0].mxu0
      %v639 = vadd.f32 %v455, %v638
      %v640 = vpop.f32.mrb[0].mxu0
      %641 = vmatprep.mubr.bf16.mxu0 0
      %642 = vmatmul.mubr.bf16.gmra.mrb[0].mxu0 %v431
      %v643 = vpop.f32.mrb[0].mxu0
      %v644 = vadd.f32 %v455, %v643
      %v645 = vpop.f32.mrb[0].mxu0
      %v646 = vpop.f32.mrb[0].mxu0
      %v647 = vadd.f32 %v455, %v646
      %v648 = vpop.f32.mrb[0].mxu0
      %649 = vmatprep.mubr.bf16.mxu0 0
      %650 = vmatmul.mubr.bf16.gmra.mrb[0].mxu0 %v432
      %v651 = vpop.f32.mrb[0].mxu0
      %v652 = vadd.f32 %v455, %v651
      %v653 = vpop.f32.mrb[0].mxu0
      %v654 = vpop.f32.mrb[0].mxu0
      %v655 = vadd.f32 %v455, %v654
      %v656 = vpop.f32.mrb[0].mxu0
      %657 = vmatprep.mubr.bf16.mxu0 0
      %658 = vmatmul.mubr.bf16.gmra.mrb[0].mxu0 %v433
      %v659 = vpop.f32.mrb[0].mxu0
      %v660 = vadd.f32 %v455, %v659
      %v661 = vpop.f32.mrb[0].mxu0
      %v662 = vpop.f32.mrb[0].mxu0
      %v663 = vadd.f32 %v455, %v662
      %v664 = vpop.f32.mrb[0].mxu0
      %665 = vdwg.mxu0
      %v666 = vadd.f32 %v540, 3.0
      %v667 = vadd.f32 %v543, 3.0
      %v668 = vadd.f32 %v548, 3.0
      %v669 = vadd.f32 %v551, 3.0
      %v670 = vadd.f32 %v556, 3.0
      %v671 = vadd.f32 %v559, 3.0
      %v672 = vadd.f32 %v564, 3.0
      %v673 = vadd.f32 %v567, 3.0
      %v674 = vadd.f32 %v572, 3.0
      %v675 = vadd.f32 %v575, 3.0
      %v676 = vadd.f32 %v580, 3.0
      %v677 = vadd.f32 %v583, 3.0
      %v678 = vadd.f32 %v588, 3.0
      %v679 = vadd.f32 %v591, 3.0
      %v680 = vadd.f32 %v596, 3.0
      %v681 = vadd.f32 %v599, 3.0
      %v682 = vadd.f32 %v604, 3.0
      %v683 = vadd.f32 %v607, 3.0
      %v684 = vadd.f32 %v612, 3.0
      %v685 = vadd.f32 %v615, 3.0
      %v686 = vadd.f32 %v620, 3.0
      %v687 = vadd.f32 %v623, 3.0
      %v688 = vadd.f32 %v628, 3.0
      %v689 = vadd.f32 %v631, 3.0
      %v690 = vadd.f32 %v636, 3.0
      %v691 = vadd.f32 %v639, 3.0
      %v692 = vadd.f32 %v644, 3.0
      %v693 = vadd.f32 %v647, 3.0
      %v694 = vadd.f32 %v652, 3.0
      %v695 = vadd.f32 %v655, 3.0
      %v696 = vadd.f32 %v660, 3.0
      %v697 = vadd.f32 %v663, 3.0
      %v698 = vmax.f32 %v666, 0.0
      %v699 = vmax.f32 %v667, 0.0
      %v700 = vmax.f32 %v668, 0.0
      %v701 = vmax.f32 %v669, 0.0
      %v702 = vmax.f32 %v670, 0.0
      %v703 = vmax.f32 %v671, 0.0
      %v704 = vmax.f32 %v672, 0.0
      %v705 = vmax.f32 %v673, 0.0
      %v706 = vmax.f32 %v674, 0.0
      %v707 = vmax.f32 %v675, 0.0
      %v708 = vmax.f32 %v676, 0.0
      %v709 = vmax.f32 %v677, 0.0
      %v710 = vmax.f32 %v678, 0.0
      %v711 = vmax.f32 %v679, 0.0
      %v712 = vmax.f32 %v680, 0.0
      %v713 = vmax.f32 %v681, 0.0
      %v714 = vmax.f32 %v682, 0.0
      %v715 = vmax.f32 %v683, 0.0
      %v716 = vmax.f32 %v684, 0.0
      %v717 = vmax.f32 %v685, 0.0
      %v718 = vmax.f32 %v686, 0.0
      %v719 = vmax.f32 %v687, 0.0
      %v720 = vmax.f32 %v688, 0.0
      %v721 = vmax.f32 %v689, 0.0
      %v722 = vmax.f32 %v690, 0.0
      %v723 = vmax.f32 %v691, 0.0
      %v724 = vmax.f32 %v692, 0.0
      %v725 = vmax.f32 %v693, 0.0
      %v726 = vmax.f32 %v694, 0.0
      %v727 = vmax.f32 %v695, 0.0
      %v728 = vmax.f32 %v696, 0.0
      %v729 = vmax.f32 %v697, 0.0
      %v730 = vmin.f32 %v698, 6.0
      %v731 = vmin.f32 %v699, 6.0
      %v732 = vmin.f32 %v700, 6.0
      %v733 = vmin.f32 %v701, 6.0
      %v734 = vmin.f32 %v702, 6.0
      %v735 = vmin.f32 %v703, 6.0
      %v736 = vmin.f32 %v704, 6.0
      %v737 = vmin.f32 %v705, 6.0
      %v738 = vmin.f32 %v706, 6.0
      %v739 = vmin.f32 %v707, 6.0
      %v740 = vmin.f32 %v708, 6.0
      %v741 = vmin.f32 %v709, 6.0
      %v742 = vmin.f32 %v710, 6.0
      %v743 = vmin.f32 %v711, 6.0
      %v744 = vmin.f32 %v712, 6.0
      %v745 = vmin.f32 %v713, 6.0
      %v746 = vmin.f32 %v714, 6.0
      %v747 = vmin.f32 %v715, 6.0
      %v748 = vmin.f32 %v716, 6.0
      %v749 = vmin.f32 %v717, 6.0
      %v750 = vmin.f32 %v718, 6.0
      %v751 = vmin.f32 %v719, 6.0
      %v752 = vmin.f32 %v720, 6.0
      %v753 = vmin.f32 %v721, 6.0
      %v754 = vmin.f32 %v722, 6.0
      %v755 = vmin.f32 %v723, 6.0
      %v756 = vmin.f32 %v724, 6.0
      %v757 = vmin.f32 %v725, 6.0
      %v758 = vmin.f32 %v726, 6.0
      %v759 = vmin.f32 %v727, 6.0
      %v760 = vmin.f32 %v728, 6.0
      %v761 = vmin.f32 %v729, 6.0
      %v762 = vmul.f32 %v730, 0.16666667
      %v763 = vmul.f32 %v731, 0.16666667
      %v764 = vmul.f32 %v732, 0.16666667
      %v765 = vmul.f32 %v733, 0.16666667
      %v766 = vmul.f32 %v734, 0.16666667
      %v767 = vmul.f32 %v735, 0.16666667
      %v768 = vmul.f32 %v736, 0.16666667
      %v769 = vmul.f32 %v737, 0.16666667
      %v770 = vmul.f32 %v738, 0.16666667
      %v771 = vmul.f32 %v739, 0.16666667
      %v772 = vmul.f32 %v740, 0.16666667
      %v773 = vmul.f32 %v741, 0.16666667
      %v774 = vmul.f32 %v742, 0.16666667
      %v775 = vmul.f32 %v743, 0.16666667
      %v776 = vmul.f32 %v744, 0.16666667
      %v777 = vmul.f32 %v745, 0.16666667
      %v778 = vmul.f32 %v746, 0.16666667
      %v779 = vmul.f32 %v747, 0.16666667
      %v780 = vmul.f32 %v748, 0.16666667
      %v781 = vmul.f32 %v749, 0.16666667
      %v782 = vmul.f32 %v750, 0.16666667
      %v783 = vmul.f32 %v751, 0.16666667
      %v784 = vmul.f32 %v752, 0.16666667
      %v785 = vmul.f32 %v753, 0.16666667
      %v786 = vmul.f32 %v754, 0.16666667
      %v787 = vmul.f32 %v755, 0.16666667
      %v788 = vmul.f32 %v756, 0.16666667
      %v789 = vmul.f32 %v757, 0.16666667
      %v790 = vmul.f32 %v758, 0.16666667
      %v791 = vmul.f32 %v759, 0.16666667
      %v792 = vmul.f32 %v760, 0.16666667
      %v793 = vmul.f32 %v761, 0.16666667
      %v794 = vmul.f32 %v762, %v540
      %v795 = vmul.f32 %v763, %v543
      %v796 = vmul.f32 %v764, %v548
      %v797 = vmul.f32 %v765, %v551
      %v798 = vmul.f32 %v766, %v556
      %v799 = vmul.f32 %v767, %v559
      %v800 = vmul.f32 %v768, %v564
      %v801 = vmul.f32 %v769, %v567
      %v802 = vmul.f32 %v770, %v572
      %v803 = vmul.f32 %v771, %v575
      %v804 = vmul.f32 %v772, %v580
      %v805 = vmul.f32 %v773, %v583
      %v806 = vmul.f32 %v774, %v588
      %v807 = vmul.f32 %v775, %v591
      %v808 = vmul.f32 %v776, %v596
      %v809 = vmul.f32 %v777, %v599
      %v810 = vmul.f32 %v778, %v604
      %v811 = vmul.f32 %v779, %v607
      %v812 = vmul.f32 %v780, %v612
      %v813 = vmul.f32 %v781, %v615
      %v814 = vmul.f32 %v782, %v620
      %v815 = vmul.f32 %v783, %v623
      %v816 = vmul.f32 %v784, %v628
      %v817 = vmul.f32 %v785, %v631
      %v818 = vmul.f32 %v786, %v636
      %v819 = vmul.f32 %v787, %v639
      %v820 = vmul.f32 %v788, %v644
      %v821 = vmul.f32 %v789, %v647
      %v822 = vmul.f32 %v790, %v652
      %v823 = vmul.f32 %v791, %v655
      %v824 = vmul.f32 %v792, %v660
      %v825 = vmul.f32 %v793, %v663
      %v826 = vld [vmem:[%s302] sm:$0xf]
      %v827 = vld [vmem:[%s302 + $0x4] sm:$0xf]
      %v828 = vld [vmem:[%s302 + $0x8] sm:$0xf]
      %v829 = vld [vmem:[%s302 + $0xc] sm:$0xf]
      %v830 = vld [vmem:[%s302 + $0x10] sm:$0xf]
      %v831 = vld [vmem:[%s302 + $0x14] sm:$0xf]
      %v832 = vld [vmem:[%s302 + $0x18] sm:$0xf]
      %v833 = vld [vmem:[%s302 + $0x1c] sm:$0xf]
      %v834 = vld [vmem:[%s302 + $0x20] sm:$0xf]
      %v835 = vld [vmem:[%s302 + $0x24] sm:$0xf]
      %v836 = vld [vmem:[%s302 + $0x28] sm:$0xf]
      %v837 = vld [vmem:[%s302 + $0x2c] sm:$0xf]
      %v838 = vld [vmem:[%s302 + $0x30] sm:$0xf]
      %v839 = vld [vmem:[%s302 + $0x34] sm:$0xf]
      %v840 = vld [vmem:[%s302 + $0x38] sm:$0xf]
      %v841 = vld [vmem:[%s302 + $0x3c] sm:$0xf]
      %v842 = vld [vmem:[%s302 + $0x40] sm:$0xf]
      %v843 = vld [vmem:[%s302 + $0x44] sm:$0xf]
      %v844 = vld [vmem:[%s302 + $0x48] sm:$0xf]
      %v845 = vld [vmem:[%s302 + $0x4c] sm:$0xf]
      %v846 = vld [vmem:[%s302 + $0x50] sm:$0xf]
      %v847 = vld [vmem:[%s302 + $0x54] sm:$0xf]
      %v848 = vld [vmem:[%s302 + $0x58] sm:$0xf]
      %v849 = vld [vmem:[%s302 + $0x5c] sm:$0xf]
      %v850 = vld [vmem:[%s302 + $0x60] sm:$0xf]
      %v851 = vld [vmem:[%s302 + $0x64] sm:$0xf]
      %v852 = vld [vmem:[%s302 + $0x68] sm:$0xf]
      %v853 = vld [vmem:[%s302 + $0x6c] sm:$0xf]
      %v854 = vld [vmem:[%s302 + $0x70] sm:$0xf]
      %v855 = vld [vmem:[%s302 + $0x74] sm:$0xf]
      %v856 = vld [vmem:[%s302 + $0x78] sm:$0xf]
      %v857 = vld [vmem:[%s302 + $0x7c] sm:$0xf]
      %v858 = vunpack.c.l.bf16 %v826
      %v859 = vunpack.c.l.bf16 %v827
      %v860 = vunpack.c.l.bf16 %v828
      %v861 = vunpack.c.l.bf16 %v829
      %v862 = vunpack.c.l.bf16 %v830
      %v863 = vunpack.c.l.bf16 %v831
      %v864 = vunpack.c.l.bf16 %v832
      %v865 = vunpack.c.l.bf16 %v833
      %v866 = vunpack.c.l.bf16 %v834
      %v867 = vunpack.c.l.bf16 %v835
      %v868 = vunpack.c.l.bf16 %v836
      %v869 = vunpack.c.l.bf16 %v837
      %v870 = vunpack.c.l.bf16 %v838
      %v871 = vunpack.c.l.bf16 %v839
      %v872 = vunpack.c.l.bf16 %v840
      %v873 = vunpack.c.l.bf16 %v841
      %v874 = vunpack.c.l.bf16 %v842
      %v875 = vunpack.c.l.bf16 %v843
      %v876 = vunpack.c.l.bf16 %v844
      %v877 = vunpack.c.l.bf16 %v845
      %v878 = vunpack.c.l.bf16 %v846
      %v879 = vunpack.c.l.bf16 %v847
      %v880 = vunpack.c.l.bf16 %v848
      %v881 = vunpack.c.l.bf16 %v849
      %v882 = vunpack.c.l.bf16 %v850
      %v883 = vunpack.c.l.bf16 %v851
      %v884 = vunpack.c.l.bf16 %v852
      %v885 = vunpack.c.l.bf16 %v853
      %v886 = vunpack.c.l.bf16 %v854
      %v887 = vunpack.c.l.bf16 %v855
      %v888 = vunpack.c.l.bf16 %v856
      %v889 = vunpack.c.l.bf16 %v857
      %v890 = vadd.f32 %v794, %v858
      %v891 = vadd.f32 %v795, %v859
      %v892 = vadd.f32 %v796, %v860
      %v893 = vadd.f32 %v797, %v861
      %v894 = vadd.f32 %v798, %v862
      %v895 = vadd.f32 %v799, %v863
      %v896 = vadd.f32 %v800, %v864
      %v897 = vadd.f32 %v801, %v865
      %v898 = vadd.f32 %v802, %v866
      %v899 = vadd.f32 %v803, %v867
      %v900 = vadd.f32 %v804, %v868
      %v901 = vadd.f32 %v805, %v869
      %v902 = vadd.f32 %v806, %v870
      %v903 = vadd.f32 %v807, %v871
      %v904 = vadd.f32 %v808, %v872
      %v905 = vadd.f32 %v809, %v873
      %v906 = vadd.f32 %v810, %v874
      %v907 = vadd.f32 %v811, %v875
      %v908 = vadd.f32 %v812, %v876
      %v909 = vadd.f32 %v813, %v877
      %v910 = vadd.f32 %v814, %v878
      %v911 = vadd.f32 %v815, %v879
      %v912 = vadd.f32 %v816, %v880
      %v913 = vadd.f32 %v817, %v881
      %v914 = vadd.f32 %v818, %v882
      %v915 = vadd.f32 %v819, %v883
      %v916 = vadd.f32 %v820, %v884
      %v917 = vadd.f32 %v821, %v885
      %v918 = vadd.f32 %v822, %v886
      %v919 = vadd.f32 %v823, %v887
      %v920 = vadd.f32 %v824, %v888
      %v921 = vadd.f32 %v825, %v889
      %v922 = vpack.c.bf16 %v891, %v890
      %v923 = vpack.c.bf16 %v893, %v892
      %v924 = vpack.c.bf16 %v895, %v894
      %v925 = vpack.c.bf16 %v897, %v896
      %v926 = vpack.c.bf16 %v899, %v898
      %v927 = vpack.c.bf16 %v901, %v900
      %v928 = vpack.c.bf16 %v903, %v902
      %v929 = vpack.c.bf16 %v905, %v904
      %v930 = vpack.c.bf16 %v907, %v906
      %v931 = vpack.c.bf16 %v909, %v908
      %v932 = vpack.c.bf16 %v911, %v910
      %v933 = vpack.c.bf16 %v913, %v912
      %v934 = vpack.c.bf16 %v915, %v914
      %v935 = vpack.c.bf16 %v917, %v916
      %v936 = vpack.c.bf16 %v919, %v918
      %v937 = vpack.c.bf16 %v921, %v920
      %v954 = vunpack.c.l.b16 %v922
      %v955 = vunpack.c.h.b16 %v922
      %v956 = vunpack.c.l.b16 %v923
      %v957 = vunpack.c.h.b16 %v923
      %v958 = vunpack.c.l.b16 %v924
      %v959 = vunpack.c.h.b16 %v924
      %v960 = vunpack.c.l.b16 %v925
      %v961 = vunpack.c.h.b16 %v925
      %v962 = vunpack.c.l.b16 %v926
      %v963 = vunpack.c.h.b16 %v926
      %v964 = vunpack.c.l.b16 %v927
      %v965 = vunpack.c.h.b16 %v927
      %v966 = vunpack.c.l.b16 %v928
      %v967 = vunpack.c.h.b16 %v928
      %v968 = vunpack.c.l.b16 %v929
      %v969 = vunpack.c.h.b16 %v929
      %v970 = vunpack.c.l.b16 %v930
      %v971 = vunpack.c.h.b16 %v930
      %v972 = vunpack.c.l.b16 %v931
      %v973 = vunpack.c.h.b16 %v931
      %v974 = vunpack.c.l.b16 %v932
      %v975 = vunpack.c.h.b16 %v932
      %v976 = vunpack.c.l.b16 %v933
      %v977 = vunpack.c.h.b16 %v933
      %v978 = vunpack.c.l.b16 %v934
      %v979 = vunpack.c.h.b16 %v934
      %v980 = vunpack.c.l.b16 %v935
      %v981 = vunpack.c.h.b16 %v935
      %v982 = vunpack.c.l.b16 %v936
      %v983 = vunpack.c.h.b16 %v936
      %v984 = vunpack.c.l.b16 %v937
      %v985 = vunpack.c.h.b16 %v937
      %v986 = vpack.c.b16 %v954, %v954
      %v987 = vpack.c.b16 %v955, %v955
      %v988 = vpack.c.b16 %v956, %v956
      %v989 = vpack.c.b16 %v957, %v957
      %v990 = vpack.c.b16 %v958, %v958
      %v991 = vpack.c.b16 %v959, %v959
      %v992 = vpack.c.b16 %v960, %v960
      %v993 = vpack.c.b16 %v961, %v961
      %v994 = vpack.c.b16 %v962, %v962
      %v995 = vpack.c.b16 %v963, %v963
      %v996 = vpack.c.b16 %v964, %v964
      %v997 = vpack.c.b16 %v965, %v965
      %v998 = vpack.c.b16 %v966, %v966
      %v999 = vpack.c.b16 %v967, %v967
      %v1000 = vpack.c.b16 %v968, %v968
      %v1001 = vpack.c.b16 %v969, %v969
      %v1002 = vpack.c.b16 %v970, %v970
      %v1003 = vpack.c.b16 %v971, %v971
      %v1004 = vpack.c.b16 %v972, %v972
      %v1005 = vpack.c.b16 %v973, %v973
      %v1006 = vpack.c.b16 %v974, %v974
      %v1007 = vpack.c.b16 %v975, %v975
      %v1008 = vpack.c.b16 %v976, %v976
      %v1009 = vpack.c.b16 %v977, %v977
      %v1010 = vpack.c.b16 %v978, %v978
      %v1011 = vpack.c.b16 %v979, %v979
      %v1012 = vpack.c.b16 %v980, %v980
      %v1013 = vpack.c.b16 %v981, %v981
      %v1014 = vpack.c.b16 %v982, %v982
      %v1015 = vpack.c.b16 %v983, %v983
      %v1016 = vpack.c.b16 %v984, %v984
      %v1017 = vpack.c.b16 %v985, %v985
      %1050 = vst [vmem:[%s312] sm:$0xf] %v986
      %1051 = vst [vmem:[%s312 + $0x4] sm:$0xf] %v987
      %1052 = vst [vmem:[%s312 + $0x8] sm:$0xf] %v988
      %1053 = vst [vmem:[%s312 + $0xc] sm:$0xf] %v989
      %1054 = vst [vmem:[%s312 + $0x10] sm:$0xf] %v990
      %1055 = vst [vmem:[%s312 + $0x14] sm:$0xf] %v991
      %1056 = vst [vmem:[%s312 + $0x18] sm:$0xf] %v992
      %1057 = vst [vmem:[%s312 + $0x1c] sm:$0xf] %v993
      %1058 = vst [vmem:[%s312 + $0x20] sm:$0xf] %v994
      %1059 = vst [vmem:[%s312 + $0x24] sm:$0xf] %v995
      %1060 = vst [vmem:[%s312 + $0x28] sm:$0xf] %v996
      %1061 = vst [vmem:[%s312 + $0x2c] sm:$0xf] %v997
      %1062 = vst [vmem:[%s312 + $0x30] sm:$0xf] %v998
      %1063 = vst [vmem:[%s312 + $0x34] sm:$0xf] %v999
      %1064 = vst [vmem:[%s312 + $0x38] sm:$0xf] %v1000
      %1065 = vst [vmem:[%s312 + $0x3c] sm:$0xf] %v1001
      %1066 = vst [vmem:[%s312 + $0x40] sm:$0xf] %v1002
      %1067 = vst [vmem:[%s312 + $0x44] sm:$0xf] %v1003
      %1068 = vst [vmem:[%s312 + $0x48] sm:$0xf] %v1004
      %1069 = vst [vmem:[%s312 + $0x4c] sm:$0xf] %v1005
      %1070 = vst [vmem:[%s312 + $0x50] sm:$0xf] %v1006
      %1071 = vst [vmem:[%s312 + $0x54] sm:$0xf] %v1007
      %1072 = vst [vmem:[%s312 + $0x58] sm:$0xf] %v1008
      %1073 = vst [vmem:[%s312 + $0x5c] sm:$0xf] %v1009
      %1074 = vst [vmem:[%s312 + $0x60] sm:$0xf] %v1010
      %1075 = vst [vmem:[%s312 + $0x64] sm:$0xf] %v1011
      %1076 = vst [vmem:[%s312 + $0x68] sm:$0xf] %v1012
      %1077 = vst [vmem:[%s312 + $0x6c] sm:$0xf] %v1013
      %1078 = vst [vmem:[%s312 + $0x70] sm:$0xf] %v1014
      %1079 = vst [vmem:[%s312 + $0x74] sm:$0xf] %v1015
      %1080 = vst [vmem:[%s312 + $0x78] sm:$0xf] %v1016
      %1081 = vst [vmem:[%s312 + $0x7c] sm:$0xf] %v1017
      %s1082 = smul.u32 32, %s21
      %p1083 = scmp.lt.s32.totalorder %s20, 1
      %s1084 = scalar_select %p1083, %s20, 1
      %p1085 = scmp.lt.s32.totalorder %s1082, 31
      %s1086 = scalar_select %p1085, %s1082, 31
      %s1087 = smul.addr %s1084, 32
      %s1088 = sadd.s32 %s1086, %s1087
      %s1089 = smul.addr %s1088, 4
      %s1090 = scalar_lea.vmem %s5, %s1089
      // Predicated region
      $region41: #{_lambda_.3} parent=39 // pred_check
        %p1091 = pneg %p172
      $region42: #{_lambda_.3} parent=39 // pred_check_branch
        %1093 = sbr.rel (%p1091) target = $region44
      $region43: #{_lambda_.3} parent=39 // pred_region
        %s1094 = smul.u32 32, %s21
      $region44: #{_lambda_.3} parent=39 // pred_fallthru
        _
    $region40: #{_lambda_.3} parent=5 // pred_fallthru
      _
    %p1095 = scmp.le.s32.totalorder 2, %s11
    // Predicated region
    $region45: #{_lambda_.3} parent=5 // pred_check
      %p1096 = pneg %p1095
    $region46: #{_lambda_.3} parent=5 // pred_check_branch
      %1098 = sbr.rel (%p1096) target = $region48
    $region47: #{_lambda_.3} parent=5 // pred_region
      %s1099 = ssub.s32 %s11, 2
      // Predicated region
      $region49: #{_lambda_.3} parent=47 // pred_check
        %p1100 = pneg %p178
      $region50: #{_lambda_.3} parent=47 // pred_check_branch
        %1102 = sbr.rel (%p1100) target = $region52
      $region51: #{_lambda_.3} parent=47 // pred_region
        %s1103 = smul.u32 32, %s23
        %p1104 = scmp.lt.s32.totalorder %s22, 1
        %s1105 = scalar_select %p1104, %s22, 1
        %p1106 = scmp.lt.s32.totalorder %s1103, 31
        %s1107 = scalar_select %p1106, %s1103, 31
        %s1108 = smul.addr %s1105, 32
        %s1109 = sadd.s32 %s1107, %s1108
        %s1110 = smul.addr %s1109, 4
        %s1111 = scalar_lea.vmem %s5, %s1110
      $region52: #{_lambda_.3} parent=47 // pred_fallthru
        _
    $region48: #{_lambda_.3} parent=5 // pred_fallthru
      _
  $region6: #{_lambda_.3} parent=0 // loop_footer
    %s15 = sadd.s32 1, %s11
  $region7: #{_lambda_.3} parent=0 // loop_footer_branch
    %10 = sbr.rel target = $region3
  $region8: #{_lambda_.3} parent=0 // loop_exit
    _

// kernel: _lambda_.2
$region0: #{_lambda_.2}
  #allocation0 [shape = 'u32[]', space=smem, size = 0x4, offset = 0x4, fixed_abs, tag = 'smem constant byte address 0x4 - core index']
  #allocation1 [shape = 'u32[144,128]{1,0:T(1,128)}', space=vmem, size = 0x12000, scoped, tag = 'internal scratch']
  #allocation2 [shape = 'bf16[18,16,128]{2,1,0:T(16,128)(2,1)}', space=vmem, size = 0x12000, scoped, tag = 'scratch operand']
  %s0 = inlined_call_operand.vmem [shape: bf16[2,16,16,128], index: 0, kind: input, shape index: {}]
  %s1 = inlined_call_operand.vmem [shape: bf16[128,128], index: 1, kind: input, shape index: {}]
  %s2 = inlined_call_operand.vmem [shape: f32[1,128], index: 2, kind: input, shape index: {}]
  %s3 = inlined_call_operand.vmem [shape: f32[9,128], index: 3, kind: input, shape index: {}]
  %s4 = inlined_call_operand.vmem [shape: f32[1,128], index: 4, kind: input, shape index: {}]
  %s5 = inlined_call_operand.vmem [shape: bf16[2,16,16,128], index: 5, kind: output, shape index: {0}]
  %s6 = inlined_call_operand.vmem [shape: f32[2,1,128], index: 6, kind: output, shape index: {1}]
  %7 = xla_tuple %s5, %s6
  %s8 = sld [smem:[#allocation0]]
  $region68: #{_lambda_.2} parent=0
    _
  %s10 = ssub.s32 1, %s8
  %s11 = scalar_select 0, %s10, %s8
  loop: start=0, step=1, limit=4
  $region2: #{_lambda_.2} parent=0 // loop_pre_header
    _
  $region3: #{_lambda_.2} parent=0 // loop_header
    %s13 = sphi 0, %s17
    %p14 = scmp.ge.s32.totalorder %s13, 4
    %s20 = sphi 0, %s32
    %s21 = sphi 0, %s28
    %s22 = sphi 0, %s20
    %s23 = sphi 0, %s21
    %s24 = sphi 0, %s22
    %s25 = sphi 0, %s23
    %s35 = sphi 0, %s37
    %s38 = sphi 0, %s35
    %s39 = sphi 0, %s38
    %s55 = sphi 0, %s39
    %s61 = sphi 0, %s63
    %s64 = sphi 0, %s61
    %s65 = sphi 0, %s64
    %s81 = sphi 0, %s65
    %s87 = sphi 0, %s89
    %s90 = sphi 0, %s87
    %s91 = sphi 0, %s90
    %s107 = sphi 0, %s91
    %s113 = sphi 0, %s115
    %s116 = sphi 0, %s113
    %s117 = sphi 0, %s116
    %s133 = sphi 0, %s117
    %s139 = sphi 0, %s141
    %s142 = sphi 0, %s139
    %s143 = sphi 0, %s142
    %s159 = sphi 0, %s143
    %s167 = sphi 0, %s169
    %s170 = sphi 0, %s167
    %s171 = sphi 0, %s170
    %s187 = sphi 0, %s171
    %s195 = sphi 0, %s197
    %s198 = sphi 0, %s195
    %s199 = sphi 0, %s198
    %s215 = sphi 0, %s199
  $region4: #{_lambda_.2} parent=0 // loop_header_branch
    %16 = sbr.rel (%p14) target = $region8
  $region5: #{_lambda_.2} parent=0 // loop_body
    %s18 = ssub.s32 %s13, 1
    %s19 = ssub.s32 %s13, 2
    %s26 = sadd.s32 1, %s21
    %p27 = scmp.ge.s32.totalorder %s26, 1
    %s28 = scalar_select %p27, 0, %s26
    %s29 = sadd.s32 1, %s20
    %s30 = scalar_select %p27, %s29, %s20
    %p31 = scmp.ge.s32.totalorder %s30, 2
    %s32 = scalar_select %p31, 0, %s30
    %s33 = ssub.s32 %s20, %s32
    %p34 = scmp.eq.s32.totalorder %s33, 0
    %s36 = sadd.s32 %s35, 1
    %s37 = scalar_select %p34, %s35, %s36
    %p40 = pneg %p34
    %p41 = scmp.eq.s32.totalorder %s13, 1
    %p42 = por %p40, %p41
    %p43 = scmp.ne.s32.totalorder %s35, %s38
    %p44 = scmp.eq.s32.totalorder %s13, 0
    %p45 = por %p43, %p44
    %p46 = scmp.ne.s32.totalorder %s35, %s38
    %p47 = scmp.eq.s32.totalorder %s18, 1
    %p48 = por %p46, %p47
    %p49 = scmp.ne.s32.totalorder %s38, %s39
    %p50 = scmp.eq.s32.totalorder %s18, 0
    %p51 = por %p49, %p50
    %p52 = scmp.ne.s32.totalorder %s38, %s39
    %p53 = scmp.eq.s32.totalorder %s19, 1
    %p54 = por %p52, %p53
    %p56 = scmp.ne.s32.totalorder %s39, %s55
    %p57 = scmp.eq.s32.totalorder %s19, 0
    %p58 = por %p56, %p57
    %s59 = ssub.s32 %s21, %s28
    %p60 = scmp.eq.s32.totalorder %s59, 0
    %s62 = sadd.s32 %s61, 1
    %s63 = scalar_select %p60, %s61, %s62
    %p66 = pneg %p60
    %p67 = scmp.eq.s32.totalorder %s13, 1
    %p68 = por %p66, %p67
    %p69 = scmp.ne.s32.totalorder %s61, %s64
    %p70 = scmp.eq.s32.totalorder %s13, 0
    %p71 = por %p69, %p70
    %p72 = scmp.ne.s32.totalorder %s61, %s64
    %p73 = scmp.eq.s32.totalorder %s18, 1
    %p74 = por %p72, %p73
    %p75 = scmp.ne.s32.totalorder %s64, %s65
    %p76 = scmp.eq.s32.totalorder %s18, 0
    %p77 = por %p75, %p76
    %p78 = scmp.ne.s32.totalorder %s64, %s65
    %p79 = scmp.eq.s32.totalorder %s19, 1
    %p80 = por %p78, %p79
    %p82 = scmp.ne.s32.totalorder %s65, %s81
    %p83 = scmp.eq.s32.totalorder %s19, 0
    %p84 = por %p82, %p83
    %s85 = ssub.s32 %s21, %s28
    %p86 = scmp.eq.s32.totalorder %s85, 0
    %s88 = sadd.s32 %s87, 1
    %s89 = scalar_select %p86, %s87, %s88
    %p92 = pneg %p86
    %p93 = scmp.eq.s32.totalorder %s13, 1
    %p94 = por %p92, %p93
    %p95 = scmp.ne.s32.totalorder %s87, %s90
    %p96 = scmp.eq.s32.totalorder %s13, 0
    %p97 = por %p95, %p96
    %p98 = scmp.ne.s32.totalorder %s87, %s90
    %p99 = scmp.eq.s32.totalorder %s18, 1
    %p100 = por %p98, %p99
    %p101 = scmp.ne.s32.totalorder %s90, %s91
    %p102 = scmp.eq.s32.totalorder %s18, 0
    %p103 = por %p101, %p102
    %p104 = scmp.ne.s32.totalorder %s90, %s91
    %p105 = scmp.eq.s32.totalorder %s19, 1
    %p106 = por %p104, %p105
    %p108 = scmp.ne.s32.totalorder %s91, %s107
    %p109 = scmp.eq.s32.totalorder %s19, 0
    %p110 = por %p108, %p109
    %s111 = ssub.s32 %s21, %s28
    %p112 = scmp.eq.s32.totalorder %s111, 0
    %s114 = sadd.s32 %s113, 1
    %s115 = scalar_select %p112, %s113, %s114
    %p118 = pneg %p112
    %p119 = scmp.eq.s32.totalorder %s13, 1
    %p120 = por %p118, %p119
    %p121 = scmp.ne.s32.totalorder %s113, %s116
    %p122 = scmp.eq.s32.totalorder %s13, 0
    %p123 = por %p121, %p122
    %p124 = scmp.ne.s32.totalorder %s113, %s116
    %p125 = scmp.eq.s32.totalorder %s18, 1
    %p126 = por %p124, %p125
    %p127 = scmp.ne.s32.totalorder %s116, %s117
    %p128 = scmp.eq.s32.totalorder %s18, 0
    %p129 = por %p127, %p128
    %p130 = scmp.ne.s32.totalorder %s116, %s117
    %p131 = scmp.eq.s32.totalorder %s19, 1
    %p132 = por %p130, %p131
    %p134 = scmp.ne.s32.totalorder %s117, %s133
    %p135 = scmp.eq.s32.totalorder %s19, 0
    %p136 = por %p134, %p135
    %s137 = ssub.s32 %s21, %s28
    %p138 = scmp.eq.s32.totalorder %s137, 0
    %s140 = sadd.s32 %s139, 1
    %s141 = scalar_select %p138, %s139, %s140
    %p144 = pneg %p138
    %p145 = scmp.eq.s32.totalorder %s13, 1
    %p146 = por %p144, %p145
    %p147 = scmp.ne.s32.totalorder %s139, %s142
    %p148 = scmp.eq.s32.totalorder %s13, 0
    %p149 = por %p147, %p148
    %p150 = scmp.ne.s32.totalorder %s139, %s142
    %p151 = scmp.eq.s32.totalorder %s18, 1
    %p152 = por %p150, %p151
    %p153 = scmp.ne.s32.totalorder %s142, %s143
    %p154 = scmp.eq.s32.totalorder %s18, 0
    %p155 = por %p153, %p154
    %p156 = scmp.ne.s32.totalorder %s142, %s143
    %p157 = scmp.eq.s32.totalorder %s19, 1
    %p158 = por %p156, %p157
    %p160 = scmp.ne.s32.totalorder %s143, %s159
    %p161 = scmp.eq.s32.totalorder %s19, 0
    %p162 = por %p160, %p161
    %s163 = ssub.s32 %s20, %s32
    %s164 = ssub.s32 %s21, %s28
    %s165 = sor.u32 %s163, %s164
    %p166 = scmp.eq.s32.totalorder %s165, 0
    %s168 = sadd.s32 %s167, 1
    %s169 = scalar_select %p166, %s167, %s168
    %p172 = pneg %p166
    %p173 = scmp.eq.s32.totalorder %s13, 1
    %p174 = por %p172, %p173
    %p175 = scmp.ne.s32.totalorder %s167, %s170
    %p176 = scmp.eq.s32.totalorder %s13, 0
    %p177 = por %p175, %p176
    %p178 = scmp.ne.s32.totalorder %s167, %s170
    %p179 = scmp.eq.s32.totalorder %s18, 1
    %p180 = por %p178, %p179
    %p181 = scmp.ne.s32.totalorder %s170, %s171
    %p182 = scmp.eq.s32.totalorder %s18, 0
    %p183 = por %p181, %p182
    %p184 = scmp.ne.s32.totalorder %s170, %s171
    %p185 = scmp.eq.s32.totalorder %s19, 1
    %p186 = por %p184, %p185
    %p188 = scmp.ne.s32.totalorder %s171, %s187
    %p189 = scmp.eq.s32.totalorder %s19, 0
    %p190 = por %p188, %p189
    %s191 = ssub.s32 %s20, %s32
    %s192 = ssub.s32 %s21, %s28
    %s193 = sor.u32 %s191, %s192
    %p194 = scmp.eq.s32.totalorder %s193, 0
    %s196 = sadd.s32 %s195, 1
    %s197 = scalar_select %p194, %s195, %s196
    %p200 = pneg %p194
    %p201 = scmp.eq.s32.totalorder %s13, 1
    %p202 = por %p200, %p201
    %p203 = scmp.ne.s32.totalorder %s195, %s198
    %p204 = scmp.eq.s32.totalorder %s13, 0
    %p205 = por %p203, %p204
    %p206 = scmp.ne.s32.totalorder %s195, %s198
    %p207 = scmp.eq.s32.totalorder %s18, 1
    %p208 = por %p206, %p207
    %p209 = scmp.ne.s32.totalorder %s198, %s199
    %p210 = scmp.eq.s32.totalorder %s18, 0
    %p211 = por %p209, %p210
    %p212 = scmp.ne.s32.totalorder %s198, %s199
    %p213 = scmp.eq.s32.totalorder %s19, 1
    %p214 = por %p212, %p213
    %p216 = scmp.ne.s32.totalorder %s199, %s215
    %p217 = scmp.eq.s32.totalorder %s19, 0
    %p218 = por %p216, %p217
    %p219 = scmp.le.s32.totalorder 1, %s13
    %p220 = scmp.lt.s32.totalorder %s13, 3
    %p221 = pnand %p219, %p220
    %p222 = pneg %p221
    // Predicated region
    $region9: #{_lambda_.2} parent=5 // pred_check
      _
    $region10: #{_lambda_.2} parent=5 // pred_check_branch
      %224 = sbr.rel (%p221) target = $region12
    $region11: #{_lambda_.2} parent=5 // pred_region
      %s225 = ssub.s32 %s13, 1
      // Predicated region
      $region13: #{_lambda_.2} parent=11 // pred_check
        %p226 = pneg %p77
      $region14: #{_lambda_.2} parent=11 // pred_check_branch
        %228 = sbr.rel (%p226) target = $region16
      $region15: #{_lambda_.2} parent=11 // pred_region
        %p229 = scmp.lt.s32.totalorder %s23, 0
        %s230 = scalar_select %p229, %s23, 0
        %s231 = smul.addr %s230, 4
        %s232 = scalar_lea.vmem %s1, %s231
      $region16: #{_lambda_.2} parent=11 // pred_fallthru
        _
      // Predicated region
      $region17: #{_lambda_.2} parent=11 // pred_check
        %p233 = pneg %p103
      $region18: #{_lambda_.2} parent=11 // pred_check_branch
        %235 = sbr.rel (%p233) target = $region20
      $region19: #{_lambda_.2} parent=11 // pred_region
        %p236 = scmp.lt.s32.totalorder %s23, 0
        %s237 = scalar_select %p236, %s23, 0
        %s238 = scalar_lea.vmem %s2, %s237
      $region20: #{_lambda_.2} parent=11 // pred_fallthru
        _
      // Predicated region
      $region21: #{_lambda_.2} parent=11 // pred_check
        %p239 = pneg %p129
      $region22: #{_lambda_.2} parent=11 // pred_check_branch
        %241 = sbr.rel (%p239) target = $region24
      $region23: #{_lambda_.2} parent=11 // pred_region
        %p242 = scmp.lt.s32.totalorder %s23, 0
        %s243 = scalar_select %p242, %s23, 0
        %s244 = smul.addr %s243, 8
        %s245 = scalar_lea.vmem %s3, %s244
      $region24: #{_lambda_.2} parent=11 // pred_fallthru
        _
      // Predicated region
      $region25: #{_lambda_.2} parent=11 // pred_check
        %p246 = pneg %p155
      $region26: #{_lambda_.2} parent=11 // pred_check_branch
        %248 = sbr.rel (%p246) target = $region28
      $region27: #{_lambda_.2} parent=11 // pred_region
        %p249 = scmp.lt.s32.totalorder %s23, 0
        %s250 = scalar_select %p249, %s23, 0
        %s251 = scalar_lea.vmem %s4, %s250
      $region28: #{_lambda_.2} parent=11 // pred_fallthru
        _
    $region12: #{_lambda_.2} parent=5 // pred_fallthru
      _
    %p252 = scmp.lt.s32.totalorder %s13, 2
    // Predicated region
    $region29: #{_lambda_.2} parent=5 // pred_check
      %p253 = pneg %p252
    $region30: #{_lambda_.2} parent=5 // pred_check_branch
      %255 = sbr.rel (%p253) target = $region32
    $region31: #{_lambda_.2} parent=5 // pred_region
      // Predicated region
      $region33: #{_lambda_.2} parent=31 // pred_check
        %p256 = pneg %p45
      $region34: #{_lambda_.2} parent=31 // pred_check_branch
        %258 = sbr.rel (%p256) target = $region36
      $region35: #{_lambda_.2} parent=31 // pred_region
        %p259 = scmp.lt.s32.totalorder %s20, 1
        %s260 = scalar_select %p259, %s20, 1
        %s261 = smul.addr %s260, 32
        %s262 = smul.addr %s261, 4
        %s263 = scalar_lea.vmem %s0, %s262
      $region36: #{_lambda_.2} parent=31 // pred_fallthru
        _
    $region32: #{_lambda_.2} parent=5 // pred_fallthru
      _
    %p264 = scmp.le.s32.totalorder 1, %s13
    %p265 = scmp.lt.s32.totalorder %s13, 3
    %p266 = pnand %p264, %p265
    %p267 = pneg %p266
    // Predicated region
    $region37: #{_lambda_.2} parent=5 // pred_check
      _
    $region38: #{_lambda_.2} parent=5 // pred_check_branch
      %269 = sbr.rel (%p266) target = $region40
    $region39: #{_lambda_.2} parent=5 // pred_region
      %s270 = ssub.s32 %s13, 1
      %p271 = scmp.lt.s32.totalorder %s22, 1
      %s272 = scalar_select %p271, %s22, 1
      %s273 = smul.addr %s272, 32
      %s274 = smul.addr %s273, 4
      %s275 = scalar_lea.vmem %s0, %s274
      %p276 = pneg %p51
      %p277 = pneg %p48
      %p278 = scmp.lt.s32.totalorder %s23, 0
      %s279 = scalar_select %p278, %s23, 0
      %s280 = smul.addr %s279, 4
      %s281 = scalar_lea.vmem %s1, %s280
      %p282 = pneg %p77
      %p283 = pneg %p74
      %p284 = scmp.lt.s32.totalorder %s23, 0
      %s285 = scalar_select %p284, %s23, 0
      %s286 = scalar_lea.vmem %s2, %s285
      %p287 = pneg %p103
      %p288 = pneg %p100
      %p289 = scmp.lt.s32.totalorder %s23, 0
      %s290 = scalar_select %p289, %s23, 0
      %s291 = smul.addr %s290, 8
      %s292 = scalar_lea.vmem %s3, %s291
      %p293 = pneg %p129
      %p294 = pneg %p126
      %p295 = scmp.lt.s32.totalorder %s23, 0
      %s296 = scalar_select %p295, %s23, 0
      %s297 = scalar_lea.vmem %s4, %s296
      %p298 = pneg %p155
      %p299 = pneg %p152
      %p300 = pneg %p183
      %p301 = pneg %p180
      %p302 = scmp.lt.s32.totalorder %s22, 1
      %s303 = scalar_select %p302, %s22, 1
      %p304 = scmp.lt.s32.totalorder %s23, 0
      %s305 = scalar_select %p304, %s23, 0
      %s306 = smul.addr %s303, 32
      %s307 = sadd.s32 %s305, %s306
      %s308 = smul.addr %s307, 4
      %s309 = scalar_lea.vmem %s5, %s308
      %p310 = pneg %p211
      %p311 = pneg %p208
      %p312 = scmp.lt.s32.totalorder %s22, 1
      %s313 = scalar_select %p312, %s22, 1
      %p314 = scmp.lt.s32.totalorder %s23, 0
      %s315 = scalar_select %p314, %s23, 0
      %s316 = sadd.s32 %s315, %s313
      %s317 = scalar_lea.vmem %s6, %s316
      %p318 = scmp.lt.s32.totalorder %s22, 1
      %s319 = scalar_select %p318, %s22, 1
      %s320 = smul.addr %s319, 32
      %s321 = smul.addr %s320, 4
      %s322 = scalar_lea.vmem %s0, %s321
      %p323 = scmp.lt.s32.totalorder %s23, 0
      %s324 = scalar_select %p323, %s23, 0
      %s325 = smul.addr %s324, 4
      %s326 = scalar_lea.vmem %s1, %s325
      %p327 = scmp.lt.s32.totalorder %s23, 0
      %s328 = scalar_select %p327, %s23, 0
      %s329 = scalar_lea.vmem %s2, %s328
      %p330 = scmp.lt.s32.totalorder %s23, 0
      %s331 = scalar_select %p330, %s23, 0
      %s332 = smul.addr %s331, 8
      %s333 = scalar_lea.vmem %s3, %s332
      %p334 = scmp.lt.s32.totalorder %s23, 0
      %s335 = scalar_select %p334, %s23, 0
      %s336 = scalar_lea.vmem %s4, %s335
      %p337 = scmp.lt.s32.totalorder %s22, 1
      %s338 = scalar_select %p337, %s22, 1
      %p339 = scmp.lt.s32.totalorder %s23, 0
      %s340 = scalar_select %p339, %s23, 0
      %s341 = smul.addr %s338, 32
      %s342 = sadd.s32 %s340, %s341
      %s343 = smul.addr %s342, 4
      %s344 = scalar_lea.vmem %s5, %s343
      %p345 = scmp.lt.s32.totalorder %s22, 1
      %s346 = scalar_select %p345, %s22, 1
      %p347 = scmp.lt.s32.totalorder %s23, 0
      %s348 = scalar_select %p347, %s23, 0
      %s349 = sadd.s32 %s348, %s346
      %s350 = scalar_lea.vmem %s6, %s349
      %352 = vst [vmem:[#allocation2] sm:$0xff] 0
      %s353 = scalar_lea.vmem [#allocation2], 136
      %354 = vst [vmem:[%s353] sm:$0xff] 0
      %v355 = vld [vmem:[%s326] sm:$0xf]
      %v356 = vld [vmem:[%s326 + $0x4] sm:$0xf]
      %v357 = vld [vmem:[%s326 + $0x8] sm:$0xf]
      %v358 = vld [vmem:[%s326 + $0xc] sm:$0xf]
      %v359 = vld [vmem:[%s326 + $0x10] sm:$0xf]
      %v360 = vld [vmem:[%s326 + $0x14] sm:$0xf]
      %v361 = vld [vmem:[%s326 + $0x18] sm:$0xf]
      %v362 = vld [vmem:[%s326 + $0x1c] sm:$0xf]
      %v363 = vld [vmem:[%s326 + $0x20] sm:$0xf]
      %v364 = vld [vmem:[%s326 + $0x24] sm:$0xf]
      %v365 = vld [vmem:[%s326 + $0x28] sm:$0xf]
      %v366 = vld [vmem:[%s326 + $0x2c] sm:$0xf]
      %v367 = vld [vmem:[%s326 + $0x30] sm:$0xf]
      %v368 = vld [vmem:[%s326 + $0x34] sm:$0xf]
      %v369 = vld [vmem:[%s326 + $0x38] sm:$0xf]
      %v370 = vld [vmem:[%s326 + $0x3c] sm:$0xf]
      %v371 = vld [vmem:[%s329] sm:$0x1]
      %v372 = vld [vmem:[%s322] sm:$0xf]
      %v373 = vld [vmem:[%s322 + $0x4] sm:$0xf]
      %v374 = vld [vmem:[%s322 + $0x8] sm:$0xf]
      %v375 = vld [vmem:[%s322 + $0xc] sm:$0xf]
      %v376 = vld [vmem:[%s322 + $0x10] sm:$0xf]
      %v377 = vld [vmem:[%s322 + $0x14] sm:$0xf]
      %v378 = vld [vmem:[%s322 + $0x18] sm:$0xf]
      %v379 = vld [vmem:[%s322 + $0x1c] sm:$0xf]
      %v380 = vld [vmem:[%s322 + $0x20] sm:$0xf]
      %v381 = vld [vmem:[%s322 + $0x24] sm:$0xf]
      %v382 = vld [vmem:[%s322 + $0x28] sm:$0xf]
      %v383 = vld [vmem:[%s322 + $0x2c] sm:$0xf]
      %v384 = vld [vmem:[%s322 + $0x30] sm:$0xf]
      %v385 = vld [vmem:[%s322 + $0x34] sm:$0xf]
      %v386 = vld [vmem:[%s322 + $0x38] sm:$0xf]
      %v387 = vld [vmem:[%s322 + $0x3c] sm:$0xf]
      %v388 = vld [vmem:[%s322 + $0x40] sm:$0xf]
      %v389 = vld [vmem:[%s322 + $0x44] sm:$0xf]
      %v390 = vld [vmem:[%s322 + $0x48] sm:$0xf]
      %v391 = vld [vmem:[%s322 + $0x4c] sm:$0xf]
      %v392 = vld [vmem:[%s322 + $0x50] sm:$0xf]
      %v393 = vld [vmem:[%s322 + $0x54] sm:$0xf]
      %v394 = vld [vmem:[%s322 + $0x58] sm:$0xf]
      %v395 = vld [vmem:[%s322 + $0x5c] sm:$0xf]
      %v396 = vld [vmem:[%s322 + $0x60] sm:$0xf]
      %v397 = vld [vmem:[%s322 + $0x64] sm:$0xf]
      %v398 = vld [vmem:[%s322 + $0x68] sm:$0xf]
      %v399 = vld [vmem:[%s322 + $0x6c] sm:$0xf]
      %v400 = vld [vmem:[%s322 + $0x70] sm:$0xf]
      %v401 = vld [vmem:[%s322 + $0x74] sm:$0xf]
      %v402 = vld [vmem:[%s322 + $0x78] sm:$0xf]
      %v403 = vld [vmem:[%s322 + $0x7c] sm:$0xf]
      %v405 = vlaneseq
      %v406 = vshrl.u32 %v405, 7
      %v407 = vsub.s32 0, %v406
      %v408 = vrot.slane %v371, %v407
      %v442 = vunpack.c.l.b16 %v372
      %v443 = vunpack.c.l.b16 %v373
      %v444 = vunpack.c.l.b16 %v374
      %v445 = vunpack.c.l.b16 %v375
      %v446 = vunpack.c.l.b16 %v376
      %v447 = vunpack.c.l.b16 %v377
      %v448 = vunpack.c.l.b16 %v378
      %v449 = vunpack.c.l.b16 %v379
      %v450 = vunpack.c.l.b16 %v380
      %v451 = vunpack.c.l.b16 %v381
      %v452 = vunpack.c.l.b16 %v382
      %v453 = vunpack.c.l.b16 %v383
      %v454 = vunpack.c.l.b16 %v384
      %v455 = vunpack.c.l.b16 %v385
      %v456 = vunpack.c.l.b16 %v386
      %v457 = vunpack.c.l.b16 %v387
      %v458 = vunpack.c.l.b16 %v388
      %v459 = vunpack.c.l.b16 %v389
      %v460 = vunpack.c.l.b16 %v390
      %v461 = vunpack.c.l.b16 %v391
      %v462 = vunpack.c.l.b16 %v392
      %v463 = vunpack.c.l.b16 %v393
      %v464 = vunpack.c.l.b16 %v394
      %v465 = vunpack.c.l.b16 %v395
      %v466 = vunpack.c.l.b16 %v396
      %v467 = vunpack.c.l.b16 %v397
      %v468 = vunpack.c.l.b16 %v398
      %v469 = vunpack.c.l.b16 %v399
      %v470 = vunpack.c.l.b16 %v400
      %v471 = vunpack.c.l.b16 %v401
      %v472 = vunpack.c.l.b16 %v402
      %v473 = vunpack.c.l.b16 %v403
      %v474 = vpack.c.b16 %v443, %v442
      %v475 = vpack.c.b16 %v445, %v444
      %v476 = vpack.c.b16 %v447, %v446
      %v477 = vpack.c.b16 %v449, %v448
      %v478 = vpack.c.b16 %v451, %v450
      %v479 = vpack.c.b16 %v453, %v452
      %v480 = vpack.c.b16 %v455, %v454
      %v481 = vpack.c.b16 %v457, %v456
      %v482 = vpack.c.b16 %v459, %v458
      %v483 = vpack.c.b16 %v461, %v460
      %v484 = vpack.c.b16 %v463, %v462
      %v485 = vpack.c.b16 %v465, %v464
      %v486 = vpack.c.b16 %v467, %v466
      %v487 = vpack.c.b16 %v469, %v468
      %v488 = vpack.c.b16 %v471, %v470
      %v489 = vpack.c.b16 %v473, %v472
      %v522 = vunpack.c.l.b16 %v355
      %v523 = vunpack.c.l.b16 %v356
      %v524 = vunpack.c.l.b16 %v357
      %v525 = vunpack.c.l.b16 %v358
      %v526 = vunpack.c.l.b16 %v359
      %v527 = vunpack.c.l.b16 %v360
      %v528 = vunpack.c.l.b16 %v361
      %v529 = vunpack.c.l.b16 %v362
      %v530 = vunpack.c.l.b16 %v363
      %v531 = vunpack.c.l.b16 %v364
      %v532 = vunpack.c.l.b16 %v365
      %v533 = vunpack.c.l.b16 %v366
      %v534 = vunpack.c.l.b16 %v367
      %v535 = vunpack.c.l.b16 %v368
      %v536 = vunpack.c.l.b16 %v369
      %v537 = vunpack.c.l.b16 %v370
      %v538 = vpack.c.b16 %v523, %v522
      %v539 = vpack.c.b16 %v525, %v524
      %v540 = vpack.c.b16 %v527, %v526
      %v541 = vpack.c.b16 %v529, %v528
      %v542 = vpack.c.b16 %v531, %v530
      %v543 = vpack.c.b16 %v533, %v532
      %v544 = vpack.c.b16 %v535, %v534
      %v545 = vpack.c.b16 %v537, %v536
      %554 = vmatprep.subr.bf16.mxu0 0
      %555 = vmatpush1.bf16.msra.mxu0 %v538
      %556 = vmatprep.subr.bf16.mxu0 0
      %557 = vmatpush1.bf16.msra.mxu0 %v539
      %558 = vmatprep.subr.bf16.mxu0 0
      %559 = vmatpush1.bf16.msra.mxu0 %v540
      %560 = vmatprep.subr.bf16.mxu0 0
      %561 = vmatpush1.bf16.msra.mxu0 %v541
      %562 = vmatprep.subr.bf16.mxu0 0
      %563 = vmatpush1.bf16.msra.mxu0 %v542
      %564 = vmatprep.subr.bf16.mxu0 0
      %565 = vmatpush1.bf16.msra.mxu0 %v543
      %566 = vmatprep.subr.bf16.mxu0 0
      %567 = vmatpush1.bf16.msra.mxu0 %v544
      %568 = vmatprep.subr.bf16.mxu0 0
      %569 = vmatpush1.bf16.msra.mxu0 %v545
      %570 = vmatprep.subr.bf16.mxu0 0
      %571 = vmatpush1.bf16.msra.mxu0 0
      %572 = vmatprep.subr.bf16.mxu0 0
      %573 = vmatpush1.bf16.msra.mxu0 0
      %574 = vmatprep.subr.bf16.mxu0 0
      %575 = vmatpush1.bf16.msra.mxu0 0
      %576 = vmatprep.subr.bf16.mxu0 0
      %577 = vmatpush1.bf16.msra.mxu0 0
      %578 = vmatprep.subr.bf16.mxu0 0
      %579 = vmatpush1.bf16.msra.mxu0 0
      %580 = vmatprep.subr.bf16.mxu0 0
      %581 = vmatpush1.bf16.msra.mxu0 0
      %582 = vmatprep.subr.bf16.mxu0 0
      %583 = vmatpush1.bf16.msra.mxu0 0
      %584 = vmatprep.subr.bf16.mxu0 0
      %585 = vmatpush1.bf16.msra.mxu0 0
      %586 = vmatprep.mubr.bf16.mxu0 0
      %587 = vmatmul.mubr.bf16.gmra.mrb[0].mxu0 %v474
      %v588 = vpop.f32.mrb[0].mxu0
      %v589 = vadd.f32 %v408, %v588
      %v590 = vpop.f32.mrb[0].mxu0
      %v591 = vpop.f32.mrb[0].mxu0
      %v592 = vadd.f32 %v408, %v591
      %v593 = vpop.f32.mrb[0].mxu0
      %594 = vmatprep.mubr.bf16.mxu0 0
      %595 = vmatmul.mubr.bf16.gmra.mrb[0].mxu0 %v475
      %v596 = vpop.f32.mrb[0].mxu0
      %v597 = vadd.f32 %v408, %v596
      %v598 = vpop.f32.mrb[0].mxu0
      %v599 = vpop.f32.mrb[0].mxu0
      %v600 = vadd.f32 %v408, %v599
      %v601 = vpop.f32.mrb[0].mxu0
      %602 = vmatprep.mubr.bf16.mxu0 0
      %603 = vmatmul.mubr.bf16.gmra.mrb[0].mxu0 %v476
      %v604 = vpop.f32.mrb[0].mxu0
      %v605 = vadd.f32 %v408, %v604
      %v606 = vpop.f32.mrb[0].mxu0
      %v607 = vpop.f32.mrb[0].mxu0
      %v608 = vadd.f32 %v408, %v607
      %v609 = vpop.f32.mrb[0].mxu0
      %610 = vmatprep.mubr.bf16.mxu0 0
      %611 = vmatmul.mubr.bf16.gmra.mrb[0].mxu0 %v477
      %v612 = vpop.f32.mrb[0].mxu0
      %v613 = vadd.f32 %v408, %v612
      %v614 = vpop.f32.mrb[0].mxu0
      %v615 = vpop.f32.mrb[0].mxu0
      %v616 = vadd.f32 %v408, %v615
      %v617 = vpop.f32.mrb[0].mxu0
      %618 = vmatprep.mubr.bf16.mxu0 0
      %619 = vmatmul.mubr.bf16.gmra.mrb[0].mxu0 %v478
      %v620 = vpop.f32.mrb[0].mxu0
      %v621 = vadd.f32 %v408, %v620
      %v622 = vpop.f32.mrb[0].mxu0
      %v623 = vpop.f32.mrb[0].mxu0
      %v624 = vadd.f32 %v408, %v623
      %v625 = vpop.f32.mrb[0].mxu0
      %626 = vmatprep.mubr.bf16.mxu0 0
      %627 = vmatmul.mubr.bf16.gmra.mrb[0].mxu0 %v479
      %v628 = vpop.f32.mrb[0].mxu0
      %v629 = vadd.f32 %v408, %v628
      %v630 = vpop.f32.mrb[0].mxu0
      %v631 = vpop.f32.mrb[0].mxu0
      %v632 = vadd.f32 %v408, %v631
      %v633 = vpop.f32.mrb[0].mxu0
      %634 = vmatprep.mubr.bf16.mxu0 0
      %635 = vmatmul.mubr.bf16.gmra.mrb[0].mxu0 %v480
      %v636 = vpop.f32.mrb[0].mxu0
      %v637 = vadd.f32 %v408, %v636
      %v638 = vpop.f32.mrb[0].mxu0
      %v639 = vpop.f32.mrb[0].mxu0
      %v640 = vadd.f32 %v408, %v639
      %v641 = vpop.f32.mrb[0].mxu0
      %642 = vmatprep.mubr.bf16.mxu0 0
      %643 = vmatmul.mubr.bf16.gmra.mrb[0].mxu0 %v481
      %v644 = vpop.f32.mrb[0].mxu0
      %v645 = vadd.f32 %v408, %v644
      %v646 = vpop.f32.mrb[0].mxu0
      %v647 = vpop.f32.mrb[0].mxu0
      %v648 = vadd.f32 %v408, %v647
      %v649 = vpop.f32.mrb[0].mxu0
      %650 = vmatprep.mubr.bf16.mxu0 0
      %651 = vmatmul.mubr.bf16.gmra.mrb[0].mxu0 %v482
      %v652 = vpop.f32.mrb[0].mxu0
      %v653 = vadd.f32 %v408, %v652
      %v654 = vpop.f32.mrb[0].mxu0
      %v655 = vpop.f32.mrb[0].mxu0
      %v656 = vadd.f32 %v408, %v655
      %v657 = vpop.f32.mrb[0].mxu0
      %658 = vmatprep.mubr.bf16.mxu0 0
      %659 = vmatmul.mubr.bf16.gmra.mrb[0].mxu0 %v483
      %v660 = vpop.f32.mrb[0].mxu0
      %v661 = vadd.f32 %v408, %v660
      %v662 = vpop.f32.mrb[0].mxu0
      %v663 = vpop.f32.mrb[0].mxu0
      %v664 = vadd.f32 %v408, %v663
      %v665 = vpop.f32.mrb[0].mxu0
      %666 = vmatprep.mubr.bf16.mxu0 0
      %667 = vmatmul.mubr.bf16.gmra.mrb[0].mxu0 %v484
      %v668 = vpop.f32.mrb[0].mxu0
      %v669 = vadd.f32 %v408, %v668
      %v670 = vpop.f32.mrb[0].mxu0
      %v671 = vpop.f32.mrb[0].mxu0
      %v672 = vadd.f32 %v408, %v671
      %v673 = vpop.f32.mrb[0].mxu0
      %674 = vmatprep.mubr.bf16.mxu0 0
      %675 = vmatmul.mubr.bf16.gmra.mrb[0].mxu0 %v485
      %v676 = vpop.f32.mrb[0].mxu0
      %v677 = vadd.f32 %v408, %v676
      %v678 = vpop.f32.mrb[0].mxu0
      %v679 = vpop.f32.mrb[0].mxu0
      %v680 = vadd.f32 %v408, %v679
      %v681 = vpop.f32.mrb[0].mxu0
      %682 = vmatprep.mubr.bf16.mxu0 0
      %683 = vmatmul.mubr.bf16.gmra.mrb[0].mxu0 %v486
      %v684 = vpop.f32.mrb[0].mxu0
      %v685 = vadd.f32 %v408, %v684
      %v686 = vpop.f32.mrb[0].mxu0
      %v687 = vpop.f32.mrb[0].mxu0
      %v688 = vadd.f32 %v408, %v687
      %v689 = vpop.f32.mrb[0].mxu0
      %690 = vmatprep.mubr.bf16.mxu0 0
      %691 = vmatmul.mubr.bf16.gmra.mrb[0].mxu0 %v487
      %v692 = vpop.f32.mrb[0].mxu0
      %v693 = vadd.f32 %v408, %v692
      %v694 = vpop.f32.mrb[0].mxu0
      %v695 = vpop.f32.mrb[0].mxu0
      %v696 = vadd.f32 %v408, %v695
      %v697 = vpop.f32.mrb[0].mxu0
      %698 = vmatprep.mubr.bf16.mxu0 0
      %699 = vmatmul.mubr.bf16.gmra.mrb[0].mxu0 %v488
      %v700 = vpop.f32.mrb[0].mxu0
      %v701 = vadd.f32 %v408, %v700
      %v702 = vpop.f32.mrb[0].mxu0
      %v703 = vpop.f32.mrb[0].mxu0
      %v704 = vadd.f32 %v408, %v703
      %v705 = vpop.f32.mrb[0].mxu0
      %706 = vmatprep.mubr.bf16.mxu0 0
      %707 = vmatmul.mubr.bf16.gmra.mrb[0].mxu0 %v489
      %v708 = vpop.f32.mrb[0].mxu0
      %v709 = vadd.f32 %v408, %v708
      %v710 = vpop.f32.mrb[0].mxu0
      %v711 = vpop.f32.mrb[0].mxu0
      %v712 = vadd.f32 %v408, %v711
      %v713 = vpop.f32.mrb[0].mxu0
      %714 = vdwg.mxu0
      %v715 = vadd.f32 %v589, 3.0
      %v716 = vadd.f32 %v592, 3.0
      %v717 = vadd.f32 %v597, 3.0
      %v718 = vadd.f32 %v600, 3.0
      %v719 = vadd.f32 %v605, 3.0
      %v720 = vadd.f32 %v608, 3.0
      %v721 = vadd.f32 %v613, 3.0
      %v722 = vadd.f32 %v616, 3.0
      %v723 = vadd.f32 %v621, 3.0
      %v724 = vadd.f32 %v624, 3.0
      %v725 = vadd.f32 %v629, 3.0
      %v726 = vadd.f32 %v632, 3.0
      %v727 = vadd.f32 %v637, 3.0
      %v728 = vadd.f32 %v640, 3.0
      %v729 = vadd.f32 %v645, 3.0
      %v730 = vadd.f32 %v648, 3.0
      %v731 = vadd.f32 %v653, 3.0
      %v732 = vadd.f32 %v656, 3.0
      %v733 = vadd.f32 %v661, 3.0
      %v734 = vadd.f32 %v664, 3.0
      %v735 = vadd.f32 %v669, 3.0
      %v736 = vadd.f32 %v672, 3.0
      %v737 = vadd.f32 %v677, 3.0
      %v738 = vadd.f32 %v680, 3.0
      %v739 = vadd.f32 %v685, 3.0
      %v740 = vadd.f32 %v688, 3.0
      %v741 = vadd.f32 %v693, 3.0
      %v742 = vadd.f32 %v696, 3.0
      %v743 = vadd.f32 %v701, 3.0
      %v744 = vadd.f32 %v704, 3.0
      %v745 = vadd.f32 %v709, 3.0
      %v746 = vadd.f32 %v712, 3.0
      %v747 = vmax.f32 %v715, 0.0
      %v748 = vmax.f32 %v716, 0.0
      %v749 = vmax.f32 %v717, 0.0
      %v750 = vmax.f32 %v718, 0.0
      %v751 = vmax.f32 %v719, 0.0
      %v752 = vmax.f32 %v720, 0.0
      %v753 = vmax.f32 %v721, 0.0
      %v754 = vmax.f32 %v722, 0.0
      %v755 = vmax.f32 %v723, 0.0
      %v756 = vmax.f32 %v724, 0.0
      %v757 = vmax.f32 %v725, 0.0
      %v758 = vmax.f32 %v726, 0.0
      %v759 = vmax.f32 %v727, 0.0
      %v760 = vmax.f32 %v728, 0.0
      %v761 = vmax.f32 %v729, 0.0
      %v762 = vmax.f32 %v730, 0.0
      %v763 = vmax.f32 %v731, 0.0
      %v764 = vmax.f32 %v732, 0.0
      %v765 = vmax.f32 %v733, 0.0
      %v766 = vmax.f32 %v734, 0.0
      %v767 = vmax.f32 %v735, 0.0
      %v768 = vmax.f32 %v736, 0.0
      %v769 = vmax.f32 %v737, 0.0
      %v770 = vmax.f32 %v738, 0.0
      %v771 = vmax.f32 %v739, 0.0
      %v772 = vmax.f32 %v740, 0.0
      %v773 = vmax.f32 %v741, 0.0
      %v774 = vmax.f32 %v742, 0.0
      %v775 = vmax.f32 %v743, 0.0
      %v776 = vmax.f32 %v744, 0.0
      %v777 = vmax.f32 %v745, 0.0
      %v778 = vmax.f32 %v746, 0.0
      %v779 = vmin.f32 %v747, 6.0
      %v780 = vmin.f32 %v748, 6.0
      %v781 = vmin.f32 %v749, 6.0
      %v782 = vmin.f32 %v750, 6.0
      %v783 = vmin.f32 %v751, 6.0
      %v784 = vmin.f32 %v752, 6.0
      %v785 = vmin.f32 %v753, 6.0
      %v786 = vmin.f32 %v754, 6.0
      %v787 = vmin.f32 %v755, 6.0
      %v788 = vmin.f32 %v756, 6.0
      %v789 = vmin.f32 %v757, 6.0
      %v790 = vmin.f32 %v758, 6.0
      %v791 = vmin.f32 %v759, 6.0
      %v792 = vmin.f32 %v760, 6.0
      %v793 = vmin.f32 %v761, 6.0
      %v794 = vmin.f32 %v762, 6.0
      %v795 = vmin.f32 %v763, 6.0
      %v796 = vmin.f32 %v764, 6.0
      %v797 = vmin.f32 %v765, 6.0
      %v798 = vmin.f32 %v766, 6.0
      %v799 = vmin.f32 %v767, 6.0
      %v800 = vmin.f32 %v768, 6.0
      %v801 = vmin.f32 %v769, 6.0
      %v802 = vmin.f32 %v770, 6.0
      %v803 = vmin.f32 %v771, 6.0
      %v804 = vmin.f32 %v772, 6.0
      %v805 = vmin.f32 %v773, 6.0
      %v806 = vmin.f32 %v774, 6.0
      %v807 = vmin.f32 %v775, 6.0
      %v808 = vmin.f32 %v776, 6.0
      %v809 = vmin.f32 %v777, 6.0
      %v810 = vmin.f32 %v778, 6.0
      %v811 = vmul.f32 %v779, 0.16666667
      %v812 = vmul.f32 %v780, 0.16666667
      %v813 = vmul.f32 %v781, 0.16666667
      %v814 = vmul.f32 %v782, 0.16666667
      %v815 = vmul.f32 %v783, 0.16666667
      %v816 = vmul.f32 %v784, 0.16666667
      %v817 = vmul.f32 %v785, 0.16666667
      %v818 = vmul.f32 %v786, 0.16666667
      %v819 = vmul.f32 %v787, 0.16666667
      %v820 = vmul.f32 %v788, 0.16666667
      %v821 = vmul.f32 %v789, 0.16666667
      %v822 = vmul.f32 %v790, 0.16666667
      %v823 = vmul.f32 %v791, 0.16666667
      %v824 = vmul.f32 %v792, 0.16666667
      %v825 = vmul.f32 %v793, 0.16666667
      %v826 = vmul.f32 %v794, 0.16666667
      %v827 = vmul.f32 %v795, 0.16666667
      %v828 = vmul.f32 %v796, 0.16666667
      %v829 = vmul.f32 %v797, 0.16666667
      %v830 = vmul.f32 %v798, 0.16666667
      %v831 = vmul.f32 %v799, 0.16666667
      %v832 = vmul.f32 %v800, 0.16666667
      %v833 = vmul.f32 %v801, 0.16666667
      %v834 = vmul.f32 %v802, 0.16666667
      %v835 = vmul.f32 %v803, 0.16666667
      %v836 = vmul.f32 %v804, 0.16666667
      %v837 = vmul.f32 %v805, 0.16666667
      %v838 = vmul.f32 %v806, 0.16666667
      %v839 = vmul.f32 %v807, 0.16666667
      %v840 = vmul.f32 %v808, 0.16666667
      %v841 = vmul.f32 %v809, 0.16666667
      %v842 = vmul.f32 %v810, 0.16666667
      %v843 = vmul.f32 %v811, %v589
      %v844 = vmul.f32 %v812, %v592
      %v845 = vmul.f32 %v813, %v597
      %v846 = vmul.f32 %v814, %v600
      %v847 = vmul.f32 %v815, %v605
      %v848 = vmul.f32 %v816, %v608
      %v849 = vmul.f32 %v817, %v613
      %v850 = vmul.f32 %v818, %v616
      %v851 = vmul.f32 %v819, %v621
      %v852 = vmul.f32 %v820, %v624
      %v853 = vmul.f32 %v821, %v629
      %v854 = vmul.f32 %v822, %v632
      %v855 = vmul.f32 %v823, %v637
      %v856 = vmul.f32 %v824, %v640
      %v857 = vmul.f32 %v825, %v645
      %v858 = vmul.f32 %v826, %v648
      %v859 = vmul.f32 %v827, %v653
      %v860 = vmul.f32 %v828, %v656
      %v861 = vmul.f32 %v829, %v661
      %v862 = vmul.f32 %v830, %v664
      %v863 = vmul.f32 %v831, %v669
      %v864 = vmul.f32 %v832, %v672
      %v865 = vmul.f32 %v833, %v677
      %v866 = vmul.f32 %v834, %v680
      %v867 = vmul.f32 %v835, %v685
      %v868 = vmul.f32 %v836, %v688
      %v869 = vmul.f32 %v837, %v693
      %v870 = vmul.f32 %v838, %v696
      %v871 = vmul.f32 %v839, %v701
      %v872 = vmul.f32 %v840, %v704
      %v873 = vmul.f32 %v841, %v709
      %v874 = vmul.f32 %v842, %v712
      %v875 = vpack.c.bf16 %v844, %v843
      %v876 = vpack.c.bf16 %v846, %v845
      %v877 = vpack.c.bf16 %v848, %v847
      %v878 = vpack.c.bf16 %v850, %v849
      %v879 = vpack.c.bf16 %v852, %v851
      %v880 = vpack.c.bf16 %v854, %v853
      %v881 = vpack.c.bf16 %v856, %v855
      %v882 = vpack.c.bf16 %v858, %v857
      %v883 = vpack.c.bf16 %v860, %v859
      %v884 = vpack.c.bf16 %v862, %v861
      %v885 = vpack.c.bf16 %v864, %v863
      %v886 = vpack.c.bf16 %v866, %v865
      %v887 = vpack.c.bf16 %v868, %v867
      %v888 = vpack.c.bf16 %v870, %v869
      %v889 = vpack.c.bf16 %v872, %v871
      %v890 = vpack.c.bf16 %v874, %v873
      %s891 = scalar_lea.vmem [#allocation2], 8
      %892 = vst [vmem:[%s891] sm:$0xff] %v875
      %893 = vst [vmem:[%s891 + $0x8] sm:$0xff] %v876
      %894 = vst [vmem:[%s891 + $0x10] sm:$0xff] %v877
      %895 = vst [vmem:[%s891 + $0x18] sm:$0xff] %v878
      %896 = vst [vmem:[%s891 + $0x20] sm:$0xff] %v879
      %897 = vst [vmem:[%s891 + $0x28] sm:$0xff] %v880
      %898 = vst [vmem:[%s891 + $0x30] sm:$0xff] %v881
      %899 = vst [vmem:[%s891 + $0x38] sm:$0xff] %v882
      %900 = vst [vmem:[%s891 + $0x40] sm:$0xff] %v883
      %901 = vst [vmem:[%s891 + $0x48] sm:$0xff] %v884
      %902 = vst [vmem:[%s891 + $0x50] sm:$0xff] %v885
      %903 = vst [vmem:[%s891 + $0x58] sm:$0xff] %v886
      %904 = vst [vmem:[%s891 + $0x60] sm:$0xff] %v887
      %905 = vst [vmem:[%s891 + $0x68] sm:$0xff] %v888
      %906 = vst [vmem:[%s891 + $0x70] sm:$0xff] %v889
      %907 = vst [vmem:[%s891 + $0x78] sm:$0xff] %v890
      %v908 = vld [vmem:[%s333] sm:$0xff]
      %v909 = vld [vmem:[%s333 + $0x8] sm:$0x1]
      %v910 = vld [vmem:[%s336] sm:$0x1]
      %v911 = vlaneseq
      %v912 = vshrl.u32 %v911, 7
      %v913 = vadd.s32 %v912, 8
      %vm914 = vcmp.ge.s32.totalorder %v912, 1
      %vm915 = vcmp.ge.s32.totalorder %v913, 1
      %vm916 = vcmp.lt.s32.totalorder %v912, 17
      %vm917 = vcmp.lt.s32.totalorder %v913, 17
      %vm918 = vmand %vm914, %vm916
      %vm919 = vmand %vm915, %vm917
      %vm920 = vcmp.ge.s32.totalorder %v912, 4294967295
      %vm921 = vcmp.ge.s32.totalorder %v913, 4294967295
      %vm922 = vcmp.lt.s32.totalorder %v912, 15
      %vm923 = vcmp.lt.s32.totalorder %v913, 15
      %vm924 = vmand %vm920, %vm922
      %vm925 = vmand %vm921, %vm923
      loop: start=0, step=1, limit=2
      $region41: #{_lambda_.2} parent=39 // loop_pre_header
        _
      $region42: #{_lambda_.2} parent=39 // loop_header
        %s927 = sphi 0, %s931
        %p928 = scmp.ge.s32.totalorder %s927, 2
        %v932 = vphi 0.0, %v1762
      $region43: #{_lambda_.2} parent=39 // loop_header_branch
        %930 = sbr.rel (%p928) target = $region47
      $region44: #{_lambda_.2} parent=39 // loop_body
        %s933 = smul.u32 %s927, 8
        %s934 = smul.addr %s933, 8
        %s935 = scalar_lea.vmem [#allocation2], %s934
        %v936 = vld [vmem:[%s935] sm:$0xff]
        %v937 = vld [vmem:[%s935 + $0x8] sm:$0xff]
        %v938 = vld [vmem:[%s935 + $0x10] sm:$0xff]
        %v939 = vld [vmem:[%s935 + $0x18] sm:$0xff]
        %v940 = vld [vmem:[%s935 + $0x20] sm:$0xff]
        %v941 = vld [vmem:[%s935 + $0x28] sm:$0xff]
        %v942 = vld [vmem:[%s935 + $0x30] sm:$0xff]
        %v943 = vld [vmem:[%s935 + $0x38] sm:$0xff]
        %v944 = vunpack.c.l.bf16 %v936
        %v945 = vunpack.c.h.bf16 %v936
        %v946 = vunpack.c.l.bf16 %v937
        %v947 = vunpack.c.h.bf16 %v937
        %v948 = vunpack.c.l.bf16 %v938
        %v949 = vunpack.c.h.bf16 %v938
        %v950 = vunpack.c.l.bf16 %v939
        %v951 = vunpack.c.h.bf16 %v939
        %v952 = vunpack.c.l.bf16 %v940
        %v953 = vunpack.c.h.bf16 %v940
        %v954 = vunpack.c.l.bf16 %v941
        %v955 = vunpack.c.h.bf16 %v941
        %v956 = vunpack.c.l.bf16 %v942
        %v957 = vunpack.c.h.bf16 %v942
        %v958 = vunpack.c.l.bf16 %v943
        %v959 = vunpack.c.h.bf16 %v943
        %v960 = vrot.slane %v944, 7
        %v961 = vrot.slane %v946, 7
        %v962 = vrot.slane %v948, 7
        %v963 = vrot.slane %v950, 7
        %v964 = vrot.slane %v952, 7
        %v965 = vrot.slane %v954, 7
        %v966 = vrot.slane %v956, 7
        %v967 = vrot.slane %v958, 7
        %v968 = vrot.slane %v945, 7
        %v969 = vrot.slane %v947, 7
        %v970 = vrot.slane %v949, 7
        %v971 = vrot.slane %v951, 7
        %v972 = vrot.slane %v953, 7
        %v973 = vrot.slane %v955, 7
        %v974 = vrot.slane %v957, 7
        %v975 = vrot.slane %v959, 7
        %vm976 = vcmp.lt.s32.totalorder %v912, 1
        %v977 = vsel %vm976, %v960, %v968
        %v978 = vsel %vm976, %v961, %v969
        %v979 = vsel %vm976, %v962, %v970
        %v980 = vsel %vm976, %v963, %v971
        %v981 = vsel %vm976, %v964, %v972
        %v982 = vsel %vm976, %v965, %v973
        %v983 = vsel %vm976, %v966, %v974
        %v984 = vsel %vm976, %v967, %v975
        %v985 = vsel %vm976, %v968, %v960
        %v986 = vsel %vm976, %v969, %v961
        %v987 = vsel %vm976, %v970, %v962
        %v988 = vsel %vm976, %v971, %v963
        %v989 = vsel %vm976, %v972, %v964
        %v990 = vsel %vm976, %v973, %v965
        %v991 = vsel %vm976, %v974, %v966
        %v992 = vsel %vm976, %v975, %v967
        %v993 = vsel %vm918, 1, 0
        %v994 = vsel %vm919, 1, 0
        %vm995 = vcmp.eq.s32.totalorder %v993, 1
        %vm996 = vcmp.eq.s32.totalorder %v994, 1
        %v997 = vsel %vm995, %v985, 0.0
        %v998 = vsel %vm996, %v977, 0.0
        %v999 = vsel %vm995, %v986, 0.0
        %v1000 = vsel %vm996, %v978, 0.0
        %v1001 = vsel %vm995, %v987, 0.0
        %v1002 = vsel %vm996, %v979, 0.0
        %v1003 = vsel %vm995, %v988, 0.0
        %v1004 = vsel %vm996, %v980, 0.0
        %v1005 = vsel %vm995, %v989, 0.0
        %v1006 = vsel %vm996, %v981, 0.0
        %v1007 = vsel %vm995, %v990, 0.0
        %v1008 = vsel %vm996, %v982, 0.0
        %v1009 = vsel %vm995, %v991, 0.0
        %v1010 = vsel %vm996, %v983, 0.0
        %v1011 = vsel %vm995, %v992, 0.0
        %v1012 = vsel %vm996, %v984, 0.0
        %v1013 = vlaneseq
        %v1014 = vshrl.u32 %v1013, 7
        %v1015 = vsub.s32 0, %v1014
        %v1016 = vrot.slane %v908, %v1015
        %v1017 = vmul.f32 %v997, %v1016
        %v1018 = vmul.f32 %v998, %v1016
        %v1019 = vmul.f32 %v999, %v1016
        %v1020 = vmul.f32 %v1000, %v1016
        %v1021 = vmul.f32 %v1001, %v1016
        %v1022 = vmul.f32 %v1002, %v1016
        %v1023 = vmul.f32 %v1003, %v1016
        %v1024 = vmul.f32 %v1004, %v1016
        %v1025 = vmul.f32 %v1005, %v1016
        %v1026 = vmul.f32 %v1006, %v1016
        %v1027 = vmul.f32 %v1007, %v1016
        %v1028 = vmul.f32 %v1008, %v1016
        %v1029 = vmul.f32 %v1009, %v1016
        %v1030 = vmul.f32 %v1010, %v1016
        %v1031 = vmul.f32 %v1011, %v1016
        %v1032 = vmul.f32 %v1012, %v1016
        %v1033 = vadd.f32 %v1017, 0.0
        %v1034 = vadd.f32 %v1018, 0.0
        %v1035 = vadd.f32 %v1019, 0.0
        %v1036 = vadd.f32 %v1020, 0.0
        %v1037 = vadd.f32 %v1021, 0.0
        %v1038 = vadd.f32 %v1022, 0.0
        %v1039 = vadd.f32 %v1023, 0.0
        %v1040 = vadd.f32 %v1024, 0.0
        %v1041 = vadd.f32 %v1025, 0.0
        %v1042 = vadd.f32 %v1026, 0.0
        %v1043 = vadd.f32 %v1027, 0.0
        %v1044 = vadd.f32 %v1028, 0.0
        %v1045 = vadd.f32 %v1029, 0.0
        %v1046 = vadd.f32 %v1030, 0.0
        %v1047 = vadd.f32 %v1031, 0.0
        %v1048 = vadd.f32 %v1032, 0.0
        %v1049 = vlaneseq
        %v1050 = vshrl.u32 %v1049, 7
        %v1051 = vsub.s32 1, %v1050
        %v1052 = vrot.slane %v908, %v1051
        %v1053 = vmul.f32 %v944, %v1052
        %v1054 = vmul.f32 %v945, %v1052
        %v1055 = vmul.f32 %v946, %v1052
        %v1056 = vmul.f32 %v947, %v1052
        %v1057 = vmul.f32 %v948, %v1052
        %v1058 = vmul.f32 %v949, %v1052
        %v1059 = vmul.f32 %v950, %v1052
        %v1060 = vmul.f32 %v951, %v1052
        %v1061 = vmul.f32 %v952, %v1052
        %v1062 = vmul.f32 %v953, %v1052
        %v1063 = vmul.f32 %v954, %v1052
        %v1064 = vmul.f32 %v955, %v1052
        %v1065 = vmul.f32 %v956, %v1052
        %v1066 = vmul.f32 %v957, %v1052
        %v1067 = vmul.f32 %v958, %v1052
        %v1068 = vmul.f32 %v959, %v1052
        %v1069 = vadd.f32 %v1033, %v1053
        %v1070 = vadd.f32 %v1034, %v1054
        %v1071 = vadd.f32 %v1035, %v1055
        %v1072 = vadd.f32 %v1036, %v1056
        %v1073 = vadd.f32 %v1037, %v1057
        %v1074 = vadd.f32 %v1038, %v1058
        %v1075 = vadd.f32 %v1039, %v1059
        %v1076 = vadd.f32 %v1040, %v1060
        %v1077 = vadd.f32 %v1041, %v1061
        %v1078 = vadd.f32 %v1042, %v1062
        %v1079 = vadd.f32 %v1043, %v1063
        %v1080 = vadd.f32 %v1044, %v1064
        %v1081 = vadd.f32 %v1045, %v1065
        %v1082 = vadd.f32 %v1046, %v1066
        %v1083 = vadd.f32 %v1047, %v1067
        %v1084 = vadd.f32 %v1048, %v1068
        %v1085 = vrot.slane %v944, 1
        %v1086 = vrot.slane %v946, 1
        %v1087 = vrot.slane %v948, 1
        %v1088 = vrot.slane %v950, 1
        %v1089 = vrot.slane %v952, 1
        %v1090 = vrot.slane %v954, 1
        %v1091 = vrot.slane %v956, 1
        %v1092 = vrot.slane %v958, 1
        %v1093 = vrot.slane %v945, 1
        %v1094 = vrot.slane %v947, 1
        %v1095 = vrot.slane %v949, 1
        %v1096 = vrot.slane %v951, 1
        %v1097 = vrot.slane %v953, 1
        %v1098 = vrot.slane %v955, 1
        %v1099 = vrot.slane %v957, 1
        %v1100 = vrot.slane %v959, 1
        %vm1101 = vcmp.lt.s32.totalorder %v912, 7
        %v1102 = vsel %vm1101, %v1085, %v1093
        %v1103 = vsel %vm1101, %v1086, %v1094
        %v1104 = vsel %vm1101, %v1087, %v1095
        %v1105 = vsel %vm1101, %v1088, %v1096
        %v1106 = vsel %vm1101, %v1089, %v1097
        %v1107 = vsel %vm1101, %v1090, %v1098
        %v1108 = vsel %vm1101, %v1091, %v1099
        %v1109 = vsel %vm1101, %v1092, %v1100
        %v1110 = vsel %vm1101, %v1093, %v1085
        %v1111 = vsel %vm1101, %v1094, %v1086
        %v1112 = vsel %vm1101, %v1095, %v1087
        %v1113 = vsel %vm1101, %v1096, %v1088
        %v1114 = vsel %vm1101, %v1097, %v1089
        %v1115 = vsel %vm1101, %v1098, %v1090
        %v1116 = vsel %vm1101, %v1099, %v1091
        %v1117 = vsel %vm1101, %v1100, %v1092
        %v1118 = vsel %vm924, 1, 0
        %v1119 = vsel %vm925, 1, 0
        %vm1120 = vcmp.eq.s32.totalorder %v1118, 1
        %vm1121 = vcmp.eq.s32.totalorder %v1119, 1
        %v1122 = vsel %vm1120, %v1102, 0.0
        %v1123 = vsel %vm1121, %v1110, 0.0
        %v1124 = vsel %vm1120, %v1103, 0.0
        %v1125 = vsel %vm1121, %v1111, 0.0
        %v1126 = vsel %vm1120, %v1104, 0.0
        %v1127 = vsel %vm1121, %v1112, 0.0
        %v1128 = vsel %vm1120, %v1105, 0.0
        %v1129 = vsel %vm1121, %v1113, 0.0
        %v1130 = vsel %vm1120, %v1106, 0.0
        %v1131 = vsel %vm1121, %v1114, 0.0
        %v1132 = vsel %vm1120, %v1107, 0.0
        %v1133 = vsel %vm1121, %v1115, 0.0
        %v1134 = vsel %vm1120, %v1108, 0.0
        %v1135 = vsel %vm1121, %v1116, 0.0
        %v1136 = vsel %vm1120, %v1109, 0.0
        %v1137 = vsel %vm1121, %v1117, 0.0
        %v1138 = vlaneseq
        %v1139 = vshrl.u32 %v1138, 7
        %v1140 = vsub.s32 2, %v1139
        %v1141 = vrot.slane %v908, %v1140
        %v1142 = vmul.f32 %v1122, %v1141
        %v1143 = vmul.f32 %v1123, %v1141
        %v1144 = vmul.f32 %v1124, %v1141
        %v1145 = vmul.f32 %v1125, %v1141
        %v1146 = vmul.f32 %v1126, %v1141
        %v1147 = vmul.f32 %v1127, %v1141
        %v1148 = vmul.f32 %v1128, %v1141
        %v1149 = vmul.f32 %v1129, %v1141
        %v1150 = vmul.f32 %v1130, %v1141
        %v1151 = vmul.f32 %v1131, %v1141
        %v1152 = vmul.f32 %v1132, %v1141
        %v1153 = vmul.f32 %v1133, %v1141
        %v1154 = vmul.f32 %v1134, %v1141
        %v1155 = vmul.f32 %v1135, %v1141
        %v1156 = vmul.f32 %v1136, %v1141
        %v1157 = vmul.f32 %v1137, %v1141
        %v1158 = vadd.f32 %v1069, %v1142
        %v1159 = vadd.f32 %v1070, %v1143
        %v1160 = vadd.f32 %v1071, %v1144
        %v1161 = vadd.f32 %v1072, %v1145
        %v1162 = vadd.f32 %v1073, %v1146
        %v1163 = vadd.f32 %v1074, %v1147
        %v1164 = vadd.f32 %v1075, %v1148
        %v1165 = vadd.f32 %v1076, %v1149
        %v1166 = vadd.f32 %v1077, %v1150
        %v1167 = vadd.f32 %v1078, %v1151
        %v1168 = vadd.f32 %v1079, %v1152
        %v1169 = vadd.f32 %v1080, %v1153
        %v1170 = vadd.f32 %v1081, %v1154
        %v1171 = vadd.f32 %v1082, %v1155
        %v1172 = vadd.f32 %v1083, %v1156
        %v1173 = vadd.f32 %v1084, %v1157
        %s1174 = sadd.s32 %s933, 1
        %s1175 = smul.addr %s1174, 8
        %s1176 = scalar_lea.vmem [#allocation2], %s1175
        %v1177 = vld [vmem:[%s1176] sm:$0xff]
        %v1178 = vld [vmem:[%s1176 + $0x8] sm:$0xff]
        %v1179 = vld [vmem:[%s1176 + $0x10] sm:$0xff]
        %v1180 = vld [vmem:[%s1176 + $0x18] sm:$0xff]
        %v1181 = vld [vmem:[%s1176 + $0x20] sm:$0xff]
        %v1182 = vld [vmem:[%s1176 + $0x28] sm:$0xff]
        %v1183 = vld [vmem:[%s1176 + $0x30] sm:$0xff]
        %v1184 = vld [vmem:[%s1176 + $0x38] sm:$0xff]
        %v1185 = vunpack.c.l.bf16 %v1177
        %v1186 = vunpack.c.h.bf16 %v1177
        %v1187 = vunpack.c.l.bf16 %v1178
        %v1188 = vunpack.c.h.bf16 %v1178
        %v1189 = vunpack.c.l.bf16 %v1179
        %v1190 = vunpack.c.h.bf16 %v1179
        %v1191 = vunpack.c.l.bf16 %v1180
        %v1192 = vunpack.c.h.bf16 %v1180
        %v1193 = vunpack.c.l.bf16 %v1181
        %v1194 = vunpack.c.h.bf16 %v1181
        %v1195 = vunpack.c.l.bf16 %v1182
        %v1196 = vunpack.c.h.bf16 %v1182
        %v1197 = vunpack.c.l.bf16 %v1183
        %v1198 = vunpack.c.h.bf16 %v1183
        %v1199 = vunpack.c.l.bf16 %v1184
        %v1200 = vunpack.c.h.bf16 %v1184
        %v1201 = vrot.slane %v1185, 7
        %v1202 = vrot.slane %v1187, 7
        %v1203 = vrot.slane %v1189, 7
        %v1204 = vrot.slane %v1191, 7
        %v1205 = vrot.slane %v1193, 7
        %v1206 = vrot.slane %v1195, 7
        %v1207 = vrot.slane %v1197, 7
        %v1208 = vrot.slane %v1199, 7
        %v1209 = vrot.slane %v1186, 7
        %v1210 = vrot.slane %v1188, 7
        %v1211 = vrot.slane %v1190, 7
        %v1212 = vrot.slane %v1192, 7
        %v1213 = vrot.slane %v1194, 7
        %v1214 = vrot.slane %v1196, 7
        %v1215 = vrot.slane %v1198, 7
        %v1216 = vrot.slane %v1200, 7
        %v1217 = vsel %vm976, %v1201, %v1209
        %v1218 = vsel %vm976, %v1202, %v1210
        %v1219 = vsel %vm976, %v1203, %v1211
        %v1220 = vsel %vm976, %v1204, %v1212
        %v1221 = vsel %vm976, %v1205, %v1213
        %v1222 = vsel %vm976, %v1206, %v1214
        %v1223 = vsel %vm976, %v1207, %v1215
        %v1224 = vsel %vm976, %v1208, %v1216
        %v1225 = vsel %vm976, %v1209, %v1201
        %v1226 = vsel %vm976, %v1210, %v1202
        %v1227 = vsel %vm976, %v1211, %v1203
        %v1228 = vsel %vm976, %v1212, %v1204
        %v1229 = vsel %vm976, %v1213, %v1205
        %v1230 = vsel %vm976, %v1214, %v1206
        %v1231 = vsel %vm976, %v1215, %v1207
        %v1232 = vsel %vm976, %v1216, %v1208
        %v1233 = vsel %vm995, %v1225, 0.0
        %v1234 = vsel %vm996, %v1217, 0.0
        %v1235 = vsel %vm995, %v1226, 0.0
        %v1236 = vsel %vm996, %v1218, 0.0
        %v1237 = vsel %vm995, %v1227, 0.0
        %v1238 = vsel %vm996, %v1219, 0.0
        %v1239 = vsel %vm995, %v1228, 0.0
        %v1240 = vsel %vm996, %v1220, 0.0
        %v1241 = vsel %vm995, %v1229, 0.0
        %v1242 = vsel %vm996, %v1221, 0.0
        %v1243 = vsel %vm995, %v1230, 0.0
        %v1244 = vsel %vm996, %v1222, 0.0
        %v1245 = vsel %vm995, %v1231, 0.0
        %v1246 = vsel %vm996, %v1223, 0.0
        %v1247 = vsel %vm995, %v1232, 0.0
        %v1248 = vsel %vm996, %v1224, 0.0
        %v1249 = vlaneseq
        %v1250 = vshrl.u32 %v1249, 7
        %v1251 = vsub.s32 3, %v1250
        %v1252 = vrot.slane %v908, %v1251
        %v1253 = vmul.f32 %v1233, %v1252
        %v1254 = vmul.f32 %v1234, %v1252
        %v1255 = vmul.f32 %v1235, %v1252
        %v1256 = vmul.f32 %v1236, %v1252
        %v1257 = vmul.f32 %v1237, %v1252
        %v1258 = vmul.f32 %v1238, %v1252
        %v1259 = vmul.f32 %v1239, %v1252
        %v1260 = vmul.f32 %v1240, %v1252
        %v1261 = vmul.f32 %v1241, %v1252
        %v1262 = vmul.f32 %v1242, %v1252
        %v1263 = vmul.f32 %v1243, %v1252
        %v1264 = vmul.f32 %v1244, %v1252
        %v1265 = vmul.f32 %v1245, %v1252
        %v1266 = vmul.f32 %v1246, %v1252
        %v1267 = vmul.f32 %v1247, %v1252
        %v1268 = vmul.f32 %v1248, %v1252
        %v1269 = vadd.f32 %v1158, %v1253
        %v1270 = vadd.f32 %v1159, %v1254
        %v1271 = vadd.f32 %v1160, %v1255
        %v1272 = vadd.f32 %v1161, %v1256
        %v1273 = vadd.f32 %v1162, %v1257
        %v1274 = vadd.f32 %v1163, %v1258
        %v1275 = vadd.f32 %v1164, %v1259
        %v1276 = vadd.f32 %v1165, %v1260
        %v1277 = vadd.f32 %v1166, %v1261
        %v1278 = vadd.f32 %v1167, %v1262
        %v1279 = vadd.f32 %v1168, %v1263
        %v1280 = vadd.f32 %v1169, %v1264
        %v1281 = vadd.f32 %v1170, %v1265
        %v1282 = vadd.f32 %v1171, %v1266
        %v1283 = vadd.f32 %v1172, %v1267
        %v1284 = vadd.f32 %v1173, %v1268
        %v1285 = vlaneseq
        %v1286 = vshrl.u32 %v1285, 7
        %v1287 = vsub.s32 4, %v1286
        %v1288 = vrot.slane %v908, %v1287
        %v1289 = vmul.f32 %v1185, %v1288
        %v1290 = vmul.f32 %v1186, %v1288
        %v1291 = vmul.f32 %v1187, %v1288
        %v1292 = vmul.f32 %v1188, %v1288
        %v1293 = vmul.f32 %v1189, %v1288
        %v1294 = vmul.f32 %v1190, %v1288
        %v1295 = vmul.f32 %v1191, %v1288
        %v1296 = vmul.f32 %v1192, %v1288
        %v1297 = vmul.f32 %v1193, %v1288
        %v1298 = vmul.f32 %v1194, %v1288
        %v1299 = vmul.f32 %v1195, %v1288
        %v1300 = vmul.f32 %v1196, %v1288
        %v1301 = vmul.f32 %v1197, %v1288
        %v1302 = vmul.f32 %v1198, %v1288
        %v1303 = vmul.f32 %v1199, %v1288
        %v1304 = vmul.f32 %v1200, %v1288
        %v1305 = vadd.f32 %v1269, %v1289
        %v1306 = vadd.f32 %v1270, %v1290
        %v1307 = vadd.f32 %v1271, %v1291
        %v1308 = vadd.f32 %v1272, %v1292
        %v1309 = vadd.f32 %v1273, %v1293
        %v1310 = vadd.f32 %v1274, %v1294
        %v1311 = vadd.f32 %v1275, %v1295
        %v1312 = vadd.f32 %v1276, %v1296
        %v1313 = vadd.f32 %v1277, %v1297
        %v1314 = vadd.f32 %v1278, %v1298
        %v1315 = vadd.f32 %v1279, %v1299
        %v1316 = vadd.f32 %v1280, %v1300
        %v1317 = vadd.f32 %v1281, %v1301
        %v1318 = vadd.f32 %v1282, %v1302
        %v1319 = vadd.f32 %v1283, %v1303
        %v1320 = vadd.f32 %v1284, %v1304
        %v1321 = vrot.slane %v1185, 1
        %v1322 = vrot.slane %v1187, 1
        %v1323 = vrot.slane %v1189, 1
        %v1324 = vrot.slane %v1191, 1
        %v1325 = vrot.slane %v1193, 1
        %v1326 = vrot.slane %v1195, 1
        %v1327 = vrot.slane %v1197, 1
        %v1328 = vrot.slane %v1199, 1
        %v1329 = vrot.slane %v1186, 1
        %v1330 = vrot.slane %v1188, 1
        %v1331 = vrot.slane %v1190, 1
        %v1332 = vrot.slane %v1192, 1
        %v1333 = vrot.slane %v1194, 1
        %v1334 = vrot.slane %v1196, 1
        %v1335 = vrot.slane %v1198, 1
        %v1336 = vrot.slane %v1200, 1
        %v1337 = vsel %vm1101, %v1321, %v1329
        %v1338 = vsel %vm1101, %v1322, %v1330
        %v1339 = vsel %vm1101, %v1323, %v1331
        %v1340 = vsel %vm1101, %v1324, %v1332
        %v1341 = vsel %vm1101, %v1325, %v1333
        %v1342 = vsel %vm1101, %v1326, %v1334
        %v1343 = vsel %vm1101, %v1327, %v1335
        %v1344 = vsel %vm1101, %v1328, %v1336
        %v1345 = vsel %vm1101, %v1329, %v1321
        %v1346 = vsel %vm1101, %v1330, %v1322
        %v1347 = vsel %vm1101, %v1331, %v1323
        %v1348 = vsel %vm1101, %v1332, %v1324
        %v1349 = vsel %vm1101, %v1333, %v1325
        %v1350 = vsel %vm1101, %v1334, %v1326
        %v1351 = vsel %vm1101, %v1335, %v1327
        %v1352 = vsel %vm1101, %v1336, %v1328
        %v1353 = vsel %vm1120, %v1337, 0.0
        %v1354 = vsel %vm1121, %v1345, 0.0
        %v1355 = vsel %vm1120, %v1338, 0.0
        %v1356 = vsel %vm1121, %v1346, 0.0
        %v1357 = vsel %vm1120, %v1339, 0.0
        %v1358 = vsel %vm1121, %v1347, 0.0
        %v1359 = vsel %vm1120, %v1340, 0.0
        %v1360 = vsel %vm1121, %v1348, 0.0
        %v1361 = vsel %vm1120, %v1341, 0.0
        %v1362 = vsel %vm1121, %v1349, 0.0
        %v1363 = vsel %vm1120, %v1342, 0.0
        %v1364 = vsel %vm1121, %v1350, 0.0
        %v1365 = vsel %vm1120, %v1343, 0.0
        %v1366 = vsel %vm1121, %v1351, 0.0
        %v1367 = vsel %vm1120, %v1344, 0.0
        %v1368 = vsel %vm1121, %v1352, 0.0
        %v1369 = vlaneseq
        %v1370 = vshrl.u32 %v1369, 7
        %v1371 = vsub.s32 5, %v1370
        %v1372 = vrot.slane %v908, %v1371
        %v1373 = vmul.f32 %v1353, %v1372
        %v1374 = vmul.f32 %v1354, %v1372
        %v1375 = vmul.f32 %v1355, %v1372
        %v1376 = vmul.f32 %v1356, %v1372
        %v1377 = vmul.f32 %v1357, %v1372
        %v1378 = vmul.f32 %v1358, %v1372
        %v1379 = vmul.f32 %v1359, %v1372
        %v1380 = vmul.f32 %v1360, %v1372
        %v1381 = vmul.f32 %v1361, %v1372
        %v1382 = vmul.f32 %v1362, %v1372
        %v1383 = vmul.f32 %v1363, %v1372
        %v1384 = vmul.f32 %v1364, %v1372
        %v1385 = vmul.f32 %v1365, %v1372
        %v1386 = vmul.f32 %v1366, %v1372
        %v1387 = vmul.f32 %v1367, %v1372
        %v1388 = vmul.f32 %v1368, %v1372
        %v1389 = vadd.f32 %v1305, %v1373
        %v1390 = vadd.f32 %v1306, %v1374
        %v1391 = vadd.f32 %v1307, %v1375
        %v1392 = vadd.f32 %v1308, %v1376
        %v1393 = vadd.f32 %v1309, %v1377
        %v1394 = vadd.f32 %v1310, %v1378
        %v1395 = vadd.f32 %v1311, %v1379
        %v1396 = vadd.f32 %v1312, %v1380
        %v1397 = vadd.f32 %v1313, %v1381
        %v1398 = vadd.f32 %v1314, %v1382
        %v1399 = vadd.f32 %v1315, %v1383
        %v1400 = vadd.f32 %v1316, %v1384
        %v1401 = vadd.f32 %v1317, %v1385
        %v1402 = vadd.f32 %v1318, %v1386
        %v1403 = vadd.f32 %v1319, %v1387
        %v1404 = vadd.f32 %v1320, %v1388
        %s1405 = sadd.s32 %s933, 2
        %s1406 = smul.addr %s1405, 8
        %s1407 = scalar_lea.vmem [#allocation2], %s1406
        %v1408 = vld [vmem:[%s1407] sm:$0xff]
        %v1409 = vld [vmem:[%s1407 + $0x8] sm:$0xff]
        %v1410 = vld [vmem:[%s1407 + $0x10] sm:$0xff]
        %v1411 = vld [vmem:[%s1407 + $0x18] sm:$0xff]
        %v1412 = vld [vmem:[%s1407 + $0x20] sm:$0xff]
        %v1413 = vld [vmem:[%s1407 + $0x28] sm:$0xff]
        %v1414 = vld [vmem:[%s1407 + $0x30] sm:$0xff]
        %v1415 = vld [vmem:[%s1407 + $0x38] sm:$0xff]
        %v1416 = vunpack.c.l.bf16 %v1408
        %v1417 = vunpack.c.h.bf16 %v1408
        %v1418 = vunpack.c.l.bf16 %v1409
        %v1419 = vunpack.c.h.bf16 %v1409
        %v1420 = vunpack.c.l.bf16 %v1410
        %v1421 = vunpack.c.h.bf16 %v1410
        %v1422 = vunpack.c.l.bf16 %v1411
        %v1423 = vunpack.c.h.bf16 %v1411
        %v1424 = vunpack.c.l.bf16 %v1412
        %v1425 = vunpack.c.h.bf16 %v1412
        %v1426 = vunpack.c.l.bf16 %v1413
        %v1427 = vunpack.c.h.bf16 %v1413
        %v1428 = vunpack.c.l.bf16 %v1414
        %v1429 = vunpack.c.h.bf16 %v1414
        %v1430 = vunpack.c.l.bf16 %v1415
        %v1431 = vunpack.c.h.bf16 %v1415
        %v1432 = vrot.slane %v1416, 7
        %v1433 = vrot.slane %v1418, 7
        %v1434 = vrot.slane %v1420, 7
        %v1435 = vrot.slane %v1422, 7
        %v1436 = vrot.slane %v1424, 7
        %v1437 = vrot.slane %v1426, 7
        %v1438 = vrot.slane %v1428, 7
        %v1439 = vrot.slane %v1430, 7
        %v1440 = vrot.slane %v1417, 7
        %v1441 = vrot.slane %v1419, 7
        %v1442 = vrot.slane %v1421, 7
        %v1443 = vrot.slane %v1423, 7
        %v1444 = vrot.slane %v1425, 7
        %v1445 = vrot.slane %v1427, 7
        %v1446 = vrot.slane %v1429, 7
        %v1447 = vrot.slane %v1431, 7
        %v1448 = vsel %vm976, %v1432, %v1440
        %v1449 = vsel %vm976, %v1433, %v1441
        %v1450 = vsel %vm976, %v1434, %v1442
        %v1451 = vsel %vm976, %v1435, %v1443
        %v1452 = vsel %vm976, %v1436, %v1444
        %v1453 = vsel %vm976, %v1437, %v1445
        %v1454 = vsel %vm976, %v1438, %v1446
        %v1455 = vsel %vm976, %v1439, %v1447
        %v1456 = vsel %vm976, %v1440, %v1432
        %v1457 = vsel %vm976, %v1441, %v1433
        %v1458 = vsel %vm976, %v1442, %v1434
        %v1459 = vsel %vm976, %v1443, %v1435
        %v1460 = vsel %vm976, %v1444, %v1436
        %v1461 = vsel %vm976, %v1445, %v1437
        %v1462 = vsel %vm976, %v1446, %v1438
        %v1463 = vsel %vm976, %v1447, %v1439
        %v1464 = vsel %vm995, %v1456, 0.0
        %v1465 = vsel %vm996, %v1448, 0.0
        %v1466 = vsel %vm995, %v1457, 0.0
        %v1467 = vsel %vm996, %v1449, 0.0
        %v1468 = vsel %vm995, %v1458, 0.0
        %v1469 = vsel %vm996, %v1450, 0.0
        %v1470 = vsel %vm995, %v1459, 0.0
        %v1471 = vsel %vm996, %v1451, 0.0
        %v1472 = vsel %vm995, %v1460, 0.0
        %v1473 = vsel %vm996, %v1452, 0.0
        %v1474 = vsel %vm995, %v1461, 0.0
        %v1475 = vsel %vm996, %v1453, 0.0
        %v1476 = vsel %vm995, %v1462, 0.0
        %v1477 = vsel %vm996, %v1454, 0.0
        %v1478 = vsel %vm995, %v1463, 0.0
        %v1479 = vsel %vm996, %v1455, 0.0
        %v1480 = vlaneseq
        %v1481 = vshrl.u32 %v1480, 7
        %v1482 = vsub.s32 6, %v1481
        %v1483 = vrot.slane %v908, %v1482
        %v1484 = vmul.f32 %v1464, %v1483
        %v1485 = vmul.f32 %v1465, %v1483
        %v1486 = vmul.f32 %v1466, %v1483
        %v1487 = vmul.f32 %v1467, %v1483
        %v1488 = vmul.f32 %v1468, %v1483
        %v1489 = vmul.f32 %v1469, %v1483
        %v1490 = vmul.f32 %v1470, %v1483
        %v1491 = vmul.f32 %v1471, %v1483
        %v1492 = vmul.f32 %v1472, %v1483
        %v1493 = vmul.f32 %v1473, %v1483
        %v1494 = vmul.f32 %v1474, %v1483
        %v1495 = vmul.f32 %v1475, %v1483
        %v1496 = vmul.f32 %v1476, %v1483
        %v1497 = vmul.f32 %v1477, %v1483
        %v1498 = vmul.f32 %v1478, %v1483
        %v1499 = vmul.f32 %v1479, %v1483
        %v1500 = vadd.f32 %v1389, %v1484
        %v1501 = vadd.f32 %v1390, %v1485
        %v1502 = vadd.f32 %v1391, %v1486
        %v1503 = vadd.f32 %v1392, %v1487
        %v1504 = vadd.f32 %v1393, %v1488
        %v1505 = vadd.f32 %v1394, %v1489
        %v1506 = vadd.f32 %v1395, %v1490
        %v1507 = vadd.f32 %v1396, %v1491
        %v1508 = vadd.f32 %v1397, %v1492
        %v1509 = vadd.f32 %v1398, %v1493
        %v1510 = vadd.f32 %v1399, %v1494
        %v1511 = vadd.f32 %v1400, %v1495
        %v1512 = vadd.f32 %v1401, %v1496
        %v1513 = vadd.f32 %v1402, %v1497
        %v1514 = vadd.f32 %v1403, %v1498
        %v1515 = vadd.f32 %v1404, %v1499
        %v1516 = vlaneseq
        %v1517 = vshrl.u32 %v1516, 7
        %v1518 = vsub.s32 7, %v1517
        %v1519 = vrot.slane %v908, %v1518
        %v1520 = vmul.f32 %v1416, %v1519
        %v1521 = vmul.f32 %v1417, %v1519
        %v1522 = vmul.f32 %v1418, %v1519
        %v1523 = vmul.f32 %v1419, %v1519
        %v1524 = vmul.f32 %v1420, %v1519
        %v1525 = vmul.f32 %v1421, %v1519
        %v1526 = vmul.f32 %v1422, %v1519
        %v1527 = vmul.f32 %v1423, %v1519
        %v1528 = vmul.f32 %v1424, %v1519
        %v1529 = vmul.f32 %v1425, %v1519
        %v1530 = vmul.f32 %v1426, %v1519
        %v1531 = vmul.f32 %v1427, %v1519
        %v1532 = vmul.f32 %v1428, %v1519
        %v1533 = vmul.f32 %v1429, %v1519
        %v1534 = vmul.f32 %v1430, %v1519
        %v1535 = vmul.f32 %v1431, %v1519
        %v1536 = vadd.f32 %v1500, %v1520
        %v1537 = vadd.f32 %v1501, %v1521
        %v1538 = vadd.f32 %v1502, %v1522
        %v1539 = vadd.f32 %v1503, %v1523
        %v1540 = vadd.f32 %v1504, %v1524
        %v1541 = vadd.f32 %v1505, %v1525
        %v1542 = vadd.f32 %v1506, %v1526
        %v1543 = vadd.f32 %v1507, %v1527
        %v1544 = vadd.f32 %v1508, %v1528
        %v1545 = vadd.f32 %v1509, %v1529
        %v1546 = vadd.f32 %v1510, %v1530
        %v1547 = vadd.f32 %v1511, %v1531
        %v1548 = vadd.f32 %v1512, %v1532
        %v1549 = vadd.f32 %v1513, %v1533
        %v1550 = vadd.f32 %v1514, %v1534
        %v1551 = vadd.f32 %v1515, %v1535
        %v1552 = vrot.slane %v1416, 1
        %v1553 = vrot.slane %v1418, 1
        %v1554 = vrot.slane %v1420, 1
        %v1555 = vrot.slane %v1422, 1
        %v1556 = vrot.slane %v1424, 1
        %v1557 = vrot.slane %v1426, 1
        %v1558 = vrot.slane %v1428, 1
        %v1559 = vrot.slane %v1430, 1
        %v1560 = vrot.slane %v1417, 1
        %v1561 = vrot.slane %v1419, 1
        %v1562 = vrot.slane %v1421, 1
        %v1563 = vrot.slane %v1423, 1
        %v1564 = vrot.slane %v1425, 1
        %v1565 = vrot.slane %v1427, 1
        %v1566 = vrot.slane %v1429, 1
        %v1567 = vrot.slane %v1431, 1
        %v1568 = vsel %vm1101, %v1552, %v1560
        %v1569 = vsel %vm1101, %v1553, %v1561
        %v1570 = vsel %vm1101, %v1554, %v1562
        %v1571 = vsel %vm1101, %v1555, %v1563
        %v1572 = vsel %vm1101, %v1556, %v1564
        %v1573 = vsel %vm1101, %v1557, %v1565
        %v1574 = vsel %vm1101, %v1558, %v1566
        %v1575 = vsel %vm1101, %v1559, %v1567
        %v1576 = vsel %vm1101, %v1560, %v1552
        %v1577 = vsel %vm1101, %v1561, %v1553
        %v1578 = vsel %vm1101, %v1562, %v1554
        %v1579 = vsel %vm1101, %v1563, %v1555
        %v1580 = vsel %vm1101, %v1564, %v1556
        %v1581 = vsel %vm1101, %v1565, %v1557
        %v1582 = vsel %vm1101, %v1566, %v1558
        %v1583 = vsel %vm1101, %v1567, %v1559
        %v1584 = vsel %vm1120, %v1568, 0.0
        %v1585 = vsel %vm1121, %v1576, 0.0
        %v1586 = vsel %vm1120, %v1569, 0.0
        %v1587 = vsel %vm1121, %v1577, 0.0
        %v1588 = vsel %vm1120, %v1570, 0.0
        %v1589 = vsel %vm1121, %v1578, 0.0
        %v1590 = vsel %vm1120, %v1571, 0.0
        %v1591 = vsel %vm1121, %v1579, 0.0
        %v1592 = vsel %vm1120, %v1572, 0.0
        %v1593 = vsel %vm1121, %v1580, 0.0
        %v1594 = vsel %vm1120, %v1573, 0.0
        %v1595 = vsel %vm1121, %v1581, 0.0
        %v1596 = vsel %vm1120, %v1574, 0.0
        %v1597 = vsel %vm1121, %v1582, 0.0
        %v1598 = vsel %vm1120, %v1575, 0.0
        %v1599 = vsel %vm1121, %v1583, 0.0
        %v1600 = vlaneseq
        %v1601 = vshrl.u32 %v1600, 7
        %v1602 = vsub.s32 0, %v1601
        %v1603 = vrot.slane %v909, %v1602
        %v1604 = vmul.f32 %v1584, %v1603
        %v1605 = vmul.f32 %v1585, %v1603
        %v1606 = vmul.f32 %v1586, %v1603
        %v1607 = vmul.f32 %v1587, %v1603
        %v1608 = vmul.f32 %v1588, %v1603
        %v1609 = vmul.f32 %v1589, %v1603
        %v1610 = vmul.f32 %v1590, %v1603
        %v1611 = vmul.f32 %v1591, %v1603
        %v1612 = vmul.f32 %v1592, %v1603
        %v1613 = vmul.f32 %v1593, %v1603
        %v1614 = vmul.f32 %v1594, %v1603
        %v1615 = vmul.f32 %v1595, %v1603
        %v1616 = vmul.f32 %v1596, %v1603
        %v1617 = vmul.f32 %v1597, %v1603
        %v1618 = vmul.f32 %v1598, %v1603
        %v1619 = vmul.f32 %v1599, %v1603
        %v1620 = vadd.f32 %v1536, %v1604
        %v1621 = vadd.f32 %v1537, %v1605
        %v1622 = vadd.f32 %v1538, %v1606
        %v1623 = vadd.f32 %v1539, %v1607
        %v1624 = vadd.f32 %v1540, %v1608
        %v1625 = vadd.f32 %v1541, %v1609
        %v1626 = vadd.f32 %v1542, %v1610
        %v1627 = vadd.f32 %v1543, %v1611
        %v1628 = vadd.f32 %v1544, %v1612
        %v1629 = vadd.f32 %v1545, %v1613
        %v1630 = vadd.f32 %v1546, %v1614
        %v1631 = vadd.f32 %v1547, %v1615
        %v1632 = vadd.f32 %v1548, %v1616
        %v1633 = vadd.f32 %v1549, %v1617
        %v1634 = vadd.f32 %v1550, %v1618
        %v1635 = vadd.f32 %v1551, %v1619
        %v1637 = vlaneseq
        %v1638 = vshrl.u32 %v1637, 7
        %v1639 = vsub.s32 0, %v1638
        %v1640 = vrot.slane %v910, %v1639
        %v1642 = vadd.f32 %v1620, %v1640
        %v1643 = vadd.f32 %v1621, %v1640
        %v1644 = vadd.f32 %v1622, %v1640
        %v1645 = vadd.f32 %v1623, %v1640
        %v1646 = vadd.f32 %v1624, %v1640
        %v1647 = vadd.f32 %v1625, %v1640
        %v1648 = vadd.f32 %v1626, %v1640
        %v1649 = vadd.f32 %v1627, %v1640
        %v1650 = vadd.f32 %v1628, %v1640
        %v1651 = vadd.f32 %v1629, %v1640
        %v1652 = vadd.f32 %v1630, %v1640
        %v1653 = vadd.f32 %v1631, %v1640
        %v1654 = vadd.f32 %v1632, %v1640
        %v1655 = vadd.f32 %v1633, %v1640
        %v1656 = vadd.f32 %v1634, %v1640
        %v1657 = vadd.f32 %v1635, %v1640
        %v1658 = vpack.c.bf16 %v1643, %v1642
        %v1659 = vpack.c.bf16 %v1645, %v1644
        %v1660 = vpack.c.bf16 %v1647, %v1646
        %v1661 = vpack.c.bf16 %v1649, %v1648
        %v1662 = vpack.c.bf16 %v1651, %v1650
        %v1663 = vpack.c.bf16 %v1653, %v1652
        %v1664 = vpack.c.bf16 %v1655, %v1654
        %v1665 = vpack.c.bf16 %v1657, %v1656
        %v1674 = vunpack.c.l.b16 %v1658
        %v1675 = vunpack.c.h.b16 %v1658
        %v1676 = vunpack.c.l.b16 %v1659
        %v1677 = vunpack.c.h.b16 %v1659
        %v1678 = vunpack.c.l.b16 %v1660
        %v1679 = vunpack.c.h.b16 %v1660
        %v1680 = vunpack.c.l.b16 %v1661
        %v1681 = vunpack.c.h.b16 %v1661
        %v1682 = vunpack.c.l.b16 %v1662
        %v1683 = vunpack.c.h.b16 %v1662
        %v1684 = vunpack.c.l.b16 %v1663
        %v1685 = vunpack.c.h.b16 %v1663
        %v1686 = vunpack.c.l.b16 %v1664
        %v1687 = vunpack.c.h.b16 %v1664
        %v1688 = vunpack.c.l.b16 %v1665
        %v1689 = vunpack.c.h.b16 %v1665
        %v1690 = vpack.c.b16 %v1674, %v1674
        %v1691 = vpack.c.b16 %v1675, %v1675
        %v1692 = vpack.c.b16 %v1676, %v1676
        %v1693 = vpack.c.b16 %v1677, %v1677
        %v1694 = vpack.c.b16 %v1678, %v1678
        %v1695 = vpack.c.b16 %v1679, %v1679
        %v1696 = vpack.c.b16 %v1680, %v1680
        %v1697 = vpack.c.b16 %v1681, %v1681
        %v1698 = vpack.c.b16 %v1682, %v1682
        %v1699 = vpack.c.b16 %v1683, %v1683
        %v1700 = vpack.c.b16 %v1684, %v1684
        %v1701 = vpack.c.b16 %v1685, %v1685
        %v1702 = vpack.c.b16 %v1686, %v1686
        %v1703 = vpack.c.b16 %v1687, %v1687
        %v1704 = vpack.c.b16 %v1688, %v1688
        %v1705 = vpack.c.b16 %v1689, %v1689
        %s1722 = smul.u32 %s933, 2
        %s1723 = smul.addr %s1722, 4
        %s1724 = scalar_lea.vmem %s344, %s1723
        %1725 = vst [vmem:[%s1724] sm:$0xf] %v1690
        %1726 = vst [vmem:[%s1724 + $0x4] sm:$0xf] %v1691
        %1727 = vst [vmem:[%s1724 + $0x8] sm:$0xf] %v1692
        %1728 = vst [vmem:[%s1724 + $0xc] sm:$0xf] %v1693
        %1729 = vst [vmem:[%s1724 + $0x10] sm:$0xf] %v1694
        %1730 = vst [vmem:[%s1724 + $0x14] sm:$0xf] %v1695
        %1731 = vst [vmem:[%s1724 + $0x18] sm:$0xf] %v1696
        %1732 = vst [vmem:[%s1724 + $0x1c] sm:$0xf] %v1697
        %1733 = vst [vmem:[%s1724 + $0x20] sm:$0xf] %v1698
        %1734 = vst [vmem:[%s1724 + $0x24] sm:$0xf] %v1699
        %1735 = vst [vmem:[%s1724 + $0x28] sm:$0xf] %v1700
        %1736 = vst [vmem:[%s1724 + $0x2c] sm:$0xf] %v1701
        %1737 = vst [vmem:[%s1724 + $0x30] sm:$0xf] %v1702
        %1738 = vst [vmem:[%s1724 + $0x34] sm:$0xf] %v1703
        %1739 = vst [vmem:[%s1724 + $0x38] sm:$0xf] %v1704
        %1740 = vst [vmem:[%s1724 + $0x3c] sm:$0xf] %v1705
        %v1741 = vadd.f32 %v1642, %v1644
        %v1742 = vadd.f32 %v1741, %v1646
        %v1743 = vadd.f32 %v1742, %v1648
        %v1744 = vadd.f32 %v1743, %v1650
        %v1745 = vadd.f32 %v1744, %v1652
        %v1746 = vadd.f32 %v1745, %v1654
        %v1747 = vadd.f32 %v1746, %v1656
        %v1748 = vadd.f32 %v1643, %v1645
        %v1749 = vadd.f32 %v1748, %v1647
        %v1750 = vadd.f32 %v1749, %v1649
        %v1751 = vadd.f32 %v1750, %v1651
        %v1752 = vadd.f32 %v1751, %v1653
        %v1753 = vadd.f32 %v1752, %v1655
        %v1754 = vadd.f32 %v1753, %v1657
        %v1755 = vadd.f32 %v1747, %v1754
        %v1756 = vrot.slane %v1755, 4
        %v1757 = vadd.f32 %v1755, %v1756
        %v1758 = vrot.slane %v1757, 2
        %v1759 = vadd.f32 %v1757, %v1758
        %v1760 = vrot.slane %v1759, 1
        %v1761 = vadd.f32 %v1759, %v1760
        %v1762 = vadd.f32 %v932, %v1761
      $region45: #{_lambda_.2} parent=39 // loop_footer
        %s931 = sadd.s32 1, %s927
      $region46: #{_lambda_.2} parent=39 // loop_footer_branch
        %926 = sbr.rel target = $region42
      $region47: #{_lambda_.2} parent=39 // loop_exit
        _
      %v1763 = vmul.f32 %v932, 0.00390625
      %1764 = vst [vmem:[%s350] sm:$0x1] %v1763
      %p1765 = scmp.lt.s32.totalorder %s22, 1
      %s1766 = scalar_select %p1765, %s22, 1
      %p1767 = scmp.lt.s32.totalorder %s23, 0
      %s1768 = scalar_select %p1767, %s23, 0
      %s1769 = smul.addr %s1766, 32
      %s1770 = sadd.s32 %s1768, %s1769
      %s1771 = smul.addr %s1770, 4
      %s1772 = scalar_lea.vmem %s5, %s1771
      %p1773 = scmp.lt.s32.totalorder %s22, 1
      %s1774 = scalar_select %p1773, %s22, 1
      %p1775 = scmp.lt.s32.totalorder %s23, 0
      %s1776 = scalar_select %p1775, %s23, 0
      %s1777 = sadd.s32 %s1776, %s1774
      %s1778 = scalar_lea.vmem %s6, %s1777
      // Predicated region
      $region48: #{_lambda_.2} parent=39 // pred_check
        %p1779 = pneg %p180
      $region49: #{_lambda_.2} parent=39 // pred_check_branch
        %1781 = sbr.rel (%p1779) target = $region51
      $region50: #{_lambda_.2} parent=39 // pred_region
        _
      $region51: #{_lambda_.2} parent=39 // pred_fallthru
        _
      // Predicated region
      $region52: #{_lambda_.2} parent=39 // pred_check
        %p1782 = pneg %p208
      $region53: #{_lambda_.2} parent=39 // pred_check_branch
        %1784 = sbr.rel (%p1782) target = $region55
      $region54: #{_lambda_.2} parent=39 // pred_region
        _
      $region55: #{_lambda_.2} parent=39 // pred_fallthru
        _
    $region40: #{_lambda_.2} parent=5 // pred_fallthru
      _
    %p1785 = scmp.le.s32.totalorder 2, %s13
    // Predicated region
    $region56: #{_lambda_.2} parent=5 // pred_check
      %p1786 = pneg %p1785
    $region57: #{_lambda_.2} parent=5 // pred_check_branch
      %1788 = sbr.rel (%p1786) target = $region59
    $region58: #{_lambda_.2} parent=5 // pred_region
      %s1789 = ssub.s32 %s13, 2
      // Predicated region
      $region60: #{_lambda_.2} parent=58 // pred_check
        %p1790 = pneg %p186
      $region61: #{_lambda_.2} parent=58 // pred_check_branch
        %1792 = sbr.rel (%p1790) target = $region63
      $region62: #{_lambda_.2} parent=58 // pred_region
        %p1793 = scmp.lt.s32.totalorder %s24, 1
        %s1794 = scalar_select %p1793, %s24, 1
        %p1795 = scmp.lt.s32.totalorder %s25, 0
        %s1796 = scalar_select %p1795, %s25, 0
        %s1797 = smul.addr %s1794, 32
        %s1798 = sadd.s32 %s1796, %s1797
        %s1799 = smul.addr %s1798, 4
        %s1800 = scalar_lea.vmem %s5, %s1799
      $region63: #{_lambda_.2} parent=58 // pred_fallthru
        _
      // Predicated region
      $region64: #{_lambda_.2} parent=58 // pred_check
        %p1801 = pneg %p214
      $region65: #{_lambda_.2} parent=58 // pred_check_branch
        %1803 = sbr.rel (%p1801) target = $region67
      $region66: #{_lambda_.2} parent=58 // pred_region
        %p1804 = scmp.lt.s32.totalorder %s24, 1
        %s1805 = scalar_select %p1804, %s24, 1
        %p1806 = scmp.lt.s32.totalorder %s25, 0
        %s1807 = scalar_select %p1806, %s25, 0
        %s1808 = sadd.s32 %s1807, %s1805
        %s1809 = scalar_lea.vmem %s6, %s1808
      $region67: #{_lambda_.2} parent=58 // pred_fallthru
        _
    $region59: #{_lambda_.2} parent=5 // pred_fallthru
      _
  $region6: #{_lambda_.2} parent=0 // loop_footer
    %s17 = sadd.s32 1, %s13
  $region7: #{_lambda_.2} parent=0 // loop_footer_branch
    %12 = sbr.rel target = $region3
  $region8: #{_lambda_.2} parent=0 // loop_exit
    _

</llo_original>
